<compile_context>
chip_gen: v6e
topology: v6e:2x2x1
jax: 0.10.0
libtpu: 0.0.40
codegen_flags: <defaults>
</compile_context>

<pallas_src>
import functools

import jax
import jax.numpy as jnp
import numpy as np
from jax import lax
from jax.experimental import pallas as pl
from jax.experimental.pallas import tpu as pltpu

N_CHUNKS = 4  # EffAttention splits the sequence into 4 chunks


# ----------------------------- glue (plain JAX) -----------------------------
def _extract_patches_nchw(x):
    """torch.nn.Unfold(kernel=3, stride=1) with 'same' zero padding. -> (B, N, C*9)."""
    B, C, H, W = x.shape
    xp = jnp.pad(x, ((0, 0), (0, 0), (1, 1), (1, 1)))
    cols = []
    for kh in range(3):
        for kw in range(3):
            cols.append(xp[:, :, kh:kh + H, kw:kw + W])      # (B, C, H, W)
    cols = jnp.stack(cols, axis=2)                           # (B, C, 9, H, W)
    cols = cols.reshape(B, C * 9, H * W)                     # col index = c*9 + kh*3 + kw
    return jnp.transpose(cols, (0, 2, 1))                    # (B, N, D)


def _ln(x, g, b, eps=1e-5):
    mu = jnp.mean(x, axis=-1, keepdims=True)
    var = jnp.mean(jnp.square(x - mu), axis=-1, keepdims=True)
    return (x - mu) * lax.rsqrt(var + eps) * g + b


# ------------------------------- Pallas kernel ------------------------------
def _mla_kernel(x_ref, g1_ref, b1_ref, wr_ref, wqkv_ref, wp_ref, bp_ref,
                g2_ref, b2_ref, w1_ref, bf1_ref, w2_ref, bf2_ref, o_ref,
                *, heads, dh_pad, c_pad):
    x = x_ref[0]                                             # (chunk, D) f32

    # ---- x + EffAttention(LayerNorm1(x)) — chunk-local attention ----
    xn = _ln(x, g1_ref[...], b1_ref[...])
    xr = jnp.dot(xn.astype(jnp.bfloat16), wr_ref[...],
                 preferred_element_type=jnp.float32)                        # (chunk, C)
    qkv = jnp.dot(xr.astype(jnp.bfloat16), wqkv_ref[...],
                  preferred_element_type=jnp.float32)                       # (chunk, 3*c_pad)
    # Softmax scale is pre-folded into the q columns of wqkv; the padded head
    # columns are exactly zero so they do not perturb scores or outputs.
    q = qkv[:, 0:c_pad]
    k = qkv[:, c_pad:2 * c_pad]
    v = qkv[:, 2 * c_pad:3 * c_pad].astype(jnp.bfloat16)

    head_outs = []
    for h in range(heads):                                   # unrolled per-head loop
        sl = slice(h * dh_pad, (h + 1) * dh_pad)             # 16-lane aligned slices
        s = lax.dot_general(q[:, sl], k[:, sl], (((1,), (1,)), ((), ())),
                            preferred_element_type=jnp.float32)             # (chunk, chunk)
        s = s - jnp.max(s, axis=-1, keepdims=True)
        p = jnp.exp(s)
        inv = pl.reciprocal(jnp.sum(p, axis=-1, keepdims=True), approx=True)
        oh = jnp.dot(p.astype(jnp.bfloat16), v[:, sl],
                     preferred_element_type=jnp.float32) * inv              # (chunk, dh_pad)
        head_outs.append(oh)
    att = jnp.concatenate(head_outs, axis=-1)                # (chunk, c_pad=128)
    y = jnp.dot(att.astype(jnp.bfloat16), wp_ref[...],
                preferred_element_type=jnp.float32) + bp_ref[...]           # (chunk, D)
    x = x + y

    # ---- x + Mlp(LayerNorm2(x)) ----
    xn2 = _ln(x, g2_ref[...], b2_ref[...])
    h1 = jnp.dot(xn2.astype(jnp.bfloat16), w1_ref[...],
                 preferred_element_type=jnp.float32) + bf1_ref[...]
    h1 = jnp.maximum(h1, 0.0)
    y2 = jnp.dot(h1.astype(jnp.bfloat16), w2_ref[...],
                 preferred_element_type=jnp.float32) + bf2_ref[...]
    o_ref[0] = x + y2                                        # single store per tile


# --------------------------- wrapper-side weight prep ------------------------
def _prepare_weights(params, *, num_heads, dh, dh_pad, scale):
    wr, wqkv, wp = params["wr"], params["wqkv"], params["wp"]
    D, C = wr.shape

    # Pad each head's q/k/v columns from dh to dh_pad with zeros (identical
    # scores/outputs) and fold the softmax scale into the q columns.
    wqkv_r = wqkv.reshape(C, 3, num_heads, dh).astype(jnp.float32)
    wqkv_r = wqkv_r.at[:, 0].multiply(scale)
    zc = jnp.zeros((C, 3, num_heads, dh_pad - dh), jnp.float32)
    wqkv_pad = jnp.concatenate([wqkv_r, zc], axis=-1).reshape(C, 3 * num_heads * dh_pad)

    # Matching zero rows in the output projection so concat(padded heads) @ wp_pad
    # equals concat(heads) @ wp exactly.
    wp_r = wp.reshape(num_heads, dh, D).astype(jnp.float32)
    zr = jnp.zeros((num_heads, dh_pad - dh, D), jnp.float32)
    wp_pad = jnp.concatenate([wp_r, zr], axis=1).reshape(num_heads * dh_pad, D)

    b16 = lambda a: a.astype(jnp.bfloat16)
    return [params["g1"], params["b1"],
            b16(wr), b16(wqkv_pad), b16(wp_pad), params["bp"],
            params["g2"], params["b2"],
            b16(params["w1"]), params["bf1"], b16(params["w2"]), params["bf2"]]


# --------------------------------- wrapper ----------------------------------
def mla_block(x, params, *, n_feat, num_heads=8):
    B, Cf, H, W = x.shape
    assert Cf == n_feat
    D = n_feat * 9
    C = D // 2
    assert C % num_heads == 0
    dh = C // num_heads
    N = H * W
    assert N % N_CHUNKS == 0, "kernel assumes the sequence splits evenly into 4 chunks"
    chunk = N // N_CHUNKS
    assert chunk % 8 == 0, "chunk length must be a multiple of 8 (TPU sublane tiling)"
    scale = float((D // num_heads) ** -0.5)    # torch uses head_dim of the *full* dim
    dh_pad = -(-dh // 8) * 8                   # 9 -> 16: aligned per-head lane slices
    c_pad = num_heads * dh_pad                 # 128

    # TODO(synk): fold the 3x3 Unfold into the kernel (DMA the raw (n_feat,H,W)
    # slab and build the 9 shifted views in VMEM) to avoid materializing the
    # 9x-inflated (B,N,D) token tensor in HBM.
    x_seq = _extract_patches_nchw(x).astype(jnp.float32)     # (B, N, D)

    weights = _prepare_weights(params, num_heads=num_heads, dh=dh,
                               dh_pad=dh_pad, scale=scale)

    kernel = functools.partial(_mla_kernel, heads=num_heads,
                               dh_pad=dh_pad, c_pad=c_pad)

    w_specs = [pl.BlockSpec(w.shape, lambda b, c: (0, 0)) for w in weights]

    return pl.pallas_call(
        kernel,
        out_shape=jax.ShapeDtypeStruct((B, N, D), jnp.float32),
        grid=(B, N_CHUNKS),
        in_specs=[pl.BlockSpec((1, chunk, D), lambda b, c: (b, c, 0))] + w_specs,
        out_specs=pl.BlockSpec((1, chunk, D), lambda b, c: (b, c, 0)),
        compiler_params=pltpu.CompilerParams(
            dimension_semantics=("parallel", "parallel")),
    )(x_seq, *weights)


# ------------------------- deterministic parameters -------------------------
def init_params(key, n_feat):
    D = n_feat * 9
    C = D // 2
    hidden = D // 4
    ks = jax.random.split(key, 8)

    def w(k, shape, fan_in):
        return (jax.random.normal(k, shape, jnp.float32) / np.sqrt(fan_in)).astype(jnp.float32)

    return dict(
        g1=jnp.ones((1, D), jnp.float32),          # LayerNorm1 weight
        b1=jnp.zeros((1, D), jnp.float32),         # LayerNorm1 bias
        wr=w(ks[0], (D, C), D),                    # reduce  (bias=False), stored (in, out)
        wqkv=w(ks[1], (C, 3 * C), C),              # qkv     (bias=False)
        wp=w(ks[2], (C, D), C),                    # proj weight
        bp=w(ks[3], (1, D), 100.0),                # proj bias
        g2=jnp.ones((1, D), jnp.float32),          # LayerNorm2 weight
        b2=jnp.zeros((1, D), jnp.float32),         # LayerNorm2 bias
        w1=w(ks[4], (D, hidden), D),               # Mlp.fc1 weight
        bf1=w(ks[5], (1, hidden), 100.0),          # Mlp.fc1 bias
        w2=w(ks[6], (hidden, D), hidden),          # Mlp.fc2 weight
        bf2=w(ks[7], (1, D), 100.0),               # Mlp.fc2 bias
    )


# --------------------------- pure-JAX reference ------------------------------
def mla_block_ref(x, params, *, n_feat, num_heads=8):
    D = n_feat * 9
    C = D // 2
    dh = C // num_heads
    x_seq = _extract_patches_nchw(x).astype(jnp.float32)
    B, N, _ = x_seq.shape
    chunk = N // N_CHUNKS
    scale = (D // num_heads) ** -0.5
    hp = functools.partial(jnp.einsum, precision=lax.Precision.HIGHEST)

    xn = _ln(x_seq, params["g1"][0], params["b1"][0])
    xr = hp("bnd,dc->bnc", xn, params["wr"])
    qkv = hp("bnc,ck->bnk", xr, params["wqkv"]).reshape(B, N, 3, num_heads, dh)
    qkv = qkv.transpose(2, 0, 3, 1, 4)
    q, k, v = qkv[0], qkv[1], qkv[2]                       # (B, H, N, dh)
    outs = []
    for c in range(N_CHUNKS):
        qc = q[:, :, c * chunk:(c + 1) * chunk]
        kc = k[:, :, c * chunk:(c + 1) * chunk]
        vc = v[:, :, c * chunk:(c + 1) * chunk]
        attn = hp("bhqd,bhkd->bhqk", qc, kc) * scale
        attn = jax.nn.softmax(attn, axis=-1)
        o = hp("bhqk,bhkd->bhqd", attn, vc)
        outs.append(o.transpose(0, 2, 1, 3))               # (B, chunk, H, dh)
    att = jnp.concatenate(outs, axis=1).reshape(B, N, C)
    x1 = x_seq + hp("bnc,cd->bnd", att, params["wp"]) + params["bp"][0]
    xn2 = _ln(x1, params["g2"][0], params["b2"][0])
    h1 = jax.nn.relu(hp("bnd,dh->bnh", xn2, params["w1"]) + params["bf1"][0])
    y2 = hp("bnh,hd->bnd", h1, params["w2"]) + params["bf2"][0]
    return x1 + y2


if __name__ == "__main__":
    n_feat = 16           # dim = n_feat*9 = 144, reduced C = 72, 8 heads, head_dim 9
    B, H, W = 2, 8, 8     # N = 64 tokens, chunk = 16

    key = jax.random.PRNGKey(0)
    kx, kp = jax.random.split(key)
    x = jax.random.normal(kx, (B, n_feat, H, W), jnp.float32)
    params = init_params(kp, n_feat)

    out = mla_block(x, params, n_feat=n_feat)
    out = jax.block_until_ready(out)
    assert out.shape == (B, H * W, n_feat * 9)

    ref = mla_block_ref(x, params, n_feat=n_feat)
    # bf16 MXU operands (with f32 accumulation) introduce ~1e-3..1e-2 relative
    # error vs. the all-f32 reference, so use a slightly looser tolerance.
    np.testing.assert_allclose(np.asarray(out), np.asarray(ref), rtol=3e-2, atol=3e-2)

    print("KERNEL_OK")
</pallas_src>

<mosaic_0001>
module attributes {stable_mosaic.version = 11 : i64} {
  func.func @_mla_kernel(%arg0: i32, %arg1: i32, %arg2: memref<1x16x144xf32, #tpu.memory_space<vmem>>, %arg3: memref<1x144xf32, #tpu.memory_space<vmem>>, %arg4: memref<1x144xf32, #tpu.memory_space<vmem>>, %arg5: memref<144x72xbf16, #tpu.memory_space<vmem>>, %arg6: memref<72x384xbf16, #tpu.memory_space<vmem>>, %arg7: memref<128x144xbf16, #tpu.memory_space<vmem>>, %arg8: memref<1x144xf32, #tpu.memory_space<vmem>>, %arg9: memref<1x144xf32, #tpu.memory_space<vmem>>, %arg10: memref<1x144xf32, #tpu.memory_space<vmem>>, %arg11: memref<144x36xbf16, #tpu.memory_space<vmem>>, %arg12: memref<1x36xf32, #tpu.memory_space<vmem>>, %arg13: memref<36x144xbf16, #tpu.memory_space<vmem>>, %arg14: memref<1x144xf32, #tpu.memory_space<vmem>>, %arg15: memref<1x16x144xf32, #tpu.memory_space<vmem>>) attributes {dimension_semantics = [#tpu.dimension_semantics<parallel>, #tpu.dimension_semantics<parallel>], iteration_bounds = array<i64: 2, 4>, scalar_prefetch = 0 : i64, scratch_operands = 0 : i64, tpu.core_type = #tpu.core_type<tc>, window_params = [{transform_indices = @transform_0, window_bounds = array<i64: 1, 16, 144>}, {pipeline_mode = #tpu.pipeline_mode<synchronous>, transform_indices = @transform_1, window_bounds = array<i64: 1, 144>}, {pipeline_mode = #tpu.pipeline_mode<synchronous>, transform_indices = @transform_2, window_bounds = array<i64: 1, 144>}, {pipeline_mode = #tpu.pipeline_mode<synchronous>, transform_indices = @transform_3, window_bounds = array<i64: 144, 72>}, {pipeline_mode = #tpu.pipeline_mode<synchronous>, transform_indices = @transform_4, window_bounds = array<i64: 72, 384>}, {pipeline_mode = #tpu.pipeline_mode<synchronous>, transform_indices = @transform_5, window_bounds = array<i64: 128, 144>}, {pipeline_mode = #tpu.pipeline_mode<synchronous>, transform_indices = @transform_6, window_bounds = array<i64: 1, 144>}, {pipeline_mode = #tpu.pipeline_mode<synchronous>, transform_indices = @transform_7, window_bounds = array<i64: 1, 144>}, {pipeline_mode = #tpu.pipeline_mode<synchronous>, transform_indices = @transform_8, window_bounds = array<i64: 1, 144>}, {pipeline_mode = #tpu.pipeline_mode<synchronous>, transform_indices = @transform_9, window_bounds = array<i64: 144, 36>}, {pipeline_mode = #tpu.pipeline_mode<synchronous>, transform_indices = @transform_10, window_bounds = array<i64: 1, 36>}, {pipeline_mode = #tpu.pipeline_mode<synchronous>, transform_indices = @transform_11, window_bounds = array<i64: 36, 144>}, {pipeline_mode = #tpu.pipeline_mode<synchronous>, transform_indices = @transform_12, window_bounds = array<i64: 1, 144>}, {transform_indices = @transform_13, window_bounds = array<i64: 1, 16, 144>}]} {
    %c0 = arith.constant 0 : index
    %c0_0 = arith.constant 0 : index
    %c0_1 = arith.constant 0 : index
    %0 = vector.load %arg2[%c0, %c0_0, %c0_1] : memref<1x16x144xf32, #tpu.memory_space<vmem>>, vector<1x16x144xf32>
    %1 = vector.shape_cast %0 : vector<1x16x144xf32> to vector<16x144xf32>
    %c0_2 = arith.constant 0 : index
    %c0_3 = arith.constant 0 : index
    %2 = vector.load %arg3[%c0_2, %c0_3] : memref<1x144xf32, #tpu.memory_space<vmem>>, vector<1x144xf32>
    %c0_4 = arith.constant 0 : index
    %c0_5 = arith.constant 0 : index
    %3 = vector.load %arg4[%c0_4, %c0_5] : memref<1x144xf32, #tpu.memory_space<vmem>>, vector<1x144xf32>
    %cst = arith.constant dense<0.000000e+00> : vector<16xf32>
    %4 = vector.multi_reduction <add>, %1, %cst [1] : vector<16x144xf32> to vector<16xf32>
    %5 = vector.shape_cast %4 : vector<16xf32> to vector<16x1xf32>
    %cst_6 = arith.constant 1.440000e+02 : f32
    %6 = vector.broadcast %cst_6 : f32 to vector<16x1xf32>
    %7 = arith.divf %5, %6 : vector<16x1xf32>
    %8 = vector.broadcast %7 : vector<16x1xf32> to vector<16x144xf32>
    %9 = arith.subf %1, %8 : vector<16x144xf32>
    %10 = arith.mulf %9, %9 : vector<16x144xf32>
    %cst_7 = arith.constant dense<0.000000e+00> : vector<16xf32>
    %11 = vector.multi_reduction <add>, %10, %cst_7 [1] : vector<16x144xf32> to vector<16xf32>
    %12 = vector.shape_cast %11 : vector<16xf32> to vector<16x1xf32>
    %cst_8 = arith.constant 1.440000e+02 : f32
    %13 = vector.broadcast %cst_8 : f32 to vector<16x1xf32>
    %14 = arith.divf %12, %13 : vector<16x1xf32>
    %15 = vector.broadcast %7 : vector<16x1xf32> to vector<16x144xf32>
    %16 = arith.subf %1, %15 : vector<16x144xf32>
    %cst_9 = arith.constant 9.99999974E-6 : f32
    %17 = vector.broadcast %cst_9 : f32 to vector<16x1xf32>
    %18 = arith.addf %14, %17 : vector<16x1xf32>
    %19 = math.rsqrt %18 : vector<16x1xf32>
    %20 = vector.broadcast %19 : vector<16x1xf32> to vector<16x144xf32>
    %21 = arith.mulf %16, %20 : vector<16x144xf32>
    %22 = vector.broadcast %2 : vector<1x144xf32> to vector<16x144xf32>
    %23 = arith.mulf %21, %22 : vector<16x144xf32>
    %24 = vector.broadcast %3 : vector<1x144xf32> to vector<16x144xf32>
    %25 = arith.addf %23, %24 : vector<16x144xf32>
    %26 = arith.truncf %25 : vector<16x144xf32> to vector<16x144xbf16>
    %c0_10 = arith.constant 0 : index
    %c0_11 = arith.constant 0 : index
    %27 = vector.load %arg5[%c0_10, %c0_11] : memref<144x72xbf16, #tpu.memory_space<vmem>>, vector<144x72xbf16>
    %cst_12 = arith.constant dense<0.000000e+00> : vector<16x72xf32>
    %28 = tpu.matmul %26, %27, %cst_12 {dimension_numbers = #tpu.dot_dimension_numbers<[1], [0], [0], [1], [0, 0, 1, 1], [], []>} : vector<16x144xbf16>, vector<144x72xbf16>, vector<16x72xf32> -> vector<16x72xf32>
    %29 = arith.truncf %28 : vector<16x72xf32> to vector<16x72xbf16>
    %c0_13 = arith.constant 0 : index
    %c0_14 = arith.constant 0 : index
    %30 = vector.load %arg6[%c0_13, %c0_14] : memref<72x384xbf16, #tpu.memory_space<vmem>>, vector<72x384xbf16>
    %cst_15 = arith.constant dense<0.000000e+00> : vector<16x384xf32>
    %31 = tpu.matmul %29, %30, %cst_15 {dimension_numbers = #tpu.dot_dimension_numbers<[1], [0], [0], [1], [0, 0, 1, 1], [], []>} : vector<16x72xbf16>, vector<72x384xbf16>, vector<16x384xf32> -> vector<16x384xf32>
    %32 = vector.extract_strided_slice %31 {offsets = [0, 0], sizes = [16, 128], strides = [1, 1]} : vector<16x384xf32> to vector<16x128xf32>
    %33 = vector.extract_strided_slice %31 {offsets = [0, 128], sizes = [16, 128], strides = [1, 1]} : vector<16x384xf32> to vector<16x128xf32>
    %34 = vector.extract_strided_slice %31 {offsets = [0, 256], sizes = [16, 128], strides = [1, 1]} : vector<16x384xf32> to vector<16x128xf32>
    %35 = arith.truncf %34 : vector<16x128xf32> to vector<16x128xbf16>
    %36 = vector.extract_strided_slice %32 {offsets = [0, 0], sizes = [16, 16], strides = [1, 1]} : vector<16x128xf32> to vector<16x16xf32>
    %37 = vector.extract_strided_slice %33 {offsets = [0, 0], sizes = [16, 16], strides = [1, 1]} : vector<16x128xf32> to vector<16x16xf32>
    %cst_16 = arith.constant dense<0.000000e+00> : vector<16x16xf32>
    %38 = tpu.matmul %36, %37, %cst_16 {dimension_numbers = #tpu.dot_dimension_numbers<[1], [1], [0], [0], [0, 0, 1, 0], [], []>} : vector<16x16xf32>, vector<16x16xf32>, vector<16x16xf32> -> vector<16x16xf32>
    %cst_17 = arith.constant dense<0xFF800000> : vector<16xf32>
    %39 = vector.multi_reduction <maximumf>, %38, %cst_17 [1] : vector<16x16xf32> to vector<16xf32>
    %40 = vector.shape_cast %39 : vector<16xf32> to vector<16x1xf32>
    %41 = vector.broadcast %40 : vector<16x1xf32> to vector<16x16xf32>
    %42 = arith.subf %38, %41 : vector<16x16xf32>
    %43 = math.exp %42 : vector<16x16xf32>
    %cst_18 = arith.constant dense<0.000000e+00> : vector<16xf32>
    %44 = vector.multi_reduction <add>, %43, %cst_18 [1] : vector<16x16xf32> to vector<16xf32>
    %45 = vector.shape_cast %44 : vector<16xf32> to vector<16x1xf32>
    %46 = tpu.reciprocal %45 {approx = true} : vector<16x1xf32> -> vector<16x1xf32>
    %47 = arith.truncf %43 : vector<16x16xf32> to vector<16x16xbf16>
    %48 = vector.extract_strided_slice %35 {offsets = [0, 0], sizes = [16, 16], strides = [1, 1]} : vector<16x128xbf16> to vector<16x16xbf16>
    %cst_19 = arith.constant dense<0.000000e+00> : vector<16x16xf32>
    %49 = tpu.matmul %47, %48, %cst_19 {dimension_numbers = #tpu.dot_dimension_numbers<[1], [0], [0], [1], [0, 0, 1, 1], [], []>} : vector<16x16xbf16>, vector<16x16xbf16>, vector<16x16xf32> -> vector<16x16xf32>
    %50 = vector.broadcast %46 : vector<16x1xf32> to vector<16x16xf32>
    %51 = arith.mulf %49, %50 : vector<16x16xf32>
    %52 = vector.extract_strided_slice %32 {offsets = [0, 16], sizes = [16, 16], strides = [1, 1]} : vector<16x128xf32> to vector<16x16xf32>
    %53 = vector.extract_strided_slice %33 {offsets = [0, 16], sizes = [16, 16], strides = [1, 1]} : vector<16x128xf32> to vector<16x16xf32>
    %cst_20 = arith.constant dense<0.000000e+00> : vector<16x16xf32>
    %54 = tpu.matmul %52, %53, %cst_20 {dimension_numbers = #tpu.dot_dimension_numbers<[1], [1], [0], [0], [0, 0, 1, 0], [], []>} : vector<16x16xf32>, vector<16x16xf32>, vector<16x16xf32> -> vector<16x16xf32>
    %cst_21 = arith.constant dense<0xFF800000> : vector<16xf32>
    %55 = vector.multi_reduction <maximumf>, %54, %cst_21 [1] : vector<16x16xf32> to vector<16xf32>
    %56 = vector.shape_cast %55 : vector<16xf32> to vector<16x1xf32>
    %57 = vector.broadcast %56 : vector<16x1xf32> to vector<16x16xf32>
    %58 = arith.subf %54, %57 : vector<16x16xf32>
    %59 = math.exp %58 : vector<16x16xf32>
    %cst_22 = arith.constant dense<0.000000e+00> : vector<16xf32>
    %60 = vector.multi_reduction <add>, %59, %cst_22 [1] : vector<16x16xf32> to vector<16xf32>
    %61 = vector.shape_cast %60 : vector<16xf32> to vector<16x1xf32>
    %62 = tpu.reciprocal %61 {approx = true} : vector<16x1xf32> -> vector<16x1xf32>
    %63 = arith.truncf %59 : vector<16x16xf32> to vector<16x16xbf16>
    %64 = vector.extract_strided_slice %35 {offsets = [0, 16], sizes = [16, 16], strides = [1, 1]} : vector<16x128xbf16> to vector<16x16xbf16>
    %cst_23 = arith.constant dense<0.000000e+00> : vector<16x16xf32>
    %65 = tpu.matmul %63, %64, %cst_23 {dimension_numbers = #tpu.dot_dimension_numbers<[1], [0], [0], [1], [0, 0, 1, 1], [], []>} : vector<16x16xbf16>, vector<16x16xbf16>, vector<16x16xf32> -> vector<16x16xf32>
    %66 = vector.broadcast %62 : vector<16x1xf32> to vector<16x16xf32>
    %67 = arith.mulf %65, %66 : vector<16x16xf32>
    %68 = vector.extract_strided_slice %32 {offsets = [0, 32], sizes = [16, 16], strides = [1, 1]} : vector<16x128xf32> to vector<16x16xf32>
    %69 = vector.extract_strided_slice %33 {offsets = [0, 32], sizes = [16, 16], strides = [1, 1]} : vector<16x128xf32> to vector<16x16xf32>
    %cst_24 = arith.constant dense<0.000000e+00> : vector<16x16xf32>
    %70 = tpu.matmul %68, %69, %cst_24 {dimension_numbers = #tpu.dot_dimension_numbers<[1], [1], [0], [0], [0, 0, 1, 0], [], []>} : vector<16x16xf32>, vector<16x16xf32>, vector<16x16xf32> -> vector<16x16xf32>
    %cst_25 = arith.constant dense<0xFF800000> : vector<16xf32>
    %71 = vector.multi_reduction <maximumf>, %70, %cst_25 [1] : vector<16x16xf32> to vector<16xf32>
    %72 = vector.shape_cast %71 : vector<16xf32> to vector<16x1xf32>
    %73 = vector.broadcast %72 : vector<16x1xf32> to vector<16x16xf32>
    %74 = arith.subf %70, %73 : vector<16x16xf32>
    %75 = math.exp %74 : vector<16x16xf32>
    %cst_26 = arith.constant dense<0.000000e+00> : vector<16xf32>
    %76 = vector.multi_reduction <add>, %75, %cst_26 [1] : vector<16x16xf32> to vector<16xf32>
    %77 = vector.shape_cast %76 : vector<16xf32> to vector<16x1xf32>
    %78 = tpu.reciprocal %77 {approx = true} : vector<16x1xf32> -> vector<16x1xf32>
    %79 = arith.truncf %75 : vector<16x16xf32> to vector<16x16xbf16>
    %80 = vector.extract_strided_slice %35 {offsets = [0, 32], sizes = [16, 16], strides = [1, 1]} : vector<16x128xbf16> to vector<16x16xbf16>
    %cst_27 = arith.constant dense<0.000000e+00> : vector<16x16xf32>
    %81 = tpu.matmul %79, %80, %cst_27 {dimension_numbers = #tpu.dot_dimension_numbers<[1], [0], [0], [1], [0, 0, 1, 1], [], []>} : vector<16x16xbf16>, vector<16x16xbf16>, vector<16x16xf32> -> vector<16x16xf32>
    %82 = vector.broadcast %78 : vector<16x1xf32> to vector<16x16xf32>
    %83 = arith.mulf %81, %82 : vector<16x16xf32>
    %84 = vector.extract_strided_slice %32 {offsets = [0, 48], sizes = [16, 16], strides = [1, 1]} : vector<16x128xf32> to vector<16x16xf32>
    %85 = vector.extract_strided_slice %33 {offsets = [0, 48], sizes = [16, 16], strides = [1, 1]} : vector<16x128xf32> to vector<16x16xf32>
    %cst_28 = arith.constant dense<0.000000e+00> : vector<16x16xf32>
    %86 = tpu.matmul %84, %85, %cst_28 {dimension_numbers = #tpu.dot_dimension_numbers<[1], [1], [0], [0], [0, 0, 1, 0], [], []>} : vector<16x16xf32>, vector<16x16xf32>, vector<16x16xf32> -> vector<16x16xf32>
    %cst_29 = arith.constant dense<0xFF800000> : vector<16xf32>
    %87 = vector.multi_reduction <maximumf>, %86, %cst_29 [1] : vector<16x16xf32> to vector<16xf32>
    %88 = vector.shape_cast %87 : vector<16xf32> to vector<16x1xf32>
    %89 = vector.broadcast %88 : vector<16x1xf32> to vector<16x16xf32>
    %90 = arith.subf %86, %89 : vector<16x16xf32>
    %91 = math.exp %90 : vector<16x16xf32>
    %cst_30 = arith.constant dense<0.000000e+00> : vector<16xf32>
    %92 = vector.multi_reduction <add>, %91, %cst_30 [1] : vector<16x16xf32> to vector<16xf32>
    %93 = vector.shape_cast %92 : vector<16xf32> to vector<16x1xf32>
    %94 = tpu.reciprocal %93 {approx = true} : vector<16x1xf32> -> vector<16x1xf32>
    %95 = arith.truncf %91 : vector<16x16xf32> to vector<16x16xbf16>
    %96 = vector.extract_strided_slice %35 {offsets = [0, 48], sizes = [16, 16], strides = [1, 1]} : vector<16x128xbf16> to vector<16x16xbf16>
    %cst_31 = arith.constant dense<0.000000e+00> : vector<16x16xf32>
    %97 = tpu.matmul %95, %96, %cst_31 {dimension_numbers = #tpu.dot_dimension_numbers<[1], [0], [0], [1], [0, 0, 1, 1], [], []>} : vector<16x16xbf16>, vector<16x16xbf16>, vector<16x16xf32> -> vector<16x16xf32>
    %98 = vector.broadcast %94 : vector<16x1xf32> to vector<16x16xf32>
    %99 = arith.mulf %97, %98 : vector<16x16xf32>
    %100 = vector.extract_strided_slice %32 {offsets = [0, 64], sizes = [16, 16], strides = [1, 1]} : vector<16x128xf32> to vector<16x16xf32>
    %101 = vector.extract_strided_slice %33 {offsets = [0, 64], sizes = [16, 16], strides = [1, 1]} : vector<16x128xf32> to vector<16x16xf32>
    %cst_32 = arith.constant dense<0.000000e+00> : vector<16x16xf32>
    %102 = tpu.matmul %100, %101, %cst_32 {dimension_numbers = #tpu.dot_dimension_numbers<[1], [1], [0], [0], [0, 0, 1, 0], [], []>} : vector<16x16xf32>, vector<16x16xf32>, vector<16x16xf32> -> vector<16x16xf32>
    %cst_33 = arith.constant dense<0xFF800000> : vector<16xf32>
    %103 = vector.multi_reduction <maximumf>, %102, %cst_33 [1] : vector<16x16xf32> to vector<16xf32>
    %104 = vector.shape_cast %103 : vector<16xf32> to vector<16x1xf32>
    %105 = vector.broadcast %104 : vector<16x1xf32> to vector<16x16xf32>
    %106 = arith.subf %102, %105 : vector<16x16xf32>
    %107 = math.exp %106 : vector<16x16xf32>
    %cst_34 = arith.constant dense<0.000000e+00> : vector<16xf32>
    %108 = vector.multi_reduction <add>, %107, %cst_34 [1] : vector<16x16xf32> to vector<16xf32>
    %109 = vector.shape_cast %108 : vector<16xf32> to vector<16x1xf32>
    %110 = tpu.reciprocal %109 {approx = true} : vector<16x1xf32> -> vector<16x1xf32>
    %111 = arith.truncf %107 : vector<16x16xf32> to vector<16x16xbf16>
    %112 = vector.extract_strided_slice %35 {offsets = [0, 64], sizes = [16, 16], strides = [1, 1]} : vector<16x128xbf16> to vector<16x16xbf16>
    %cst_35 = arith.constant dense<0.000000e+00> : vector<16x16xf32>
    %113 = tpu.matmul %111, %112, %cst_35 {dimension_numbers = #tpu.dot_dimension_numbers<[1], [0], [0], [1], [0, 0, 1, 1], [], []>} : vector<16x16xbf16>, vector<16x16xbf16>, vector<16x16xf32> -> vector<16x16xf32>
    %114 = vector.broadcast %110 : vector<16x1xf32> to vector<16x16xf32>
    %115 = arith.mulf %113, %114 : vector<16x16xf32>
    %116 = vector.extract_strided_slice %32 {offsets = [0, 80], sizes = [16, 16], strides = [1, 1]} : vector<16x128xf32> to vector<16x16xf32>
    %117 = vector.extract_strided_slice %33 {offsets = [0, 80], sizes = [16, 16], strides = [1, 1]} : vector<16x128xf32> to vector<16x16xf32>
    %cst_36 = arith.constant dense<0.000000e+00> : vector<16x16xf32>
    %118 = tpu.matmul %116, %117, %cst_36 {dimension_numbers = #tpu.dot_dimension_numbers<[1], [1], [0], [0], [0, 0, 1, 0], [], []>} : vector<16x16xf32>, vector<16x16xf32>, vector<16x16xf32> -> vector<16x16xf32>
    %cst_37 = arith.constant dense<0xFF800000> : vector<16xf32>
    %119 = vector.multi_reduction <maximumf>, %118, %cst_37 [1] : vector<16x16xf32> to vector<16xf32>
    %120 = vector.shape_cast %119 : vector<16xf32> to vector<16x1xf32>
    %121 = vector.broadcast %120 : vector<16x1xf32> to vector<16x16xf32>
    %122 = arith.subf %118, %121 : vector<16x16xf32>
    %123 = math.exp %122 : vector<16x16xf32>
    %cst_38 = arith.constant dense<0.000000e+00> : vector<16xf32>
    %124 = vector.multi_reduction <add>, %123, %cst_38 [1] : vector<16x16xf32> to vector<16xf32>
    %125 = vector.shape_cast %124 : vector<16xf32> to vector<16x1xf32>
    %126 = tpu.reciprocal %125 {approx = true} : vector<16x1xf32> -> vector<16x1xf32>
    %127 = arith.truncf %123 : vector<16x16xf32> to vector<16x16xbf16>
    %128 = vector.extract_strided_slice %35 {offsets = [0, 80], sizes = [16, 16], strides = [1, 1]} : vector<16x128xbf16> to vector<16x16xbf16>
    %cst_39 = arith.constant dense<0.000000e+00> : vector<16x16xf32>
    %129 = tpu.matmul %127, %128, %cst_39 {dimension_numbers = #tpu.dot_dimension_numbers<[1], [0], [0], [1], [0, 0, 1, 1], [], []>} : vector<16x16xbf16>, vector<16x16xbf16>, vector<16x16xf32> -> vector<16x16xf32>
    %130 = vector.broadcast %126 : vector<16x1xf32> to vector<16x16xf32>
    %131 = arith.mulf %129, %130 : vector<16x16xf32>
    %132 = vector.extract_strided_slice %32 {offsets = [0, 96], sizes = [16, 16], strides = [1, 1]} : vector<16x128xf32> to vector<16x16xf32>
    %133 = vector.extract_strided_slice %33 {offsets = [0, 96], sizes = [16, 16], strides = [1, 1]} : vector<16x128xf32> to vector<16x16xf32>
    %cst_40 = arith.constant dense<0.000000e+00> : vector<16x16xf32>
    %134 = tpu.matmul %132, %133, %cst_40 {dimension_numbers = #tpu.dot_dimension_numbers<[1], [1], [0], [0], [0, 0, 1, 0], [], []>} : vector<16x16xf32>, vector<16x16xf32>, vector<16x16xf32> -> vector<16x16xf32>
    %cst_41 = arith.constant dense<0xFF800000> : vector<16xf32>
    %135 = vector.multi_reduction <maximumf>, %134, %cst_41 [1] : vector<16x16xf32> to vector<16xf32>
    %136 = vector.shape_cast %135 : vector<16xf32> to vector<16x1xf32>
    %137 = vector.broadcast %136 : vector<16x1xf32> to vector<16x16xf32>
    %138 = arith.subf %134, %137 : vector<16x16xf32>
    %139 = math.exp %138 : vector<16x16xf32>
    %cst_42 = arith.constant dense<0.000000e+00> : vector<16xf32>
    %140 = vector.multi_reduction <add>, %139, %cst_42 [1] : vector<16x16xf32> to vector<16xf32>
    %141 = vector.shape_cast %140 : vector<16xf32> to vector<16x1xf32>
    %142 = tpu.reciprocal %141 {approx = true} : vector<16x1xf32> -> vector<16x1xf32>
    %143 = arith.truncf %139 : vector<16x16xf32> to vector<16x16xbf16>
    %144 = vector.extract_strided_slice %35 {offsets = [0, 96], sizes = [16, 16], strides = [1, 1]} : vector<16x128xbf16> to vector<16x16xbf16>
    %cst_43 = arith.constant dense<0.000000e+00> : vector<16x16xf32>
    %145 = tpu.matmul %143, %144, %cst_43 {dimension_numbers = #tpu.dot_dimension_numbers<[1], [0], [0], [1], [0, 0, 1, 1], [], []>} : vector<16x16xbf16>, vector<16x16xbf16>, vector<16x16xf32> -> vector<16x16xf32>
    %146 = vector.broadcast %142 : vector<16x1xf32> to vector<16x16xf32>
    %147 = arith.mulf %145, %146 : vector<16x16xf32>
    %148 = vector.extract_strided_slice %32 {offsets = [0, 112], sizes = [16, 16], strides = [1, 1]} : vector<16x128xf32> to vector<16x16xf32>
    %149 = vector.extract_strided_slice %33 {offsets = [0, 112], sizes = [16, 16], strides = [1, 1]} : vector<16x128xf32> to vector<16x16xf32>
    %cst_44 = arith.constant dense<0.000000e+00> : vector<16x16xf32>
    %150 = tpu.matmul %148, %149, %cst_44 {dimension_numbers = #tpu.dot_dimension_numbers<[1], [1], [0], [0], [0, 0, 1, 0], [], []>} : vector<16x16xf32>, vector<16x16xf32>, vector<16x16xf32> -> vector<16x16xf32>
    %cst_45 = arith.constant dense<0xFF800000> : vector<16xf32>
    %151 = vector.multi_reduction <maximumf>, %150, %cst_45 [1] : vector<16x16xf32> to vector<16xf32>
    %152 = vector.shape_cast %151 : vector<16xf32> to vector<16x1xf32>
    %153 = vector.broadcast %152 : vector<16x1xf32> to vector<16x16xf32>
    %154 = arith.subf %150, %153 : vector<16x16xf32>
    %155 = math.exp %154 : vector<16x16xf32>
    %cst_46 = arith.constant dense<0.000000e+00> : vector<16xf32>
    %156 = vector.multi_reduction <add>, %155, %cst_46 [1] : vector<16x16xf32> to vector<16xf32>
    %157 = vector.shape_cast %156 : vector<16xf32> to vector<16x1xf32>
    %158 = tpu.reciprocal %157 {approx = true} : vector<16x1xf32> -> vector<16x1xf32>
    %159 = arith.truncf %155 : vector<16x16xf32> to vector<16x16xbf16>
    %160 = vector.extract_strided_slice %35 {offsets = [0, 112], sizes = [16, 16], strides = [1, 1]} : vector<16x128xbf16> to vector<16x16xbf16>
    %cst_47 = arith.constant dense<0.000000e+00> : vector<16x16xf32>
    %161 = tpu.matmul %159, %160, %cst_47 {dimension_numbers = #tpu.dot_dimension_numbers<[1], [0], [0], [1], [0, 0, 1, 1], [], []>} : vector<16x16xbf16>, vector<16x16xbf16>, vector<16x16xf32> -> vector<16x16xf32>
    %162 = vector.broadcast %158 : vector<16x1xf32> to vector<16x16xf32>
    %163 = arith.mulf %161, %162 : vector<16x16xf32>
    %164 = tpu.concatenate %51, %67, %83, %99, %115, %131, %147, %163 in 1 : vector<16x16xf32>, vector<16x16xf32>, vector<16x16xf32>, vector<16x16xf32>, vector<16x16xf32>, vector<16x16xf32>, vector<16x16xf32>, vector<16x16xf32> -> vector<16x128xf32>
    %165 = arith.truncf %164 : vector<16x128xf32> to vector<16x128xbf16>
    %c0_48 = arith.constant 0 : index
    %c0_49 = arith.constant 0 : index
    %166 = vector.load %arg7[%c0_48, %c0_49] : memref<128x144xbf16, #tpu.memory_space<vmem>>, vector<128x144xbf16>
    %cst_50 = arith.constant dense<0.000000e+00> : vector<16x144xf32>
    %167 = tpu.matmul %165, %166, %cst_50 {dimension_numbers = #tpu.dot_dimension_numbers<[1], [0], [0], [1], [0, 0, 1, 1], [], []>} : vector<16x128xbf16>, vector<128x144xbf16>, vector<16x144xf32> -> vector<16x144xf32>
    %c0_51 = arith.constant 0 : index
    %c0_52 = arith.constant 0 : index
    %168 = vector.load %arg8[%c0_51, %c0_52] : memref<1x144xf32, #tpu.memory_space<vmem>>, vector<1x144xf32>
    %169 = vector.broadcast %168 : vector<1x144xf32> to vector<16x144xf32>
    %170 = arith.addf %167, %169 : vector<16x144xf32>
    %171 = arith.addf %1, %170 : vector<16x144xf32>
    %c0_53 = arith.constant 0 : index
    %c0_54 = arith.constant 0 : index
    %172 = vector.load %arg9[%c0_53, %c0_54] : memref<1x144xf32, #tpu.memory_space<vmem>>, vector<1x144xf32>
    %c0_55 = arith.constant 0 : index
    %c0_56 = arith.constant 0 : index
    %173 = vector.load %arg10[%c0_55, %c0_56] : memref<1x144xf32, #tpu.memory_space<vmem>>, vector<1x144xf32>
    %cst_57 = arith.constant dense<0.000000e+00> : vector<16xf32>
    %174 = vector.multi_reduction <add>, %171, %cst_57 [1] : vector<16x144xf32> to vector<16xf32>
    %175 = vector.shape_cast %174 : vector<16xf32> to vector<16x1xf32>
    %cst_58 = arith.constant 1.440000e+02 : f32
    %176 = vector.broadcast %cst_58 : f32 to vector<16x1xf32>
    %177 = arith.divf %175, %176 : vector<16x1xf32>
    %178 = vector.broadcast %177 : vector<16x1xf32> to vector<16x144xf32>
    %179 = arith.subf %171, %178 : vector<16x144xf32>
    %180 = arith.mulf %179, %179 : vector<16x144xf32>
    %cst_59 = arith.constant dense<0.000000e+00> : vector<16xf32>
    %181 = vector.multi_reduction <add>, %180, %cst_59 [1] : vector<16x144xf32> to vector<16xf32>
    %182 = vector.shape_cast %181 : vector<16xf32> to vector<16x1xf32>
    %cst_60 = arith.constant 1.440000e+02 : f32
    %183 = vector.broadcast %cst_60 : f32 to vector<16x1xf32>
    %184 = arith.divf %182, %183 : vector<16x1xf32>
    %185 = vector.broadcast %177 : vector<16x1xf32> to vector<16x144xf32>
    %186 = arith.subf %171, %185 : vector<16x144xf32>
    %cst_61 = arith.constant 9.99999974E-6 : f32
    %187 = vector.broadcast %cst_61 : f32 to vector<16x1xf32>
    %188 = arith.addf %184, %187 : vector<16x1xf32>
    %189 = math.rsqrt %188 : vector<16x1xf32>
    %190 = vector.broadcast %189 : vector<16x1xf32> to vector<16x144xf32>
    %191 = arith.mulf %186, %190 : vector<16x144xf32>
    %192 = vector.broadcast %172 : vector<1x144xf32> to vector<16x144xf32>
    %193 = arith.mulf %191, %192 : vector<16x144xf32>
    %194 = vector.broadcast %173 : vector<1x144xf32> to vector<16x144xf32>
    %195 = arith.addf %193, %194 : vector<16x144xf32>
    %196 = arith.truncf %195 : vector<16x144xf32> to vector<16x144xbf16>
    %c0_62 = arith.constant 0 : index
    %c0_63 = arith.constant 0 : index
    %197 = vector.load %arg11[%c0_62, %c0_63] : memref<144x36xbf16, #tpu.memory_space<vmem>>, vector<144x36xbf16>
    %cst_64 = arith.constant dense<0.000000e+00> : vector<16x36xf32>
    %198 = tpu.matmul %196, %197, %cst_64 {dimension_numbers = #tpu.dot_dimension_numbers<[1], [0], [0], [1], [0, 0, 1, 1], [], []>} : vector<16x144xbf16>, vector<144x36xbf16>, vector<16x36xf32> -> vector<16x36xf32>
    %c0_65 = arith.constant 0 : index
    %c0_66 = arith.constant 0 : index
    %199 = vector.load %arg12[%c0_65, %c0_66] : memref<1x36xf32, #tpu.memory_space<vmem>>, vector<1x36xf32>
    %200 = vector.broadcast %199 : vector<1x36xf32> to vector<16x36xf32>
    %201 = arith.addf %198, %200 : vector<16x36xf32>
    %cst_67 = arith.constant 0.000000e+00 : f32
    %202 = vector.broadcast %cst_67 : f32 to vector<16x36xf32>
    %203 = arith.maximumf %201, %202 : vector<16x36xf32>
    %204 = arith.truncf %203 : vector<16x36xf32> to vector<16x36xbf16>
    %c0_68 = arith.constant 0 : index
    %c0_69 = arith.constant 0 : index
    %205 = vector.load %arg13[%c0_68, %c0_69] : memref<36x144xbf16, #tpu.memory_space<vmem>>, vector<36x144xbf16>
    %cst_70 = arith.constant dense<0.000000e+00> : vector<16x144xf32>
    %206 = tpu.matmul %204, %205, %cst_70 {dimension_numbers = #tpu.dot_dimension_numbers<[1], [0], [0], [1], [0, 0, 1, 1], [], []>} : vector<16x36xbf16>, vector<36x144xbf16>, vector<16x144xf32> -> vector<16x144xf32>
    %c0_71 = arith.constant 0 : index
    %c0_72 = arith.constant 0 : index
    %207 = vector.load %arg14[%c0_71, %c0_72] : memref<1x144xf32, #tpu.memory_space<vmem>>, vector<1x144xf32>
    %208 = vector.broadcast %207 : vector<1x144xf32> to vector<16x144xf32>
    %209 = arith.addf %206, %208 : vector<16x144xf32>
    %210 = arith.addf %171, %209 : vector<16x144xf32>
    %c0_73 = arith.constant 0 : index
    %c0_74 = arith.constant 0 : index
    %c0_75 = arith.constant 0 : index
    %211 = vector.load %arg15[%c0_73, %c0_74, %c0_75] : memref<1x16x144xf32, #tpu.memory_space<vmem>>, vector<1x16x144xf32>
    %212 = vector.shape_cast %211 : vector<1x16x144xf32> to vector<16x144xf32>
    %213 = vector.shape_cast %210 : vector<16x144xf32> to vector<1x16x144xf32>
    tpu.vector_store %arg15[%c0_73, %c0_74, %c0_75], %213 {strides = array<i32>} : memref<1x16x144xf32, #tpu.memory_space<vmem>>, vector<1x16x144xf32>,
    return
  }
  func.func @transform_0(%arg0: i32, %arg1: i32) -> (i32, i32, i32) {
    %c0_i32 = arith.constant 0 : i32
    %c0_i32_0 = arith.constant 0 : i32
    return %arg0, %arg1, %c0_i32 : i32, i32, i32
  }
  func.func @transform_1(%arg0: i32, %arg1: i32) -> (i32, i32) {
    %c0_i32 = arith.constant 0 : i32
    %c0_i32_0 = arith.constant 0 : i32
    %c0_i32_1 = arith.constant 0 : i32
    return %c0_i32, %c0_i32_0 : i32, i32
  }
  func.func @transform_2(%arg0: i32, %arg1: i32) -> (i32, i32) {
    %c0_i32 = arith.constant 0 : i32
    %c0_i32_0 = arith.constant 0 : i32
    %c0_i32_1 = arith.constant 0 : i32
    return %c0_i32, %c0_i32_0 : i32, i32
  }
  func.func @transform_3(%arg0: i32, %arg1: i32) -> (i32, i32) {
    %c0_i32 = arith.constant 0 : i32
    %c0_i32_0 = arith.constant 0 : i32
    %c0_i32_1 = arith.constant 0 : i32
    return %c0_i32, %c0_i32_0 : i32, i32
  }
  func.func @transform_4(%arg0: i32, %arg1: i32) -> (i32, i32) {
    %c0_i32 = arith.constant 0 : i32
    %c0_i32_0 = arith.constant 0 : i32
    %c0_i32_1 = arith.constant 0 : i32
    return %c0_i32, %c0_i32_0 : i32, i32
  }
  func.func @transform_5(%arg0: i32, %arg1: i32) -> (i32, i32) {
    %c0_i32 = arith.constant 0 : i32
    %c0_i32_0 = arith.constant 0 : i32
    %c0_i32_1 = arith.constant 0 : i32
    return %c0_i32, %c0_i32_0 : i32, i32
  }
  func.func @transform_6(%arg0: i32, %arg1: i32) -> (i32, i32) {
    %c0_i32 = arith.constant 0 : i32
    %c0_i32_0 = arith.constant 0 : i32
    %c0_i32_1 = arith.constant 0 : i32
    return %c0_i32, %c0_i32_0 : i32, i32
  }
  func.func @transform_7(%arg0: i32, %arg1: i32) -> (i32, i32) {
    %c0_i32 = arith.constant 0 : i32
    %c0_i32_0 = arith.constant 0 : i32
    %c0_i32_1 = arith.constant 0 : i32
    return %c0_i32, %c0_i32_0 : i32, i32
  }
  func.func @transform_8(%arg0: i32, %arg1: i32) -> (i32, i32) {
    %c0_i32 = arith.constant 0 : i32
    %c0_i32_0 = arith.constant 0 : i32
    %c0_i32_1 = arith.constant 0 : i32
    return %c0_i32, %c0_i32_0 : i32, i32
  }
  func.func @transform_9(%arg0: i32, %arg1: i32) -> (i32, i32) {
    %c0_i32 = arith.constant 0 : i32
    %c0_i32_0 = arith.constant 0 : i32
    %c0_i32_1 = arith.constant 0 : i32
    return %c0_i32, %c0_i32_0 : i32, i32
  }
  func.func @transform_10(%arg0: i32, %arg1: i32) -> (i32, i32) {
    %c0_i32 = arith.constant 0 : i32
    %c0_i32_0 = arith.constant 0 : i32
    %c0_i32_1 = arith.constant 0 : i32
    return %c0_i32, %c0_i32_0 : i32, i32
  }
  func.func @transform_11(%arg0: i32, %arg1: i32) -> (i32, i32) {
    %c0_i32 = arith.constant 0 : i32
    %c0_i32_0 = arith.constant 0 : i32
    %c0_i32_1 = arith.constant 0 : i32
    return %c0_i32, %c0_i32_0 : i32, i32
  }
  func.func @transform_12(%arg0: i32, %arg1: i32) -> (i32, i32) {
    %c0_i32 = arith.constant 0 : i32
    %c0_i32_0 = arith.constant 0 : i32
    %c0_i32_1 = arith.constant 0 : i32
    return %c0_i32, %c0_i32_0 : i32, i32
  }
  func.func @transform_13(%arg0: i32, %arg1: i32) -> (i32, i32, i32) {
    %c0_i32 = arith.constant 0 : i32
    %c0_i32_0 = arith.constant 0 : i32
    return %arg0, %arg1, %c0_i32 : i32, i32, i32
  }
}

</mosaic_0001>

<llo_original>
// kernel: tpu_custom_call.1
$region0: #{tpu_custom_call.1}
  #allocation0 [shape = 'u32[]', space=smem, size = 0x4, offset = 0x4, fixed_abs, tag = 'smem constant byte address 0x4 - core index']
  #allocation1 [shape = 'u32[144,128]{1,0:T(1,128)}', space=vmem, size = 0x12000, scoped, tag = 'internal scratch']
  %s0 = inlined_call_operand.vmem [shape: f32[2,64,144], index: 0, kind: input, shape index: {}]
  %s1 = inlined_call_operand.vmem [shape: f32[1,144], index: 1, kind: input, shape index: {}]
  %s2 = inlined_call_operand.vmem [shape: f32[1,144], index: 2, kind: input, shape index: {}]
  %s3 = inlined_call_operand.hbm [shape: bf16[144,72], index: 3, kind: input, shape index: {}]
  %s4 = inlined_call_operand.hbm [shape: bf16[72,384], index: 4, kind: input, shape index: {}]
  %s5 = inlined_call_operand.vmem [shape: bf16[128,144], index: 5, kind: input, shape index: {}]
  %s6 = inlined_call_operand.vmem [shape: f32[1,144], index: 6, kind: input, shape index: {}]
  %s7 = inlined_call_operand.vmem [shape: f32[1,144], index: 7, kind: input, shape index: {}]
  %s8 = inlined_call_operand.vmem [shape: f32[1,144], index: 8, kind: input, shape index: {}]
  %s9 = inlined_call_operand.vmem [shape: bf16[144,36], index: 9, kind: input, shape index: {}]
  %s10 = inlined_call_operand.vmem [shape: f32[1,36], index: 10, kind: input, shape index: {}]
  %s11 = inlined_call_operand.vmem [shape: bf16[36,144], index: 11, kind: input, shape index: {}]
  %s12 = inlined_call_operand.vmem [shape: f32[1,144], index: 12, kind: input, shape index: {}]
  %s13 = inlined_call_operand.hbm [shape: f32[2,64,144], index: 13, kind: output, shape index: {}]
  %s14 = sld [smem:[#allocation0]]
  $region93: #{tpu_custom_call.1} parent=0
    _
  %s16 = ssub.s32 1, %s14
  %s17 = scalar_select 0, %s16, %s14
  $region1: #{tpu_custom_call.1} parent=0
    #allocation2 [shape = 'u8[36864]{0}', space=vmem, size = 0x9000, scoped, tag = 'input window, operand 3, single buffered']
    #allocation3 [shape = 's32[2]{0}', space=sflag, size = 0x8, scoped, tag = 'scoped memory for tpu_custom_call.1']
    #allocation4 [shape = 's32[2]{0}', space=sflag, size = 0x8, scoped, tag = 'scoped memory for tpu_custom_call.1']
    #allocation5 [shape = 'u8[55296]{0}', space=vmem, size = 0xd800, scoped, tag = 'input window, operand 4, single buffered']
    #allocation6 [shape = 's32[1]{0}', space=sflag, size = 0x4, scoped, tag = 'scoped memory for tpu_custom_call.1']
    #allocation7 [shape = 'u8[32768]{0}', space=vmem, size = 0x8000, scoped, tag = 'output window, operand 0']
    %18 = vsyncpa [#allocation3], 0
    %19 = vsyncpa [#allocation6], 0
    %20 = vsyncpa [#allocation4], 0
    %s21 = scalar_lea.sflag [#allocation4], 1
    %22 = vsyncpa %s21, 0
    loop: start=0, step=1, limit=10
    $region2: #{tpu_custom_call.1} parent=1 // loop_pre_header
      _
    $region3: #{tpu_custom_call.1} parent=1 // loop_header
      %s24 = sphi 0, %s28
      %p25 = scmp.ge.s32.totalorder %s24, 10
      %s31 = sphi 0, %s43
      %s32 = sphi 0, %s39
      %s33 = sphi 0, %s31
      %s34 = sphi 0, %s32
      %s35 = sphi 0, %s33
      %s36 = sphi 0, %s34
      %s48 = sphi 0, %s50
      %s51 = sphi 0, %s48
      %s52 = sphi 0, %s51
      %s68 = sphi 0, %s52
      %s72 = sphi 0, %s72
      %s74 = sphi 0, %s72
      %s75 = sphi 0, %s74
      %s89 = sphi 0, %s75
      %s93 = sphi 0, %s93
      %s95 = sphi 0, %s93
      %s96 = sphi 0, %s95
      %s110 = sphi 0, %s96
      %s114 = sphi 0, %s114
      %s116 = sphi 0, %s114
      %s117 = sphi 0, %s116
      %s131 = sphi 0, %s117
      %s135 = sphi 0, %s135
      %s137 = sphi 0, %s135
      %s138 = sphi 0, %s137
      %s152 = sphi 0, %s138
      %s156 = sphi 0, %s156
      %s158 = sphi 0, %s156
      %s159 = sphi 0, %s158
      %s173 = sphi 0, %s159
      %s177 = sphi 0, %s177
      %s179 = sphi 0, %s177
      %s180 = sphi 0, %s179
      %s194 = sphi 0, %s180
      %s198 = sphi 0, %s198
      %s200 = sphi 0, %s198
      %s201 = sphi 0, %s200
      %s215 = sphi 0, %s201
      %s219 = sphi 0, %s219
      %s221 = sphi 0, %s219
      %s222 = sphi 0, %s221
      %s236 = sphi 0, %s222
      %s240 = sphi 0, %s240
      %s242 = sphi 0, %s240
      %s243 = sphi 0, %s242
      %s257 = sphi 0, %s243
      %s261 = sphi 0, %s261
      %s263 = sphi 0, %s261
      %s264 = sphi 0, %s263
      %s278 = sphi 0, %s264
      %s282 = sphi 0, %s282
      %s284 = sphi 0, %s282
      %s285 = sphi 0, %s284
      %s299 = sphi 0, %s285
      %s303 = sphi 0, %s303
      %s305 = sphi 0, %s303
      %s306 = sphi 0, %s305
      %s320 = sphi 0, %s306
      %s328 = sphi 0, %s330
      %s331 = sphi 0, %s328
      %s332 = sphi 0, %s331
      %s348 = sphi 0, %s332
    $region4: #{tpu_custom_call.1} parent=1 // loop_header_branch
      %27 = sbr.rel (%p25) target = $region8
    $region5: #{tpu_custom_call.1} parent=1 // loop_body
      %s29 = ssub.s32 %s24, 1
      %s30 = ssub.s32 %s24, 2
      %s37 = sadd.s32 1, %s32
      %p38 = scmp.ge.s32.totalorder %s37, 4
      %s39 = scalar_select %p38, 0, %s37
      %s40 = sadd.s32 1, %s31
      %s41 = scalar_select %p38, %s40, %s31
      %p42 = scmp.ge.s32.totalorder %s41, 2
      %s43 = scalar_select %p42, 0, %s41
      %s44 = ssub.s32 %s31, %s43
      %s45 = ssub.s32 %s32, %s39
      %s46 = sor.u32 %s44, %s45
      %p47 = scmp.eq.s32.totalorder %s46, 0
      %s49 = sadd.s32 %s48, 1
      %s50 = scalar_select %p47, %s48, %s49
      %p53 = pneg %p47
      %p54 = scmp.eq.s32.totalorder %s24, 7
      %p55 = por %p53, %p54
      %p56 = scmp.ne.s32.totalorder %s48, %s51
      %p57 = scmp.eq.s32.totalorder %s24, 0
      %p58 = por %p56, %p57
      %p59 = scmp.ne.s32.totalorder %s48, %s51
      %p60 = scmp.eq.s32.totalorder %s29, 7
      %p61 = por %p59, %p60
      %p62 = scmp.ne.s32.totalorder %s51, %s52
      %p63 = scmp.eq.s32.totalorder %s29, 0
      %p64 = por %p62, %p63
      %p65 = scmp.ne.s32.totalorder %s51, %s52
      %p66 = scmp.eq.s32.totalorder %s30, 7
      %p67 = por %p65, %p66
      %p69 = scmp.ne.s32.totalorder %s52, %s68
      %p70 = scmp.eq.s32.totalorder %s30, 0
      %p71 = por %p69, %p70
      %s73 = sadd.s32 %s72, 1
      %p76 = scmp.eq.s32.totalorder %s24, 7
      %p77 = scmp.ne.s32.totalorder %s72, %s74
      %p78 = scmp.eq.s32.totalorder %s24, 0
      %p79 = por %p77, %p78
      %p80 = scmp.ne.s32.totalorder %s72, %s74
      %p81 = scmp.eq.s32.totalorder %s29, 7
      %p82 = por %p80, %p81
      %p83 = scmp.ne.s32.totalorder %s74, %s75
      %p84 = scmp.eq.s32.totalorder %s29, 0
      %p85 = por %p83, %p84
      %p86 = scmp.ne.s32.totalorder %s74, %s75
      %p87 = scmp.eq.s32.totalorder %s30, 7
      %p88 = por %p86, %p87
      %p90 = scmp.ne.s32.totalorder %s75, %s89
      %p91 = scmp.eq.s32.totalorder %s30, 0
      %p92 = por %p90, %p91
      %s94 = sadd.s32 %s93, 1
      %p97 = scmp.eq.s32.totalorder %s24, 7
      %p98 = scmp.ne.s32.totalorder %s93, %s95
      %p99 = scmp.eq.s32.totalorder %s24, 0
      %p100 = por %p98, %p99
      %p101 = scmp.ne.s32.totalorder %s93, %s95
      %p102 = scmp.eq.s32.totalorder %s29, 7
      %p103 = por %p101, %p102
      %p104 = scmp.ne.s32.totalorder %s95, %s96
      %p105 = scmp.eq.s32.totalorder %s29, 0
      %p106 = por %p104, %p105
      %p107 = scmp.ne.s32.totalorder %s95, %s96
      %p108 = scmp.eq.s32.totalorder %s30, 7
      %p109 = por %p107, %p108
      %p111 = scmp.ne.s32.totalorder %s96, %s110
      %p112 = scmp.eq.s32.totalorder %s30, 0
      %p113 = por %p111, %p112
      %s115 = sadd.s32 %s114, 1
      %p118 = scmp.eq.s32.totalorder %s24, 7
      %p119 = scmp.ne.s32.totalorder %s114, %s116
      %p120 = scmp.eq.s32.totalorder %s24, 0
      %p121 = por %p119, %p120
      %p122 = scmp.ne.s32.totalorder %s114, %s116
      %p123 = scmp.eq.s32.totalorder %s29, 7
      %p124 = por %p122, %p123
      %p125 = scmp.ne.s32.totalorder %s116, %s117
      %p126 = scmp.eq.s32.totalorder %s29, 0
      %p127 = por %p125, %p126
      %p128 = scmp.ne.s32.totalorder %s116, %s117
      %p129 = scmp.eq.s32.totalorder %s30, 7
      %p130 = por %p128, %p129
      %p132 = scmp.ne.s32.totalorder %s117, %s131
      %p133 = scmp.eq.s32.totalorder %s30, 0
      %p134 = por %p132, %p133
      %s136 = sadd.s32 %s135, 1
      %p139 = scmp.eq.s32.totalorder %s24, 7
      %p140 = scmp.ne.s32.totalorder %s135, %s137
      %p141 = scmp.eq.s32.totalorder %s24, 0
      %p142 = por %p140, %p141
      %p143 = scmp.ne.s32.totalorder %s135, %s137
      %p144 = scmp.eq.s32.totalorder %s29, 7
      %p145 = por %p143, %p144
      %p146 = scmp.ne.s32.totalorder %s137, %s138
      %p147 = scmp.eq.s32.totalorder %s29, 0
      %p148 = por %p146, %p147
      %p149 = scmp.ne.s32.totalorder %s137, %s138
      %p150 = scmp.eq.s32.totalorder %s30, 7
      %p151 = por %p149, %p150
      %p153 = scmp.ne.s32.totalorder %s138, %s152
      %p154 = scmp.eq.s32.totalorder %s30, 0
      %p155 = por %p153, %p154
      %s157 = sadd.s32 %s156, 1
      %p160 = scmp.eq.s32.totalorder %s24, 7
      %p161 = scmp.ne.s32.totalorder %s156, %s158
      %p162 = scmp.eq.s32.totalorder %s24, 0
      %p163 = por %p161, %p162
      %p164 = scmp.ne.s32.totalorder %s156, %s158
      %p165 = scmp.eq.s32.totalorder %s29, 7
      %p166 = por %p164, %p165
      %p167 = scmp.ne.s32.totalorder %s158, %s159
      %p168 = scmp.eq.s32.totalorder %s29, 0
      %p169 = por %p167, %p168
      %p170 = scmp.ne.s32.totalorder %s158, %s159
      %p171 = scmp.eq.s32.totalorder %s30, 7
      %p172 = por %p170, %p171
      %p174 = scmp.ne.s32.totalorder %s159, %s173
      %p175 = scmp.eq.s32.totalorder %s30, 0
      %p176 = por %p174, %p175
      %s178 = sadd.s32 %s177, 1
      %p181 = scmp.eq.s32.totalorder %s24, 7
      %p182 = scmp.ne.s32.totalorder %s177, %s179
      %p183 = scmp.eq.s32.totalorder %s24, 0
      %p184 = por %p182, %p183
      %p185 = scmp.ne.s32.totalorder %s177, %s179
      %p186 = scmp.eq.s32.totalorder %s29, 7
      %p187 = por %p185, %p186
      %p188 = scmp.ne.s32.totalorder %s179, %s180
      %p189 = scmp.eq.s32.totalorder %s29, 0
      %p190 = por %p188, %p189
      %p191 = scmp.ne.s32.totalorder %s179, %s180
      %p192 = scmp.eq.s32.totalorder %s30, 7
      %p193 = por %p191, %p192
      %p195 = scmp.ne.s32.totalorder %s180, %s194
      %p196 = scmp.eq.s32.totalorder %s30, 0
      %p197 = por %p195, %p196
      %s199 = sadd.s32 %s198, 1
      %p202 = scmp.eq.s32.totalorder %s24, 7
      %p203 = scmp.ne.s32.totalorder %s198, %s200
      %p204 = scmp.eq.s32.totalorder %s24, 0
      %p205 = por %p203, %p204
      %p206 = scmp.ne.s32.totalorder %s198, %s200
      %p207 = scmp.eq.s32.totalorder %s29, 7
      %p208 = por %p206, %p207
      %p209 = scmp.ne.s32.totalorder %s200, %s201
      %p210 = scmp.eq.s32.totalorder %s29, 0
      %p211 = por %p209, %p210
      %p212 = scmp.ne.s32.totalorder %s200, %s201
      %p213 = scmp.eq.s32.totalorder %s30, 7
      %p214 = por %p212, %p213
      %p216 = scmp.ne.s32.totalorder %s201, %s215
      %p217 = scmp.eq.s32.totalorder %s30, 0
      %p218 = por %p216, %p217
      %s220 = sadd.s32 %s219, 1
      %p223 = scmp.eq.s32.totalorder %s24, 7
      %p224 = scmp.ne.s32.totalorder %s219, %s221
      %p225 = scmp.eq.s32.totalorder %s24, 0
      %p226 = por %p224, %p225
      %p227 = scmp.ne.s32.totalorder %s219, %s221
      %p228 = scmp.eq.s32.totalorder %s29, 7
      %p229 = por %p227, %p228
      %p230 = scmp.ne.s32.totalorder %s221, %s222
      %p231 = scmp.eq.s32.totalorder %s29, 0
      %p232 = por %p230, %p231
      %p233 = scmp.ne.s32.totalorder %s221, %s222
      %p234 = scmp.eq.s32.totalorder %s30, 7
      %p235 = por %p233, %p234
      %p237 = scmp.ne.s32.totalorder %s222, %s236
      %p238 = scmp.eq.s32.totalorder %s30, 0
      %p239 = por %p237, %p238
      %s241 = sadd.s32 %s240, 1
      %p244 = scmp.eq.s32.totalorder %s24, 7
      %p245 = scmp.ne.s32.totalorder %s240, %s242
      %p246 = scmp.eq.s32.totalorder %s24, 0
      %p247 = por %p245, %p246
      %p248 = scmp.ne.s32.totalorder %s240, %s242
      %p249 = scmp.eq.s32.totalorder %s29, 7
      %p250 = por %p248, %p249
      %p251 = scmp.ne.s32.totalorder %s242, %s243
      %p252 = scmp.eq.s32.totalorder %s29, 0
      %p253 = por %p251, %p252
      %p254 = scmp.ne.s32.totalorder %s242, %s243
      %p255 = scmp.eq.s32.totalorder %s30, 7
      %p256 = por %p254, %p255
      %p258 = scmp.ne.s32.totalorder %s243, %s257
      %p259 = scmp.eq.s32.totalorder %s30, 0
      %p260 = por %p258, %p259
      %s262 = sadd.s32 %s261, 1
      %p265 = scmp.eq.s32.totalorder %s24, 7
      %p266 = scmp.ne.s32.totalorder %s261, %s263
      %p267 = scmp.eq.s32.totalorder %s24, 0
      %p268 = por %p266, %p267
      %p269 = scmp.ne.s32.totalorder %s261, %s263
      %p270 = scmp.eq.s32.totalorder %s29, 7
      %p271 = por %p269, %p270
      %p272 = scmp.ne.s32.totalorder %s263, %s264
      %p273 = scmp.eq.s32.totalorder %s29, 0
      %p274 = por %p272, %p273
      %p275 = scmp.ne.s32.totalorder %s263, %s264
      %p276 = scmp.eq.s32.totalorder %s30, 7
      %p277 = por %p275, %p276
      %p279 = scmp.ne.s32.totalorder %s264, %s278
      %p280 = scmp.eq.s32.totalorder %s30, 0
      %p281 = por %p279, %p280
      %s283 = sadd.s32 %s282, 1
      %p286 = scmp.eq.s32.totalorder %s24, 7
      %p287 = scmp.ne.s32.totalorder %s282, %s284
      %p288 = scmp.eq.s32.totalorder %s24, 0
      %p289 = por %p287, %p288
      %p290 = scmp.ne.s32.totalorder %s282, %s284
      %p291 = scmp.eq.s32.totalorder %s29, 7
      %p292 = por %p290, %p291
      %p293 = scmp.ne.s32.totalorder %s284, %s285
      %p294 = scmp.eq.s32.totalorder %s29, 0
      %p295 = por %p293, %p294
      %p296 = scmp.ne.s32.totalorder %s284, %s285
      %p297 = scmp.eq.s32.totalorder %s30, 7
      %p298 = por %p296, %p297
      %p300 = scmp.ne.s32.totalorder %s285, %s299
      %p301 = scmp.eq.s32.totalorder %s30, 0
      %p302 = por %p300, %p301
      %s304 = sadd.s32 %s303, 1
      %p307 = scmp.eq.s32.totalorder %s24, 7
      %p308 = scmp.ne.s32.totalorder %s303, %s305
      %p309 = scmp.eq.s32.totalorder %s24, 0
      %p310 = por %p308, %p309
      %p311 = scmp.ne.s32.totalorder %s303, %s305
      %p312 = scmp.eq.s32.totalorder %s29, 7
      %p313 = por %p311, %p312
      %p314 = scmp.ne.s32.totalorder %s305, %s306
      %p315 = scmp.eq.s32.totalorder %s29, 0
      %p316 = por %p314, %p315
      %p317 = scmp.ne.s32.totalorder %s305, %s306
      %p318 = scmp.eq.s32.totalorder %s30, 7
      %p319 = por %p317, %p318
      %p321 = scmp.ne.s32.totalorder %s306, %s320
      %p322 = scmp.eq.s32.totalorder %s30, 0
      %p323 = por %p321, %p322
      %s324 = ssub.s32 %s31, %s43
      %s325 = ssub.s32 %s32, %s39
      %s326 = sor.u32 %s324, %s325
      %p327 = scmp.eq.s32.totalorder %s326, 0
      %s329 = sadd.s32 %s328, 1
      %s330 = scalar_select %p327, %s328, %s329
      %p333 = pneg %p327
      %p334 = scmp.eq.s32.totalorder %s24, 7
      %p335 = por %p333, %p334
      %p336 = scmp.ne.s32.totalorder %s328, %s331
      %p337 = scmp.eq.s32.totalorder %s24, 0
      %p338 = por %p336, %p337
      %p339 = scmp.ne.s32.totalorder %s328, %s331
      %p340 = scmp.eq.s32.totalorder %s29, 7
      %p341 = por %p339, %p340
      %p342 = scmp.ne.s32.totalorder %s331, %s332
      %p343 = scmp.eq.s32.totalorder %s29, 0
      %p344 = por %p342, %p343
      %p345 = scmp.ne.s32.totalorder %s331, %s332
      %p346 = scmp.eq.s32.totalorder %s30, 7
      %p347 = por %p345, %p346
      %p349 = scmp.ne.s32.totalorder %s332, %s348
      %p350 = scmp.eq.s32.totalorder %s30, 0
      %p351 = por %p349, %p350
      %p352 = scmp.le.s32.totalorder 1, %s24
      %p353 = scmp.lt.s32.totalorder %s24, 9
      %p354 = pnand %p352, %p353
      %p355 = pneg %p354
      // Predicated region
      $region9: #{tpu_custom_call.1} parent=5 // pred_check
        _
      $region10: #{tpu_custom_call.1} parent=5 // pred_check_branch
        %357 = sbr.rel (%p354) target = $region12
      $region11: #{tpu_custom_call.1} parent=5 // pred_region
        %s358 = ssub.s32 %s24, 1
        // Predicated region
        $region13: #{tpu_custom_call.1} parent=11 // pred_check
          %p359 = pneg %p85
        $region14: #{tpu_custom_call.1} parent=11 // pred_check_branch
          %361 = sbr.rel (%p359) target = $region16
        $region15: #{tpu_custom_call.1} parent=11 // pred_region
          _
        $region16: #{tpu_custom_call.1} parent=11 // pred_fallthru
          _
        // Predicated region
        $region17: #{tpu_custom_call.1} parent=11 // pred_check
          %p362 = pneg %p106
        $region18: #{tpu_custom_call.1} parent=11 // pred_check_branch
          %364 = sbr.rel (%p362) target = $region20
        $region19: #{tpu_custom_call.1} parent=11 // pred_region
          _
        $region20: #{tpu_custom_call.1} parent=11 // pred_fallthru
          _
        // Predicated region
        $region21: #{tpu_custom_call.1} parent=11 // pred_check
          %p365 = pneg %p127
        $region22: #{tpu_custom_call.1} parent=11 // pred_check_branch
          %367 = sbr.rel (%p365) target = $region24
        $region23: #{tpu_custom_call.1} parent=11 // pred_region
          %s369 = ssub.s32 1152, 1152
          %370 = vsyncadd [#allocation3], %s369
          %s371 = sshll.u32 [#allocation2], 4
          %s372 = int_to_ptr.vmem [resolvable:$true] %s371
          %377 = dma.hbm_to_vmem [thread:$0]  %s3, 1152, %s372, [#allocation3], 64, 64, 4
        $region24: #{tpu_custom_call.1} parent=11 // pred_fallthru
          _
        // Predicated region
        $region25: #{tpu_custom_call.1} parent=11 // pred_check
          %p378 = pneg %p148
        $region26: #{tpu_custom_call.1} parent=11 // pred_check_branch
          %380 = sbr.rel (%p378) target = $region28
        $region27: #{tpu_custom_call.1} parent=11 // pred_region
          %s382 = ssub.s32 1728, 1728
          %383 = vsyncadd [#allocation6], %s382
          %s384 = sshll.u32 [#allocation5], 4
          %s385 = int_to_ptr.vmem [resolvable:$true] %s384
          %390 = dma.hbm_to_vmem [thread:$0]  %s4, 1728, %s385, [#allocation6], 192, 192, 12
        $region28: #{tpu_custom_call.1} parent=11 // pred_fallthru
          _
        // Predicated region
        $region29: #{tpu_custom_call.1} parent=11 // pred_check
          %p391 = pneg %p169
        $region30: #{tpu_custom_call.1} parent=11 // pred_check_branch
          %393 = sbr.rel (%p391) target = $region32
        $region31: #{tpu_custom_call.1} parent=11 // pred_region
          _
        $region32: #{tpu_custom_call.1} parent=11 // pred_fallthru
          _
        // Predicated region
        $region33: #{tpu_custom_call.1} parent=11 // pred_check
          %p394 = pneg %p190
        $region34: #{tpu_custom_call.1} parent=11 // pred_check_branch
          %396 = sbr.rel (%p394) target = $region36
        $region35: #{tpu_custom_call.1} parent=11 // pred_region
          _
        $region36: #{tpu_custom_call.1} parent=11 // pred_fallthru
          _
        // Predicated region
        $region37: #{tpu_custom_call.1} parent=11 // pred_check
          %p397 = pneg %p211
        $region38: #{tpu_custom_call.1} parent=11 // pred_check_branch
          %399 = sbr.rel (%p397) target = $region40
        $region39: #{tpu_custom_call.1} parent=11 // pred_region
          _
        $region40: #{tpu_custom_call.1} parent=11 // pred_fallthru
          _
        // Predicated region
        $region41: #{tpu_custom_call.1} parent=11 // pred_check
          %p400 = pneg %p232
        $region42: #{tpu_custom_call.1} parent=11 // pred_check_branch
          %402 = sbr.rel (%p400) target = $region44
        $region43: #{tpu_custom_call.1} parent=11 // pred_region
          _
        $region44: #{tpu_custom_call.1} parent=11 // pred_fallthru
          _
        // Predicated region
        $region45: #{tpu_custom_call.1} parent=11 // pred_check
          %p403 = pneg %p253
        $region46: #{tpu_custom_call.1} parent=11 // pred_check_branch
          %405 = sbr.rel (%p403) target = $region48
        $region47: #{tpu_custom_call.1} parent=11 // pred_region
          _
        $region48: #{tpu_custom_call.1} parent=11 // pred_fallthru
          _
        // Predicated region
        $region49: #{tpu_custom_call.1} parent=11 // pred_check
          %p406 = pneg %p274
        $region50: #{tpu_custom_call.1} parent=11 // pred_check_branch
          %408 = sbr.rel (%p406) target = $region52
        $region51: #{tpu_custom_call.1} parent=11 // pred_region
          _
        $region52: #{tpu_custom_call.1} parent=11 // pred_fallthru
          _
        // Predicated region
        $region53: #{tpu_custom_call.1} parent=11 // pred_check
          %p409 = pneg %p295
        $region54: #{tpu_custom_call.1} parent=11 // pred_check_branch
          %411 = sbr.rel (%p409) target = $region56
        $region55: #{tpu_custom_call.1} parent=11 // pred_region
          _
        $region56: #{tpu_custom_call.1} parent=11 // pred_fallthru
          _
        // Predicated region
        $region57: #{tpu_custom_call.1} parent=11 // pred_check
          %p412 = pneg %p316
        $region58: #{tpu_custom_call.1} parent=11 // pred_check_branch
          %414 = sbr.rel (%p412) target = $region60
        $region59: #{tpu_custom_call.1} parent=11 // pred_region
          _
        $region60: #{tpu_custom_call.1} parent=11 // pred_fallthru
          _
      $region12: #{tpu_custom_call.1} parent=5 // pred_fallthru
        _
      %p415 = scmp.lt.s32.totalorder %s24, 8
      // Predicated region
      $region61: #{tpu_custom_call.1} parent=5 // pred_check
        %p416 = pneg %p415
      $region62: #{tpu_custom_call.1} parent=5 // pred_check_branch
        %418 = sbr.rel (%p416) target = $region64
      $region63: #{tpu_custom_call.1} parent=5 // pred_region
        // Predicated region
        $region65: #{tpu_custom_call.1} parent=63 // pred_check
          %p419 = pneg %p58
        $region66: #{tpu_custom_call.1} parent=63 // pred_check_branch
          %421 = sbr.rel (%p419) target = $region68
        $region67: #{tpu_custom_call.1} parent=63 // pred_region
          %s422 = smul.u32 2, %s32
          %p423 = scmp.lt.s32.totalorder %s31, 1
          %s424 = scalar_select %p423, %s31, 1
          %p425 = scmp.lt.s32.totalorder %s422, 7
          %s426 = scalar_select %p425, %s422, 7
          %s427 = smul.addr %s426, 2
          %s428 = smul.addr %s424, 16
          %s429 = sadd.s32 %s427, %s428
          %s430 = smul.addr %s429, 8
          %s431 = scalar_lea.vmem %s0, %s430
          %s432 = smul.u32 2, %s32
        $region68: #{tpu_custom_call.1} parent=63 // pred_fallthru
          _
      $region64: #{tpu_custom_call.1} parent=5 // pred_fallthru
        _
      %p433 = scmp.le.s32.totalorder 1, %s24
      %p434 = scmp.lt.s32.totalorder %s24, 9
      %p435 = pnand %p433, %p434
      %p436 = pneg %p435
      // Predicated region
      $region69: #{tpu_custom_call.1} parent=5 // pred_check
        _
      $region70: #{tpu_custom_call.1} parent=5 // pred_check_branch
        %438 = sbr.rel (%p435) target = $region72
      $region71: #{tpu_custom_call.1} parent=5 // pred_region
        %s439 = ssub.s32 %s24, 1
        // Predicated region
        $region73: #{tpu_custom_call.1} parent=71 // pred_check
          %p440 = pneg %p127
        $region74: #{tpu_custom_call.1} parent=71 // pred_check_branch
          %442 = sbr.rel (%p440) target = $region76
        $region75: #{tpu_custom_call.1} parent=71 // pred_region
          %443 = dma.done [#allocation3], 1152
        $region76: #{tpu_custom_call.1} parent=71 // pred_fallthru
          _
        // Predicated region
        $region77: #{tpu_custom_call.1} parent=71 // pred_check
          %p444 = pneg %p148
        $region78: #{tpu_custom_call.1} parent=71 // pred_check_branch
          %446 = sbr.rel (%p444) target = $region80
        $region79: #{tpu_custom_call.1} parent=71 // pred_region
          %447 = dma.done [#allocation6], 1728
        $region80: #{tpu_custom_call.1} parent=71 // pred_fallthru
          _
        %s448 = smul.u32 2, %s34
        %p449 = scmp.lt.s32.totalorder %s33, 1
        %s450 = scalar_select %p449, %s33, 1
        %p451 = scmp.lt.s32.totalorder %s448, 7
        %s452 = scalar_select %p451, %s448, 7
        %s453 = smul.addr %s452, 2
        %s454 = smul.addr %s450, 16
        %s455 = sadd.s32 %s453, %s454
        %s456 = smul.addr %s455, 8
        %s457 = scalar_lea.vmem %s0, %s456
        %p458 = pneg %p64
        %p459 = pneg %p61
        %p460 = pneg %p85
        %p461 = pneg %p82
        %p462 = pneg %p106
        %p463 = pneg %p103
        %p464 = pneg %p127
        %p465 = pneg %p124
        %p466 = pneg %p148
        %p467 = pneg %p145
        %p468 = pneg %p169
        %p469 = pneg %p166
        %p470 = pneg %p190
        %p471 = pneg %p187
        %p472 = pneg %p211
        %p473 = pneg %p208
        %p474 = pneg %p232
        %p475 = pneg %p229
        %p476 = pneg %p253
        %p477 = pneg %p250
        %p478 = pneg %p274
        %p479 = pneg %p271
        %p480 = pneg %p295
        %p481 = pneg %p292
        %p482 = pneg %p316
        %p483 = pneg %p313
        %p484 = pneg %p344
        %p485 = pneg %p341
        %s486 = sand.u32 %s331, 1
        %s487 = scalar_lea.sflag [#allocation4], %s486
        %s488 = sand.u32 %s331, 1
        %s489 = smul.addr %s488, 32
        %s490 = scalar_lea.vmem [#allocation7], %s489
        %s491 = smul.u32 2, %s34
        %p492 = scmp.lt.s32.totalorder %s33, 1
        %s493 = scalar_select %p492, %s33, 1
        %p494 = scmp.lt.s32.totalorder %s491, 7
        %s495 = scalar_select %p494, %s491, 7
        %s496 = smul.addr %s495, 2
        %s497 = smul.addr %s493, 16
        %s498 = sadd.s32 %s496, %s497
        %s499 = smul.addr %s498, 8
        %s500 = scalar_lea.vmem %s0, %s499
        %s501 = smul.u32 2, %s34
        %s502 = smul.u32 2, %s34
        %v504 = vld [vmem:[%s500] sm:$0xff]
        %v505 = vld [vmem:[%s500 + $0x8] sm:$0xff]
        %v506 = vld [vmem:[%s500 + $0x10] sm:$0xff]
        %v507 = vld [vmem:[%s500 + $0x18] sm:$0xff]
        %v508 = vld [vmem:[%s1] sm:$0x3]
        %v509 = vld [vmem:[%s2] sm:$0x3]
        %vm510 = vcmask 130048
        %v511 = vsel %vm510, %v505, 0.0
        %v512 = vadd.f32 %v504, %v511
        %513 = vadd.xlane.f32.xlu0 %v512
        %v514 = vpop.xlane.xlu0 %513
        %v515 = vsel %vm510, %v507, 0.0
        %v516 = vadd.f32 %v506, %v515
        %517 = vadd.xlane.f32.xlu0 %v516
        %v518 = vpop.xlane.xlu0 %517
        %v519 = vrcp.pop 144.0
        %v520 = vmul.f32 %v514, %v519
        %v521 = vmul.f32 %v518, %v519
        %v522 = vsub.f32 %v504, %v520
        %v523 = vsub.f32 %v505, %v520
        %v524 = vsub.f32 %v506, %v521
        %v525 = vsub.f32 %v507, %v521
        %v526 = vmul.f32 %v522, %v522
        %v527 = vmul.f32 %v523, %v523
        %v528 = vmul.f32 %v524, %v524
        %v529 = vmul.f32 %v525, %v525
        %v530 = vsel %vm510, %v527, 0.0
        %v531 = vadd.f32 %v526, %v530
        %532 = vadd.xlane.f32.xlu0 %v531
        %v533 = vpop.xlane.xlu0 %532
        %v534 = vsel %vm510, %v529, 0.0
        %v535 = vadd.f32 %v528, %v534
        %536 = vadd.xlane.f32.xlu0 %v535
        %v537 = vpop.xlane.xlu0 %536
        %v538 = vmul.f32 %v533, %v519
        %v539 = vmul.f32 %v537, %v519
        %v540 = vadd.f32 %v538, 1e-05
        %v541 = vadd.f32 %v539, 1e-05
        %v542 = vrsqrt.pop %v540
        %v543 = vrsqrt.pop %v541
        %v544 = vmul.f32 %v522, %v542
        %v545 = vmul.f32 %v523, %v542
        %v546 = vmul.f32 %v524, %v543
        %v547 = vmul.f32 %v525, %v543
        %v549 = vlaneseq
        %v550 = vshrl.u32 %v549, 7
        %v551 = vsub.s32 0, %v550
        %v552 = vrot.slane %v508, %v551
        %v553 = vlaneseq
        %v554 = vshrl.u32 %v553, 7
        %v555 = vsub.s32 1, %v554
        %v556 = vrot.slane %v508, %v555
        %v559 = vmul.f32 %v544, %v552
        %v560 = vmul.f32 %v545, %v556
        %v561 = vmul.f32 %v546, %v552
        %v562 = vmul.f32 %v547, %v556
        %v564 = vlaneseq
        %v565 = vshrl.u32 %v564, 7
        %v566 = vsub.s32 0, %v565
        %v567 = vrot.slane %v509, %v566
        %v568 = vlaneseq
        %v569 = vshrl.u32 %v568, 7
        %v570 = vsub.s32 1, %v569
        %v571 = vrot.slane %v509, %v570
        %v574 = vadd.f32 %v559, %v567
        %v575 = vadd.f32 %v560, %v571
        %v576 = vadd.f32 %v561, %v567
        %v577 = vadd.f32 %v562, %v571
        %v578 = vpack.c.bf16 %v576, %v574
        %v579 = vpack.c.bf16 %v577, %v575
        %v580 = vld [vmem:[#allocation2] sm:$0xf]
        %v581 = vld [vmem:[#allocation2 + $0x4] sm:$0xf]
        %v582 = vld [vmem:[#allocation2 + $0x8] sm:$0xf]
        %v583 = vld [vmem:[#allocation2 + $0xc] sm:$0xf]
        %v584 = vld [vmem:[#allocation2 + $0x10] sm:$0xf]
        %v585 = vld [vmem:[#allocation2 + $0x14] sm:$0xf]
        %v586 = vld [vmem:[#allocation2 + $0x18] sm:$0xf]
        %v587 = vld [vmem:[#allocation2 + $0x1c] sm:$0xf]
        %v588 = vld [vmem:[#allocation2 + $0x20] sm:$0xf]
        %v589 = vld [vmem:[#allocation2 + $0x24] sm:$0xf]
        %v590 = vld [vmem:[#allocation2 + $0x28] sm:$0xf]
        %v591 = vld [vmem:[#allocation2 + $0x2c] sm:$0xf]
        %v592 = vld [vmem:[#allocation2 + $0x30] sm:$0xf]
        %v593 = vld [vmem:[#allocation2 + $0x34] sm:$0xf]
        %v594 = vld [vmem:[#allocation2 + $0x38] sm:$0xf]
        %v595 = vld [vmem:[#allocation2 + $0x3c] sm:$0xf]
        %v596 = vld [vmem:[#allocation2 + $0x40] sm:$0xf]
        %v597 = vld [vmem:[#allocation2 + $0x44] sm:$0xf]
        %v616 = vunpack.c.l.b16 %v580
        %v617 = vunpack.c.l.b16 %v581
        %v618 = vunpack.c.l.b16 %v582
        %v619 = vunpack.c.l.b16 %v583
        %v620 = vunpack.c.l.b16 %v584
        %v621 = vunpack.c.l.b16 %v585
        %v622 = vunpack.c.l.b16 %v586
        %v623 = vunpack.c.l.b16 %v587
        %v624 = vunpack.c.l.b16 %v588
        %v625 = vunpack.c.l.b16 %v589
        %v626 = vunpack.c.l.b16 %v590
        %v627 = vunpack.c.l.b16 %v591
        %v628 = vunpack.c.l.b16 %v592
        %v629 = vunpack.c.l.b16 %v593
        %v630 = vunpack.c.l.b16 %v594
        %v631 = vunpack.c.l.b16 %v595
        %v632 = vunpack.c.l.b16 %v596
        %v633 = vunpack.c.l.b16 %v597
        %v634 = vpack.c.b16 %v617, %v616
        %v635 = vpack.c.b16 %v619, %v618
        %v636 = vpack.c.b16 %v621, %v620
        %v637 = vpack.c.b16 %v623, %v622
        %v638 = vpack.c.b16 %v625, %v624
        %v639 = vpack.c.b16 %v627, %v626
        %v640 = vpack.c.b16 %v629, %v628
        %v641 = vpack.c.b16 %v631, %v630
        %v642 = vpack.c.b16 %v633, %v632
        %v653 = vsel %vm510, %v579, 0
        %655 = vmatprep.subr.bf16.mxu0 0
        %656 = vmatpush1.bf16.msra.mxu0 %v641
        %657 = vmatprep.subr.bf16.mxu0 0
        %658 = vmatpush1.bf16.msra.mxu0 %v640
        %659 = vmatprep.subr.bf16.mxu0 0
        %660 = vmatpush1.bf16.msra.mxu0 %v639
        %661 = vmatprep.subr.bf16.mxu0 0
        %662 = vmatpush1.bf16.msra.mxu0 %v638
        %663 = vmatprep.subr.bf16.mxu0 0
        %664 = vmatpush1.bf16.msra.mxu0 %v637
        %665 = vmatprep.subr.bf16.mxu0 0
        %666 = vmatpush1.bf16.msra.mxu0 %v636
        %667 = vmatprep.subr.bf16.mxu0 0
        %668 = vmatpush1.bf16.msra.mxu0 %v635
        %669 = vmatprep.subr.bf16.mxu0 0
        %670 = vmatpush1.bf16.msra.mxu0 %v634
        %671 = vmatprep.subr.bf16.mxu0 0
        %672 = vmatpush2.bf16.msra.mxu0 0
        %673 = vmatprep.subr.bf16.mxu0 0
        %674 = vmatpush2.bf16.msra.mxu0 0
        %675 = vmatprep.subr.bf16.mxu0 0
        %676 = vmatpush2.bf16.msra.mxu0 0
        %677 = vmatprep.subr.bf16.mxu0 0
        %678 = vmatpush2.bf16.msra.mxu0 0
        %679 = vmatprep.subr.bf16.mxu0 0
        %680 = vmatpush2.bf16.msra.mxu0 0
        %681 = vmatprep.subr.bf16.mxu0 0
        %682 = vmatpush2.bf16.msra.mxu0 0
        %683 = vmatprep.subr.bf16.mxu0 0
        %684 = vmatpush2.bf16.msra.mxu0 0
        %685 = vmatprep.subr.bf16.mxu0 0
        %686 = vmatpush2.bf16.msra.mxu0 %v642
        %687 = vmatprep.mubr.bf16.mxu0 %v653
        %688 = vmatmul.mubr.bf16.gmra.mxu0 %v578
        %v689 = vpop.f32.mrf.mxu0
        %v690 = vadd.f32 0.0, %v689
        %v691 = vpop.f32.mrf.mxu0
        %v692 = vpop.f32.mrf.mxu0
        %v693 = vadd.f32 0.0, %v692
        %v694 = vpop.f32.mrf.mxu0
        %695 = vdwg.mxu0
        %v696 = vpack.c.bf16 %v693, %v690
        %v697 = vld [vmem:[#allocation5] sm:$0xff]
        %v698 = vld [vmem:[#allocation5 + $0x8] sm:$0xf]
        %v699 = vld [vmem:[#allocation5 + $0xc] sm:$0xff]
        %v700 = vld [vmem:[#allocation5 + $0x14] sm:$0xf]
        %v701 = vld [vmem:[#allocation5 + $0x18] sm:$0xff]
        %v702 = vld [vmem:[#allocation5 + $0x20] sm:$0xf]
        %v703 = vld [vmem:[#allocation5 + $0x24] sm:$0xff]
        %v704 = vld [vmem:[#allocation5 + $0x2c] sm:$0xf]
        %v705 = vld [vmem:[#allocation5 + $0x30] sm:$0xff]
        %v706 = vld [vmem:[#allocation5 + $0x38] sm:$0xf]
        %v707 = vld [vmem:[#allocation5 + $0x3c] sm:$0xff]
        %v708 = vld [vmem:[#allocation5 + $0x44] sm:$0xf]
        %v709 = vld [vmem:[#allocation5 + $0x48] sm:$0xff]
        %v710 = vld [vmem:[#allocation5 + $0x50] sm:$0xf]
        %v711 = vld [vmem:[#allocation5 + $0x54] sm:$0xff]
        %v712 = vld [vmem:[#allocation5 + $0x5c] sm:$0xf]
        %v713 = vld [vmem:[#allocation5 + $0x60] sm:$0xff]
        %v714 = vld [vmem:[#allocation5 + $0x68] sm:$0xf]
        %v733 = vunpack.c.l.b16 %v697
        %v734 = vunpack.c.h.b16 %v697
        %v735 = vunpack.c.l.b16 %v698
        %v736 = vunpack.c.l.b16 %v699
        %v737 = vunpack.c.h.b16 %v699
        %v738 = vunpack.c.l.b16 %v700
        %v739 = vunpack.c.l.b16 %v701
        %v740 = vunpack.c.h.b16 %v701
        %v741 = vunpack.c.l.b16 %v702
        %v742 = vunpack.c.l.b16 %v703
        %v743 = vunpack.c.h.b16 %v703
        %v744 = vunpack.c.l.b16 %v704
        %v745 = vunpack.c.l.b16 %v705
        %v746 = vunpack.c.h.b16 %v705
        %v747 = vunpack.c.l.b16 %v706
        %v748 = vunpack.c.l.b16 %v707
        %v749 = vunpack.c.h.b16 %v707
        %v750 = vunpack.c.l.b16 %v708
        %v751 = vunpack.c.l.b16 %v709
        %v752 = vunpack.c.h.b16 %v709
        %v753 = vunpack.c.l.b16 %v710
        %v754 = vunpack.c.l.b16 %v711
        %v755 = vunpack.c.h.b16 %v711
        %v756 = vunpack.c.l.b16 %v712
        %v757 = vunpack.c.l.b16 %v713
        %v758 = vunpack.c.h.b16 %v713
        %v759 = vunpack.c.l.b16 %v714
        %v760 = vpack.c.b16 %v736, %v733
        %v761 = vpack.c.b16 %v737, %v734
        %v762 = vpack.c.b16 %v738, %v735
        %v763 = vpack.c.b16 %v742, %v739
        %v764 = vpack.c.b16 %v743, %v740
        %v765 = vpack.c.b16 %v744, %v741
        %v766 = vpack.c.b16 %v748, %v745
        %v767 = vpack.c.b16 %v749, %v746
        %v768 = vpack.c.b16 %v750, %v747
        %v769 = vpack.c.b16 %v754, %v751
        %v770 = vpack.c.b16 %v755, %v752
        %v771 = vpack.c.b16 %v756, %v753
        %v772 = vpack.c.b16 %v757, %v757
        %v773 = vpack.c.b16 %v758, %v758
        %v774 = vpack.c.b16 %v759, %v759
        %vm787 = vcmask 588800
        %v789 = vsel %vm787, %v696, 0
        %vm791 = vcmask 1043456
        %v793 = vsel %vm791, %v772, 0
        %v796 = vsel %vm791, %v773, 0
        %v799 = vsel %vm791, %v774, 0
        %801 = vmatprep.subr.bf16.mxu0 0
        %802 = vmatpush1.bf16.msra.mxu0 0
        %803 = vmatprep.subr.bf16.mxu0 0
        %804 = vmatpush1.bf16.msra.mxu0 0
        %805 = vmatprep.subr.bf16.mxu0 0
        %806 = vmatpush1.bf16.msra.mxu0 0
        %807 = vmatprep.subr.bf16.mxu0 %v796
        %808 = vmatpush1.bf16.msra.mxu0 %v793
        %809 = vmatprep.subr.bf16.mxu0 %v770
        %810 = vmatpush1.bf16.msra.mxu0 %v769
        %811 = vmatprep.subr.bf16.mxu0 %v767
        %812 = vmatpush1.bf16.msra.mxu0 %v766
        %813 = vmatprep.subr.bf16.mxu0 %v764
        %814 = vmatpush1.bf16.msra.mxu0 %v763
        %815 = vmatprep.subr.bf16.mxu0 %v761
        %816 = vmatpush1.bf16.msra.mxu0 %v760
        %817 = vmatprep.subr.bf16.mxu0 0
        %818 = vmatpush2.bf16.msra.mxu0 0
        %819 = vmatprep.subr.bf16.mxu0 0
        %820 = vmatpush2.bf16.msra.mxu0 0
        %821 = vmatprep.subr.bf16.mxu0 0
        %822 = vmatpush2.bf16.msra.mxu0 0
        %823 = vmatprep.subr.bf16.mxu0 0
        %824 = vmatpush2.bf16.msra.mxu0 0
        %825 = vmatprep.subr.bf16.mxu0 0
        %826 = vmatpush2.bf16.msra.mxu0 0
        %827 = vmatprep.subr.bf16.mxu0 0
        %828 = vmatpush2.bf16.msra.mxu0 0
        %829 = vmatprep.subr.bf16.mxu0 0
        %830 = vmatpush2.bf16.msra.mxu0 0
        %831 = vmatprep.subr.bf16.mxu0 0
        %832 = vmatpush2.bf16.msra.mxu0 0
        %833 = vmatprep.mubr.bf16.mxu0 0
        %834 = vmatmul.mubr.bf16.gmra.mxu0 %v789
        %v835 = vpop.f32.mrf.mxu0
        %v836 = vadd.f32 0.0, %v835
        %v837 = vpop.f32.mrf.mxu0
        %v838 = vadd.f32 0.0, %v837
        %v839 = vpop.f32.mrf.mxu0
        %v840 = vadd.f32 0.0, %v839
        %v841 = vpop.f32.mrf.mxu0
        %v842 = vadd.f32 0.0, %v841
        %843 = vdwg.mxu0
        %844 = vmatprep.subr.bf16.mxu0 0
        %845 = vmatpush1.bf16.msra.mxu0 0
        %846 = vmatprep.subr.bf16.mxu0 0
        %847 = vmatpush1.bf16.msra.mxu0 0
        %848 = vmatprep.subr.bf16.mxu0 0
        %849 = vmatpush1.bf16.msra.mxu0 0
        %850 = vmatprep.subr.bf16.mxu0 0
        %851 = vmatpush1.bf16.msra.mxu0 %v799
        %852 = vmatprep.subr.bf16.mxu0 0
        %853 = vmatpush1.bf16.msra.mxu0 %v771
        %854 = vmatprep.subr.bf16.mxu0 0
        %855 = vmatpush1.bf16.msra.mxu0 %v768
        %856 = vmatprep.subr.bf16.mxu0 0
        %857 = vmatpush1.bf16.msra.mxu0 %v765
        %858 = vmatprep.subr.bf16.mxu0 0
        %859 = vmatpush1.bf16.msra.mxu0 %v762
        %860 = vmatprep.subr.bf16.mxu0 0
        %861 = vmatpush2.bf16.msra.mxu0 0
        %862 = vmatprep.subr.bf16.mxu0 0
        %863 = vmatpush2.bf16.msra.mxu0 0
        %864 = vmatprep.subr.bf16.mxu0 0
        %865 = vmatpush2.bf16.msra.mxu0 0
        %866 = vmatprep.subr.bf16.mxu0 0
        %867 = vmatpush2.bf16.msra.mxu0 0
        %868 = vmatprep.subr.bf16.mxu0 0
        %869 = vmatpush2.bf16.msra.mxu0 0
        %870 = vmatprep.subr.bf16.mxu0 0
        %871 = vmatpush2.bf16.msra.mxu0 0
        %872 = vmatprep.subr.bf16.mxu0 0
        %873 = vmatpush2.bf16.msra.mxu0 0
        %874 = vmatprep.subr.bf16.mxu0 0
        %875 = vmatpush2.bf16.msra.mxu0 0
        %876 = vmatprep.mubr.bf16.mxu0 0
        %877 = vmatmul.mubr.bf16.gmra.mxu0 %v789
        %v878 = vpop.f32.mrf.mxu0
        %v879 = vadd.f32 0.0, %v878
        %v880 = vpop.f32.mrf.mxu0
        %v881 = vpop.f32.mrf.mxu0
        %v882 = vadd.f32 0.0, %v881
        %v883 = vpop.f32.mrf.mxu0
        %884 = vdwg.mxu0
        %v885 = vpack.c.bf16 %v882, %v879
        %v887 = vsel %vm510, %v836, 0
        %v890 = vsel %vm510, %v840, 0
        %v893 = vsel %vm510, %v838, 0
        %v896 = vsel %vm510, %v842, 0
        %898 = vmatprep.subr.mxu0 0.0
        %899 = vmatpush1.xpose.msra.mxu0 0.0
        %900 = vmatprep.subr.mxu0 0.0
        %901 = vmatpush1.xpose.msra.mxu0 0.0
        %902 = vmatprep.subr.mxu0 0.0
        %903 = vmatpush1.xpose.msra.mxu0 0.0
        %904 = vmatprep.subr.mxu0 0.0
        %905 = vmatpush1.xpose.msra.mxu0 0.0
        %906 = vmatprep.subr.mxu0 0.0
        %907 = vmatpush1.xpose.msra.mxu0 0.0
        %908 = vmatprep.subr.mxu0 0.0
        %909 = vmatpush1.xpose.msra.mxu0 0.0
        %910 = vmatprep.subr.mxu0 0.0
        %911 = vmatpush1.xpose.msra.mxu0 0.0
        %912 = vmatprep.subr.mxu0 0.0
        %913 = vmatpush1.xpose.msra.mxu0 0.0
        %914 = vmatprep.subr.mxu0 0.0
        %915 = vmatpush1.xpose.msra.mxu0 0.0
        %916 = vmatprep.subr.mxu0 0.0
        %917 = vmatpush1.xpose.msra.mxu0 0.0
        %918 = vmatprep.subr.mxu0 0.0
        %919 = vmatpush1.xpose.msra.mxu0 0.0
        %920 = vmatprep.subr.mxu0 0.0
        %921 = vmatpush1.xpose.msra.mxu0 0.0
        %922 = vmatprep.subr.mxu0 0.0
        %923 = vmatpush1.xpose.msra.mxu0 0.0
        %924 = vmatprep.subr.mxu0 0.0
        %925 = vmatpush1.xpose.msra.mxu0 0.0
        %926 = vmatprep.subr.mxu0 0.0
        %927 = vmatpush1.xpose.msra.mxu0 %v896
        %928 = vmatprep.subr.mxu0 0.0
        %929 = vmatpush1.xpose.msra.mxu0 %v893
        %930 = vmatprep.subr.mxu0 0.0
        %931 = vmatpush2.xpose.msra.mxu0 0.0
        %932 = vmatprep.subr.mxu0 0.0
        %933 = vmatpush2.xpose.msra.mxu0 0.0
        %934 = vmatprep.subr.mxu0 0.0
        %935 = vmatpush2.xpose.msra.mxu0 0.0
        %936 = vmatprep.subr.mxu0 0.0
        %937 = vmatpush2.xpose.msra.mxu0 0.0
        %938 = vmatprep.subr.mxu0 0.0
        %939 = vmatpush2.xpose.msra.mxu0 0.0
        %940 = vmatprep.subr.mxu0 0.0
        %941 = vmatpush2.xpose.msra.mxu0 0.0
        %942 = vmatprep.subr.mxu0 0.0
        %943 = vmatpush2.xpose.msra.mxu0 0.0
        %944 = vmatprep.subr.mxu0 0.0
        %945 = vmatpush2.xpose.msra.mxu0 0.0
        %946 = vmatprep.subr.mxu0 0.0
        %947 = vmatpush2.xpose.msra.mxu0 0.0
        %948 = vmatprep.subr.mxu0 0.0
        %949 = vmatpush2.xpose.msra.mxu0 0.0
        %950 = vmatprep.subr.mxu0 0.0
        %951 = vmatpush2.xpose.msra.mxu0 0.0
        %952 = vmatprep.subr.mxu0 0.0
        %953 = vmatpush2.xpose.msra.mxu0 0.0
        %954 = vmatprep.subr.mxu0 0.0
        %955 = vmatpush2.xpose.msra.mxu0 0.0
        %956 = vmatprep.subr.mxu0 0.0
        %957 = vmatpush2.xpose.msra.mxu0 0.0
        %958 = vmatprep.subr.mxu0 0.0
        %959 = vmatpush2.xpose.msra.mxu0 0.0
        %960 = vmatprep.subr.mxu0 0.0
        %961 = vmatpush2.xpose.msra.mxu0 0.0
        %962 = vmatprep.mubr.f32.mxu0 0.0
        %963 = vmatmul.mubr.f32.gmra.mxu0 %v887
        %v964 = vpop.f32.mrf.mxu0
        %v965 = vadd.f32 0.0, %v964
        %v966 = vpop.f32.mrf.mxu0
        %967 = vmatprep.mubr.f32.mxu0 0.0
        %968 = vmatmul.mubr.f32.gmra.mxu0 %v890
        %v969 = vpop.f32.mrf.mxu0
        %v970 = vadd.f32 0.0, %v969
        %v971 = vpop.f32.mrf.mxu0
        %972 = vdwg.mxu0
        %v973 = vsel %vm510, %v965, -inf
        %974 = vmax.xlane.f32.xlu0 %v973
        %v975 = vpop.xlane.xlu0 %974
        %v976 = vsel %vm510, %v970, -inf
        %977 = vmax.xlane.f32.xlu0 %v976
        %v978 = vpop.xlane.xlu0 %977
        %v979 = vsub.f32 %v965, %v975
        %v980 = vsub.f32 %v970, %v978
        %v981 = vmul.f32 %v979, 1.442695
        %v982 = vpow.pop %v981
        %v983 = vmul.f32 %v980, 1.442695
        %v984 = vpow.pop %v983
        %v985 = vsel %vm510, %v982, 0.0
        %986 = vadd.xlane.f32.xlu0 %v985
        %v987 = vpop.xlane.xlu0 %986
        %v988 = vsel %vm510, %v984, 0.0
        %989 = vadd.xlane.f32.xlu0 %v988
        %v990 = vpop.xlane.xlu0 %989
        %v991 = vrcp.pop %v987
        %v992 = vrcp.pop %v990
        %v993 = vpack.c.bf16 %v984, %v982
        %v995 = vsel %vm510, %v993, 0
        %997 = vmatprep.subr.bf16.mxu0 0
        %998 = vmatpush1.bf16.msra.mxu0 0
        %999 = vmatprep.subr.bf16.mxu0 0
        %1000 = vmatpush1.bf16.msra.mxu0 0
        %1001 = vmatprep.subr.bf16.mxu0 0
        %1002 = vmatpush1.bf16.msra.mxu0 0
        %1003 = vmatprep.subr.bf16.mxu0 0
        %1004 = vmatpush1.bf16.msra.mxu0 0
        %1005 = vmatprep.subr.bf16.mxu0 0
        %1006 = vmatpush1.bf16.msra.mxu0 0
        %1007 = vmatprep.subr.bf16.mxu0 0
        %1008 = vmatpush1.bf16.msra.mxu0 0
        %1009 = vmatprep.subr.bf16.mxu0 0
        %1010 = vmatpush1.bf16.msra.mxu0 0
        %1011 = vmatprep.subr.bf16.mxu0 0
        %1012 = vmatpush1.bf16.msra.mxu0 %v885
        %1013 = vmatprep.subr.bf16.mxu0 0
        %1014 = vmatpush2.bf16.msra.mxu0 0
        %1015 = vmatprep.subr.bf16.mxu0 0
        %1016 = vmatpush2.bf16.msra.mxu0 0
        %1017 = vmatprep.subr.bf16.mxu0 0
        %1018 = vmatpush2.bf16.msra.mxu0 0
        %1019 = vmatprep.subr.bf16.mxu0 0
        %1020 = vmatpush2.bf16.msra.mxu0 0
        %1021 = vmatprep.subr.bf16.mxu0 0
        %1022 = vmatpush2.bf16.msra.mxu0 0
        %1023 = vmatprep.subr.bf16.mxu0 0
        %1024 = vmatpush2.bf16.msra.mxu0 0
        %1025 = vmatprep.subr.bf16.mxu0 0
        %1026 = vmatpush2.bf16.msra.mxu0 0
        %1027 = vmatprep.subr.bf16.mxu0 0
        %1028 = vmatpush2.bf16.msra.mxu0 0
        %1029 = vmatprep.mubr.bf16.mxu0 0
        %1030 = vmatmul.mubr.bf16.gmra.mxu0 %v995
        %v1031 = vpop.f32.mrf.mxu0
        %v1032 = vadd.f32 0.0, %v1031
        %v1033 = vpop.f32.mrf.mxu0
        %v1034 = vpop.f32.mrf.mxu0
        %v1035 = vadd.f32 0.0, %v1034
        %v1036 = vpop.f32.mrf.mxu0
        %1037 = vdwg.mxu0
        %v1038 = vmul.f32 %v1032, %v991
        %v1039 = vmul.f32 %v1035, %v992
        %1040 = vrot.lane.b32.xlu0 %v836, 112
        %v1041 = vpop.permute.xlu0 %1040
        %1042 = vrot.lane.b32.xlu0 %v840, 112
        %v1043 = vpop.permute.xlu0 %1042
        %1044 = vrot.lane.b32.xlu0 %v838, 112
        %v1045 = vpop.permute.xlu0 %1044
        %1046 = vrot.lane.b32.xlu0 %v842, 112
        %v1047 = vpop.permute.xlu0 %1046
        %v1048 = vsel %vm510, %v1041, 0
        %v1050 = vsel %vm510, %v1043, 0
        %v1052 = vsel %vm510, %v1045, 0
        %v1054 = vsel %vm510, %v1047, 0
        %1056 = vmatprep.subr.mxu0 0.0
        %1057 = vmatpush1.xpose.msra.mxu0 0.0
        %1058 = vmatprep.subr.mxu0 0.0
        %1059 = vmatpush1.xpose.msra.mxu0 0.0
        %1060 = vmatprep.subr.mxu0 0.0
        %1061 = vmatpush1.xpose.msra.mxu0 0.0
        %1062 = vmatprep.subr.mxu0 0.0
        %1063 = vmatpush1.xpose.msra.mxu0 0.0
        %1064 = vmatprep.subr.mxu0 0.0
        %1065 = vmatpush1.xpose.msra.mxu0 0.0
        %1066 = vmatprep.subr.mxu0 0.0
        %1067 = vmatpush1.xpose.msra.mxu0 0.0
        %1068 = vmatprep.subr.mxu0 0.0
        %1069 = vmatpush1.xpose.msra.mxu0 0.0
        %1070 = vmatprep.subr.mxu0 0.0
        %1071 = vmatpush1.xpose.msra.mxu0 0.0
        %1072 = vmatprep.subr.mxu0 0.0
        %1073 = vmatpush1.xpose.msra.mxu0 0.0
        %1074 = vmatprep.subr.mxu0 0.0
        %1075 = vmatpush1.xpose.msra.mxu0 0.0
        %1076 = vmatprep.subr.mxu0 0.0
        %1077 = vmatpush1.xpose.msra.mxu0 0.0
        %1078 = vmatprep.subr.mxu0 0.0
        %1079 = vmatpush1.xpose.msra.mxu0 0.0
        %1080 = vmatprep.subr.mxu0 0.0
        %1081 = vmatpush1.xpose.msra.mxu0 0.0
        %1082 = vmatprep.subr.mxu0 0.0
        %1083 = vmatpush1.xpose.msra.mxu0 0.0
        %1084 = vmatprep.subr.mxu0 0.0
        %1085 = vmatpush1.xpose.msra.mxu0 %v1054
        %1086 = vmatprep.subr.mxu0 0.0
        %1087 = vmatpush1.xpose.msra.mxu0 %v1052
        %1088 = vmatprep.subr.mxu0 0.0
        %1089 = vmatpush2.xpose.msra.mxu0 0.0
        %1090 = vmatprep.subr.mxu0 0.0
        %1091 = vmatpush2.xpose.msra.mxu0 0.0
        %1092 = vmatprep.subr.mxu0 0.0
        %1093 = vmatpush2.xpose.msra.mxu0 0.0
        %1094 = vmatprep.subr.mxu0 0.0
        %1095 = vmatpush2.xpose.msra.mxu0 0.0
        %1096 = vmatprep.subr.mxu0 0.0
        %1097 = vmatpush2.xpose.msra.mxu0 0.0
        %1098 = vmatprep.subr.mxu0 0.0
        %1099 = vmatpush2.xpose.msra.mxu0 0.0
        %1100 = vmatprep.subr.mxu0 0.0
        %1101 = vmatpush2.xpose.msra.mxu0 0.0
        %1102 = vmatprep.subr.mxu0 0.0
        %1103 = vmatpush2.xpose.msra.mxu0 0.0
        %1104 = vmatprep.subr.mxu0 0.0
        %1105 = vmatpush2.xpose.msra.mxu0 0.0
        %1106 = vmatprep.subr.mxu0 0.0
        %1107 = vmatpush2.xpose.msra.mxu0 0.0
        %1108 = vmatprep.subr.mxu0 0.0
        %1109 = vmatpush2.xpose.msra.mxu0 0.0
        %1110 = vmatprep.subr.mxu0 0.0
        %1111 = vmatpush2.xpose.msra.mxu0 0.0
        %1112 = vmatprep.subr.mxu0 0.0
        %1113 = vmatpush2.xpose.msra.mxu0 0.0
        %1114 = vmatprep.subr.mxu0 0.0
        %1115 = vmatpush2.xpose.msra.mxu0 0.0
        %1116 = vmatprep.subr.mxu0 0.0
        %1117 = vmatpush2.xpose.msra.mxu0 0.0
        %1118 = vmatprep.subr.mxu0 0.0
        %1119 = vmatpush2.xpose.msra.mxu0 0.0
        %1120 = vmatprep.mubr.f32.mxu0 0.0
        %1121 = vmatmul.mubr.f32.gmra.mxu0 %v1048
        %v1122 = vpop.f32.mrf.mxu0
        %v1123 = vadd.f32 0.0, %v1122
        %v1124 = vpop.f32.mrf.mxu0
        %1125 = vmatprep.mubr.f32.mxu0 0.0
        %1126 = vmatmul.mubr.f32.gmra.mxu0 %v1050
        %v1127 = vpop.f32.mrf.mxu0
        %v1128 = vadd.f32 0.0, %v1127
        %v1129 = vpop.f32.mrf.mxu0
        %1130 = vdwg.mxu0
        %v1131 = vsel %vm510, %v1123, -inf
        %1132 = vmax.xlane.f32.xlu0 %v1131
        %v1133 = vpop.xlane.xlu0 %1132
        %v1134 = vsel %vm510, %v1128, -inf
        %1135 = vmax.xlane.f32.xlu0 %v1134
        %v1136 = vpop.xlane.xlu0 %1135
        %v1137 = vsub.f32 %v1123, %v1133
        %v1138 = vsub.f32 %v1128, %v1136
        %v1139 = vmul.f32 %v1137, 1.442695
        %v1140 = vpow.pop %v1139
        %v1141 = vmul.f32 %v1138, 1.442695
        %v1142 = vpow.pop %v1141
        %v1143 = vsel %vm510, %v1140, 0.0
        %1144 = vadd.xlane.f32.xlu0 %v1143
        %v1145 = vpop.xlane.xlu0 %1144
        %v1146 = vsel %vm510, %v1142, 0.0
        %1147 = vadd.xlane.f32.xlu0 %v1146
        %v1148 = vpop.xlane.xlu0 %1147
        %v1149 = vrcp.pop %v1145
        %v1150 = vrcp.pop %v1148
        %v1151 = vpack.c.bf16 %v1142, %v1140
        %1153 = vrot.lane.b32.xlu0 %v885, 112
        %v1154 = vpop.permute.xlu0 %1153
        %v1157 = vsel %vm510, %v1151, 0
        %1159 = vmatprep.subr.bf16.mxu0 0
        %1160 = vmatpush1.bf16.msra.mxu0 0
        %1161 = vmatprep.subr.bf16.mxu0 0
        %1162 = vmatpush1.bf16.msra.mxu0 0
        %1163 = vmatprep.subr.bf16.mxu0 0
        %1164 = vmatpush1.bf16.msra.mxu0 0
        %1165 = vmatprep.subr.bf16.mxu0 0
        %1166 = vmatpush1.bf16.msra.mxu0 0
        %1167 = vmatprep.subr.bf16.mxu0 0
        %1168 = vmatpush1.bf16.msra.mxu0 0
        %1169 = vmatprep.subr.bf16.mxu0 0
        %1170 = vmatpush1.bf16.msra.mxu0 0
        %1171 = vmatprep.subr.bf16.mxu0 0
        %1172 = vmatpush1.bf16.msra.mxu0 0
        %1173 = vmatprep.subr.bf16.mxu0 0
        %1174 = vmatpush1.bf16.msra.mxu0 %v1154
        %1175 = vmatprep.subr.bf16.mxu0 0
        %1176 = vmatpush2.bf16.msra.mxu0 0
        %1177 = vmatprep.subr.bf16.mxu0 0
        %1178 = vmatpush2.bf16.msra.mxu0 0
        %1179 = vmatprep.subr.bf16.mxu0 0
        %1180 = vmatpush2.bf16.msra.mxu0 0
        %1181 = vmatprep.subr.bf16.mxu0 0
        %1182 = vmatpush2.bf16.msra.mxu0 0
        %1183 = vmatprep.subr.bf16.mxu0 0
        %1184 = vmatpush2.bf16.msra.mxu0 0
        %1185 = vmatprep.subr.bf16.mxu0 0
        %1186 = vmatpush2.bf16.msra.mxu0 0
        %1187 = vmatprep.subr.bf16.mxu0 0
        %1188 = vmatpush2.bf16.msra.mxu0 0
        %1189 = vmatprep.subr.bf16.mxu0 0
        %1190 = vmatpush2.bf16.msra.mxu0 0
        %1191 = vmatprep.mubr.bf16.mxu0 0
        %1192 = vmatmul.mubr.bf16.gmra.mxu0 %v1157
        %v1193 = vpop.f32.mrf.mxu0
        %v1194 = vadd.f32 0.0, %v1193
        %v1195 = vpop.f32.mrf.mxu0
        %v1196 = vpop.f32.mrf.mxu0
        %v1197 = vadd.f32 0.0, %v1196
        %v1198 = vpop.f32.mrf.mxu0
        %1199 = vdwg.mxu0
        %v1200 = vmul.f32 %v1194, %v1149
        %v1201 = vmul.f32 %v1197, %v1150
        %1202 = vrot.lane.b32.xlu0 %v836, 96
        %v1203 = vpop.permute.xlu0 %1202
        %1204 = vrot.lane.b32.xlu0 %v840, 96
        %v1205 = vpop.permute.xlu0 %1204
        %1206 = vrot.lane.b32.xlu0 %v838, 96
        %v1207 = vpop.permute.xlu0 %1206
        %1208 = vrot.lane.b32.xlu0 %v842, 96
        %v1209 = vpop.permute.xlu0 %1208
        %v1210 = vsel %vm510, %v1203, 0
        %v1212 = vsel %vm510, %v1205, 0
        %v1214 = vsel %vm510, %v1207, 0
        %v1216 = vsel %vm510, %v1209, 0
        %1218 = vmatprep.subr.mxu0 0.0
        %1219 = vmatpush1.xpose.msra.mxu0 0.0
        %1220 = vmatprep.subr.mxu0 0.0
        %1221 = vmatpush1.xpose.msra.mxu0 0.0
        %1222 = vmatprep.subr.mxu0 0.0
        %1223 = vmatpush1.xpose.msra.mxu0 0.0
        %1224 = vmatprep.subr.mxu0 0.0
        %1225 = vmatpush1.xpose.msra.mxu0 0.0
        %1226 = vmatprep.subr.mxu0 0.0
        %1227 = vmatpush1.xpose.msra.mxu0 0.0
        %1228 = vmatprep.subr.mxu0 0.0
        %1229 = vmatpush1.xpose.msra.mxu0 0.0
        %1230 = vmatprep.subr.mxu0 0.0
        %1231 = vmatpush1.xpose.msra.mxu0 0.0
        %1232 = vmatprep.subr.mxu0 0.0
        %1233 = vmatpush1.xpose.msra.mxu0 0.0
        %1234 = vmatprep.subr.mxu0 0.0
        %1235 = vmatpush1.xpose.msra.mxu0 0.0
        %1236 = vmatprep.subr.mxu0 0.0
        %1237 = vmatpush1.xpose.msra.mxu0 0.0
        %1238 = vmatprep.subr.mxu0 0.0
        %1239 = vmatpush1.xpose.msra.mxu0 0.0
        %1240 = vmatprep.subr.mxu0 0.0
        %1241 = vmatpush1.xpose.msra.mxu0 0.0
        %1242 = vmatprep.subr.mxu0 0.0
        %1243 = vmatpush1.xpose.msra.mxu0 0.0
        %1244 = vmatprep.subr.mxu0 0.0
        %1245 = vmatpush1.xpose.msra.mxu0 0.0
        %1246 = vmatprep.subr.mxu0 0.0
        %1247 = vmatpush1.xpose.msra.mxu0 %v1216
        %1248 = vmatprep.subr.mxu0 0.0
        %1249 = vmatpush1.xpose.msra.mxu0 %v1214
        %1250 = vmatprep.subr.mxu0 0.0
        %1251 = vmatpush2.xpose.msra.mxu0 0.0
        %1252 = vmatprep.subr.mxu0 0.0
        %1253 = vmatpush2.xpose.msra.mxu0 0.0
        %1254 = vmatprep.subr.mxu0 0.0
        %1255 = vmatpush2.xpose.msra.mxu0 0.0
        %1256 = vmatprep.subr.mxu0 0.0
        %1257 = vmatpush2.xpose.msra.mxu0 0.0
        %1258 = vmatprep.subr.mxu0 0.0
        %1259 = vmatpush2.xpose.msra.mxu0 0.0
        %1260 = vmatprep.subr.mxu0 0.0
        %1261 = vmatpush2.xpose.msra.mxu0 0.0
        %1262 = vmatprep.subr.mxu0 0.0
        %1263 = vmatpush2.xpose.msra.mxu0 0.0
        %1264 = vmatprep.subr.mxu0 0.0
        %1265 = vmatpush2.xpose.msra.mxu0 0.0
        %1266 = vmatprep.subr.mxu0 0.0
        %1267 = vmatpush2.xpose.msra.mxu0 0.0
        %1268 = vmatprep.subr.mxu0 0.0
        %1269 = vmatpush2.xpose.msra.mxu0 0.0
        %1270 = vmatprep.subr.mxu0 0.0
        %1271 = vmatpush2.xpose.msra.mxu0 0.0
        %1272 = vmatprep.subr.mxu0 0.0
        %1273 = vmatpush2.xpose.msra.mxu0 0.0
        %1274 = vmatprep.subr.mxu0 0.0
        %1275 = vmatpush2.xpose.msra.mxu0 0.0
        %1276 = vmatprep.subr.mxu0 0.0
        %1277 = vmatpush2.xpose.msra.mxu0 0.0
        %1278 = vmatprep.subr.mxu0 0.0
        %1279 = vmatpush2.xpose.msra.mxu0 0.0
        %1280 = vmatprep.subr.mxu0 0.0
        %1281 = vmatpush2.xpose.msra.mxu0 0.0
        %1282 = vmatprep.mubr.f32.mxu0 0.0
        %1283 = vmatmul.mubr.f32.gmra.mxu0 %v1210
        %v1284 = vpop.f32.mrf.mxu0
        %v1285 = vadd.f32 0.0, %v1284
        %v1286 = vpop.f32.mrf.mxu0
        %1287 = vmatprep.mubr.f32.mxu0 0.0
        %1288 = vmatmul.mubr.f32.gmra.mxu0 %v1212
        %v1289 = vpop.f32.mrf.mxu0
        %v1290 = vadd.f32 0.0, %v1289
        %v1291 = vpop.f32.mrf.mxu0
        %1292 = vdwg.mxu0
        %v1293 = vsel %vm510, %v1285, -inf
        %1294 = vmax.xlane.f32.xlu0 %v1293
        %v1295 = vpop.xlane.xlu0 %1294
        %v1296 = vsel %vm510, %v1290, -inf
        %1297 = vmax.xlane.f32.xlu0 %v1296
        %v1298 = vpop.xlane.xlu0 %1297
        %v1299 = vsub.f32 %v1285, %v1295
        %v1300 = vsub.f32 %v1290, %v1298
        %v1301 = vmul.f32 %v1299, 1.442695
        %v1302 = vpow.pop %v1301
        %v1303 = vmul.f32 %v1300, 1.442695
        %v1304 = vpow.pop %v1303
        %v1305 = vsel %vm510, %v1302, 0.0
        %1306 = vadd.xlane.f32.xlu0 %v1305
        %v1307 = vpop.xlane.xlu0 %1306
        %v1308 = vsel %vm510, %v1304, 0.0
        %1309 = vadd.xlane.f32.xlu0 %v1308
        %v1310 = vpop.xlane.xlu0 %1309
        %v1311 = vrcp.pop %v1307
        %v1312 = vrcp.pop %v1310
        %v1313 = vpack.c.bf16 %v1304, %v1302
        %1314 = vrot.lane.b32.xlu0 %v885, 96
        %v1315 = vpop.permute.xlu0 %1314
        %v1318 = vsel %vm510, %v1313, 0
        %1320 = vmatprep.subr.bf16.mxu0 0
        %1321 = vmatpush1.bf16.msra.mxu0 0
        %1322 = vmatprep.subr.bf16.mxu0 0
        %1323 = vmatpush1.bf16.msra.mxu0 0
        %1324 = vmatprep.subr.bf16.mxu0 0
        %1325 = vmatpush1.bf16.msra.mxu0 0
        %1326 = vmatprep.subr.bf16.mxu0 0
        %1327 = vmatpush1.bf16.msra.mxu0 0
        %1328 = vmatprep.subr.bf16.mxu0 0
        %1329 = vmatpush1.bf16.msra.mxu0 0
        %1330 = vmatprep.subr.bf16.mxu0 0
        %1331 = vmatpush1.bf16.msra.mxu0 0
        %1332 = vmatprep.subr.bf16.mxu0 0
        %1333 = vmatpush1.bf16.msra.mxu0 0
        %1334 = vmatprep.subr.bf16.mxu0 0
        %1335 = vmatpush1.bf16.msra.mxu0 %v1315
        %1336 = vmatprep.subr.bf16.mxu0 0
        %1337 = vmatpush2.bf16.msra.mxu0 0
        %1338 = vmatprep.subr.bf16.mxu0 0
        %1339 = vmatpush2.bf16.msra.mxu0 0
        %1340 = vmatprep.subr.bf16.mxu0 0
        %1341 = vmatpush2.bf16.msra.mxu0 0
        %1342 = vmatprep.subr.bf16.mxu0 0
        %1343 = vmatpush2.bf16.msra.mxu0 0
        %1344 = vmatprep.subr.bf16.mxu0 0
        %1345 = vmatpush2.bf16.msra.mxu0 0
        %1346 = vmatprep.subr.bf16.mxu0 0
        %1347 = vmatpush2.bf16.msra.mxu0 0
        %1348 = vmatprep.subr.bf16.mxu0 0
        %1349 = vmatpush2.bf16.msra.mxu0 0
        %1350 = vmatprep.subr.bf16.mxu0 0
        %1351 = vmatpush2.bf16.msra.mxu0 0
        %1352 = vmatprep.mubr.bf16.mxu0 0
        %1353 = vmatmul.mubr.bf16.gmra.mxu0 %v1318
        %v1354 = vpop.f32.mrf.mxu0
        %v1355 = vadd.f32 0.0, %v1354
        %v1356 = vpop.f32.mrf.mxu0
        %v1357 = vpop.f32.mrf.mxu0
        %v1358 = vadd.f32 0.0, %v1357
        %v1359 = vpop.f32.mrf.mxu0
        %1360 = vdwg.mxu0
        %v1361 = vmul.f32 %v1355, %v1311
        %v1362 = vmul.f32 %v1358, %v1312
        %1363 = vrot.lane.b32.xlu0 %v836, 80
        %v1364 = vpop.permute.xlu0 %1363
        %1365 = vrot.lane.b32.xlu0 %v840, 80
        %v1366 = vpop.permute.xlu0 %1365
        %1367 = vrot.lane.b32.xlu0 %v838, 80
        %v1368 = vpop.permute.xlu0 %1367
        %1369 = vrot.lane.b32.xlu0 %v842, 80
        %v1370 = vpop.permute.xlu0 %1369
        %v1371 = vsel %vm510, %v1364, 0
        %v1373 = vsel %vm510, %v1366, 0
        %v1375 = vsel %vm510, %v1368, 0
        %v1377 = vsel %vm510, %v1370, 0
        %1379 = vmatprep.subr.mxu0 0.0
        %1380 = vmatpush1.xpose.msra.mxu0 0.0
        %1381 = vmatprep.subr.mxu0 0.0
        %1382 = vmatpush1.xpose.msra.mxu0 0.0
        %1383 = vmatprep.subr.mxu0 0.0
        %1384 = vmatpush1.xpose.msra.mxu0 0.0
        %1385 = vmatprep.subr.mxu0 0.0
        %1386 = vmatpush1.xpose.msra.mxu0 0.0
        %1387 = vmatprep.subr.mxu0 0.0
        %1388 = vmatpush1.xpose.msra.mxu0 0.0
        %1389 = vmatprep.subr.mxu0 0.0
        %1390 = vmatpush1.xpose.msra.mxu0 0.0
        %1391 = vmatprep.subr.mxu0 0.0
        %1392 = vmatpush1.xpose.msra.mxu0 0.0
        %1393 = vmatprep.subr.mxu0 0.0
        %1394 = vmatpush1.xpose.msra.mxu0 0.0
        %1395 = vmatprep.subr.mxu0 0.0
        %1396 = vmatpush1.xpose.msra.mxu0 0.0
        %1397 = vmatprep.subr.mxu0 0.0
        %1398 = vmatpush1.xpose.msra.mxu0 0.0
        %1399 = vmatprep.subr.mxu0 0.0
        %1400 = vmatpush1.xpose.msra.mxu0 0.0
        %1401 = vmatprep.subr.mxu0 0.0
        %1402 = vmatpush1.xpose.msra.mxu0 0.0
        %1403 = vmatprep.subr.mxu0 0.0
        %1404 = vmatpush1.xpose.msra.mxu0 0.0
        %1405 = vmatprep.subr.mxu0 0.0
        %1406 = vmatpush1.xpose.msra.mxu0 0.0
        %1407 = vmatprep.subr.mxu0 0.0
        %1408 = vmatpush1.xpose.msra.mxu0 %v1377
        %1409 = vmatprep.subr.mxu0 0.0
        %1410 = vmatpush1.xpose.msra.mxu0 %v1375
        %1411 = vmatprep.subr.mxu0 0.0
        %1412 = vmatpush2.xpose.msra.mxu0 0.0
        %1413 = vmatprep.subr.mxu0 0.0
        %1414 = vmatpush2.xpose.msra.mxu0 0.0
        %1415 = vmatprep.subr.mxu0 0.0
        %1416 = vmatpush2.xpose.msra.mxu0 0.0
        %1417 = vmatprep.subr.mxu0 0.0
        %1418 = vmatpush2.xpose.msra.mxu0 0.0
        %1419 = vmatprep.subr.mxu0 0.0
        %1420 = vmatpush2.xpose.msra.mxu0 0.0
        %1421 = vmatprep.subr.mxu0 0.0
        %1422 = vmatpush2.xpose.msra.mxu0 0.0
        %1423 = vmatprep.subr.mxu0 0.0
        %1424 = vmatpush2.xpose.msra.mxu0 0.0
        %1425 = vmatprep.subr.mxu0 0.0
        %1426 = vmatpush2.xpose.msra.mxu0 0.0
        %1427 = vmatprep.subr.mxu0 0.0
        %1428 = vmatpush2.xpose.msra.mxu0 0.0
        %1429 = vmatprep.subr.mxu0 0.0
        %1430 = vmatpush2.xpose.msra.mxu0 0.0
        %1431 = vmatprep.subr.mxu0 0.0
        %1432 = vmatpush2.xpose.msra.mxu0 0.0
        %1433 = vmatprep.subr.mxu0 0.0
        %1434 = vmatpush2.xpose.msra.mxu0 0.0
        %1435 = vmatprep.subr.mxu0 0.0
        %1436 = vmatpush2.xpose.msra.mxu0 0.0
        %1437 = vmatprep.subr.mxu0 0.0
        %1438 = vmatpush2.xpose.msra.mxu0 0.0
        %1439 = vmatprep.subr.mxu0 0.0
        %1440 = vmatpush2.xpose.msra.mxu0 0.0
        %1441 = vmatprep.subr.mxu0 0.0
        %1442 = vmatpush2.xpose.msra.mxu0 0.0
        %1443 = vmatprep.mubr.f32.mxu0 0.0
        %1444 = vmatmul.mubr.f32.gmra.mxu0 %v1371
        %v1445 = vpop.f32.mrf.mxu0
        %v1446 = vadd.f32 0.0, %v1445
        %v1447 = vpop.f32.mrf.mxu0
        %1448 = vmatprep.mubr.f32.mxu0 0.0
        %1449 = vmatmul.mubr.f32.gmra.mxu0 %v1373
        %v1450 = vpop.f32.mrf.mxu0
        %v1451 = vadd.f32 0.0, %v1450
        %v1452 = vpop.f32.mrf.mxu0
        %1453 = vdwg.mxu0
        %v1454 = vsel %vm510, %v1446, -inf
        %1455 = vmax.xlane.f32.xlu0 %v1454
        %v1456 = vpop.xlane.xlu0 %1455
        %v1457 = vsel %vm510, %v1451, -inf
        %1458 = vmax.xlane.f32.xlu0 %v1457
        %v1459 = vpop.xlane.xlu0 %1458
        %v1460 = vsub.f32 %v1446, %v1456
        %v1461 = vsub.f32 %v1451, %v1459
        %v1462 = vmul.f32 %v1460, 1.442695
        %v1463 = vpow.pop %v1462
        %v1464 = vmul.f32 %v1461, 1.442695
        %v1465 = vpow.pop %v1464
        %v1466 = vsel %vm510, %v1463, 0.0
        %1467 = vadd.xlane.f32.xlu0 %v1466
        %v1468 = vpop.xlane.xlu0 %1467
        %v1469 = vsel %vm510, %v1465, 0.0
        %1470 = vadd.xlane.f32.xlu0 %v1469
        %v1471 = vpop.xlane.xlu0 %1470
        %v1472 = vrcp.pop %v1468
        %v1473 = vrcp.pop %v1471
        %v1474 = vpack.c.bf16 %v1465, %v1463
        %1475 = vrot.lane.b32.xlu0 %v885, 80
        %v1476 = vpop.permute.xlu0 %1475
        %v1479 = vsel %vm510, %v1474, 0
        %1481 = vmatprep.subr.bf16.mxu0 0
        %1482 = vmatpush1.bf16.msra.mxu0 0
        %1483 = vmatprep.subr.bf16.mxu0 0
        %1484 = vmatpush1.bf16.msra.mxu0 0
        %1485 = vmatprep.subr.bf16.mxu0 0
        %1486 = vmatpush1.bf16.msra.mxu0 0
        %1487 = vmatprep.subr.bf16.mxu0 0
        %1488 = vmatpush1.bf16.msra.mxu0 0
        %1489 = vmatprep.subr.bf16.mxu0 0
        %1490 = vmatpush1.bf16.msra.mxu0 0
        %1491 = vmatprep.subr.bf16.mxu0 0
        %1492 = vmatpush1.bf16.msra.mxu0 0
        %1493 = vmatprep.subr.bf16.mxu0 0
        %1494 = vmatpush1.bf16.msra.mxu0 0
        %1495 = vmatprep.subr.bf16.mxu0 0
        %1496 = vmatpush1.bf16.msra.mxu0 %v1476
        %1497 = vmatprep.subr.bf16.mxu0 0
        %1498 = vmatpush2.bf16.msra.mxu0 0
        %1499 = vmatprep.subr.bf16.mxu0 0
        %1500 = vmatpush2.bf16.msra.mxu0 0
        %1501 = vmatprep.subr.bf16.mxu0 0
        %1502 = vmatpush2.bf16.msra.mxu0 0
        %1503 = vmatprep.subr.bf16.mxu0 0
        %1504 = vmatpush2.bf16.msra.mxu0 0
        %1505 = vmatprep.subr.bf16.mxu0 0
        %1506 = vmatpush2.bf16.msra.mxu0 0
        %1507 = vmatprep.subr.bf16.mxu0 0
        %1508 = vmatpush2.bf16.msra.mxu0 0
        %1509 = vmatprep.subr.bf16.mxu0 0
        %1510 = vmatpush2.bf16.msra.mxu0 0
        %1511 = vmatprep.subr.bf16.mxu0 0
        %1512 = vmatpush2.bf16.msra.mxu0 0
        %1513 = vmatprep.mubr.bf16.mxu0 0
        %1514 = vmatmul.mubr.bf16.gmra.mxu0 %v1479
        %v1515 = vpop.f32.mrf.mxu0
        %v1516 = vadd.f32 0.0, %v1515
        %v1517 = vpop.f32.mrf.mxu0
        %v1518 = vpop.f32.mrf.mxu0
        %v1519 = vadd.f32 0.0, %v1518
        %v1520 = vpop.f32.mrf.mxu0
        %1521 = vdwg.mxu0
        %v1522 = vmul.f32 %v1516, %v1472
        %v1523 = vmul.f32 %v1519, %v1473
        %1524 = vrot.lane.b32.xlu0 %v836, 64
        %v1525 = vpop.permute.xlu0 %1524
        %1526 = vrot.lane.b32.xlu0 %v840, 64
        %v1527 = vpop.permute.xlu0 %1526
        %1528 = vrot.lane.b32.xlu0 %v838, 64
        %v1529 = vpop.permute.xlu0 %1528
        %1530 = vrot.lane.b32.xlu0 %v842, 64
        %v1531 = vpop.permute.xlu0 %1530
        %v1532 = vsel %vm510, %v1525, 0
        %v1534 = vsel %vm510, %v1527, 0
        %v1536 = vsel %vm510, %v1529, 0
        %v1538 = vsel %vm510, %v1531, 0
        %1540 = vmatprep.subr.mxu0 0.0
        %1541 = vmatpush1.xpose.msra.mxu0 0.0
        %1542 = vmatprep.subr.mxu0 0.0
        %1543 = vmatpush1.xpose.msra.mxu0 0.0
        %1544 = vmatprep.subr.mxu0 0.0
        %1545 = vmatpush1.xpose.msra.mxu0 0.0
        %1546 = vmatprep.subr.mxu0 0.0
        %1547 = vmatpush1.xpose.msra.mxu0 0.0
        %1548 = vmatprep.subr.mxu0 0.0
        %1549 = vmatpush1.xpose.msra.mxu0 0.0
        %1550 = vmatprep.subr.mxu0 0.0
        %1551 = vmatpush1.xpose.msra.mxu0 0.0
        %1552 = vmatprep.subr.mxu0 0.0
        %1553 = vmatpush1.xpose.msra.mxu0 0.0
        %1554 = vmatprep.subr.mxu0 0.0
        %1555 = vmatpush1.xpose.msra.mxu0 0.0
        %1556 = vmatprep.subr.mxu0 0.0
        %1557 = vmatpush1.xpose.msra.mxu0 0.0
        %1558 = vmatprep.subr.mxu0 0.0
        %1559 = vmatpush1.xpose.msra.mxu0 0.0
        %1560 = vmatprep.subr.mxu0 0.0
        %1561 = vmatpush1.xpose.msra.mxu0 0.0
        %1562 = vmatprep.subr.mxu0 0.0
        %1563 = vmatpush1.xpose.msra.mxu0 0.0
        %1564 = vmatprep.subr.mxu0 0.0
        %1565 = vmatpush1.xpose.msra.mxu0 0.0
        %1566 = vmatprep.subr.mxu0 0.0
        %1567 = vmatpush1.xpose.msra.mxu0 0.0
        %1568 = vmatprep.subr.mxu0 0.0
        %1569 = vmatpush1.xpose.msra.mxu0 %v1538
        %1570 = vmatprep.subr.mxu0 0.0
        %1571 = vmatpush1.xpose.msra.mxu0 %v1536
        %1572 = vmatprep.subr.mxu0 0.0
        %1573 = vmatpush2.xpose.msra.mxu0 0.0
        %1574 = vmatprep.subr.mxu0 0.0
        %1575 = vmatpush2.xpose.msra.mxu0 0.0
        %1576 = vmatprep.subr.mxu0 0.0
        %1577 = vmatpush2.xpose.msra.mxu0 0.0
        %1578 = vmatprep.subr.mxu0 0.0
        %1579 = vmatpush2.xpose.msra.mxu0 0.0
        %1580 = vmatprep.subr.mxu0 0.0
        %1581 = vmatpush2.xpose.msra.mxu0 0.0
        %1582 = vmatprep.subr.mxu0 0.0
        %1583 = vmatpush2.xpose.msra.mxu0 0.0
        %1584 = vmatprep.subr.mxu0 0.0
        %1585 = vmatpush2.xpose.msra.mxu0 0.0
        %1586 = vmatprep.subr.mxu0 0.0
        %1587 = vmatpush2.xpose.msra.mxu0 0.0
        %1588 = vmatprep.subr.mxu0 0.0
        %1589 = vmatpush2.xpose.msra.mxu0 0.0
        %1590 = vmatprep.subr.mxu0 0.0
        %1591 = vmatpush2.xpose.msra.mxu0 0.0
        %1592 = vmatprep.subr.mxu0 0.0
        %1593 = vmatpush2.xpose.msra.mxu0 0.0
        %1594 = vmatprep.subr.mxu0 0.0
        %1595 = vmatpush2.xpose.msra.mxu0 0.0
        %1596 = vmatprep.subr.mxu0 0.0
        %1597 = vmatpush2.xpose.msra.mxu0 0.0
        %1598 = vmatprep.subr.mxu0 0.0
        %1599 = vmatpush2.xpose.msra.mxu0 0.0
        %1600 = vmatprep.subr.mxu0 0.0
        %1601 = vmatpush2.xpose.msra.mxu0 0.0
        %1602 = vmatprep.subr.mxu0 0.0
        %1603 = vmatpush2.xpose.msra.mxu0 0.0
        %1604 = vmatprep.mubr.f32.mxu0 0.0
        %1605 = vmatmul.mubr.f32.gmra.mxu0 %v1532
        %v1606 = vpop.f32.mrf.mxu0
        %v1607 = vadd.f32 0.0, %v1606
        %v1608 = vpop.f32.mrf.mxu0
        %1609 = vmatprep.mubr.f32.mxu0 0.0
        %1610 = vmatmul.mubr.f32.gmra.mxu0 %v1534
        %v1611 = vpop.f32.mrf.mxu0
        %v1612 = vadd.f32 0.0, %v1611
        %v1613 = vpop.f32.mrf.mxu0
        %1614 = vdwg.mxu0
        %v1615 = vsel %vm510, %v1607, -inf
        %1616 = vmax.xlane.f32.xlu0 %v1615
        %v1617 = vpop.xlane.xlu0 %1616
        %v1618 = vsel %vm510, %v1612, -inf
        %1619 = vmax.xlane.f32.xlu0 %v1618
        %v1620 = vpop.xlane.xlu0 %1619
        %v1621 = vsub.f32 %v1607, %v1617
        %v1622 = vsub.f32 %v1612, %v1620
        %v1623 = vmul.f32 %v1621, 1.442695
        %v1624 = vpow.pop %v1623
        %v1625 = vmul.f32 %v1622, 1.442695
        %v1626 = vpow.pop %v1625
        %v1627 = vsel %vm510, %v1624, 0.0
        %1628 = vadd.xlane.f32.xlu0 %v1627
        %v1629 = vpop.xlane.xlu0 %1628
        %v1630 = vsel %vm510, %v1626, 0.0
        %1631 = vadd.xlane.f32.xlu0 %v1630
        %v1632 = vpop.xlane.xlu0 %1631
        %v1633 = vrcp.pop %v1629
        %v1634 = vrcp.pop %v1632
        %v1635 = vpack.c.bf16 %v1626, %v1624
        %1636 = vrot.lane.b32.xlu0 %v885, 64
        %v1637 = vpop.permute.xlu0 %1636
        %v1640 = vsel %vm510, %v1635, 0
        %1642 = vmatprep.subr.bf16.mxu0 0
        %1643 = vmatpush1.bf16.msra.mxu0 0
        %1644 = vmatprep.subr.bf16.mxu0 0
        %1645 = vmatpush1.bf16.msra.mxu0 0
        %1646 = vmatprep.subr.bf16.mxu0 0
        %1647 = vmatpush1.bf16.msra.mxu0 0
        %1648 = vmatprep.subr.bf16.mxu0 0
        %1649 = vmatpush1.bf16.msra.mxu0 0
        %1650 = vmatprep.subr.bf16.mxu0 0
        %1651 = vmatpush1.bf16.msra.mxu0 0
        %1652 = vmatprep.subr.bf16.mxu0 0
        %1653 = vmatpush1.bf16.msra.mxu0 0
        %1654 = vmatprep.subr.bf16.mxu0 0
        %1655 = vmatpush1.bf16.msra.mxu0 0
        %1656 = vmatprep.subr.bf16.mxu0 0
        %1657 = vmatpush1.bf16.msra.mxu0 %v1637
        %1658 = vmatprep.subr.bf16.mxu0 0
        %1659 = vmatpush2.bf16.msra.mxu0 0
        %1660 = vmatprep.subr.bf16.mxu0 0
        %1661 = vmatpush2.bf16.msra.mxu0 0
        %1662 = vmatprep.subr.bf16.mxu0 0
        %1663 = vmatpush2.bf16.msra.mxu0 0
        %1664 = vmatprep.subr.bf16.mxu0 0
        %1665 = vmatpush2.bf16.msra.mxu0 0
        %1666 = vmatprep.subr.bf16.mxu0 0
        %1667 = vmatpush2.bf16.msra.mxu0 0
        %1668 = vmatprep.subr.bf16.mxu0 0
        %1669 = vmatpush2.bf16.msra.mxu0 0
        %1670 = vmatprep.subr.bf16.mxu0 0
        %1671 = vmatpush2.bf16.msra.mxu0 0
        %1672 = vmatprep.subr.bf16.mxu0 0
        %1673 = vmatpush2.bf16.msra.mxu0 0
        %1674 = vmatprep.mubr.bf16.mxu0 0
        %1675 = vmatmul.mubr.bf16.gmra.mxu0 %v1640
        %v1676 = vpop.f32.mrf.mxu0
        %v1677 = vadd.f32 0.0, %v1676
        %v1678 = vpop.f32.mrf.mxu0
        %v1679 = vpop.f32.mrf.mxu0
        %v1680 = vadd.f32 0.0, %v1679
        %v1681 = vpop.f32.mrf.mxu0
        %1682 = vdwg.mxu0
        %v1683 = vmul.f32 %v1677, %v1633
        %v1684 = vmul.f32 %v1680, %v1634
        %1685 = vrot.lane.b32.xlu0 %v836, 48
        %v1686 = vpop.permute.xlu0 %1685
        %1687 = vrot.lane.b32.xlu0 %v840, 48
        %v1688 = vpop.permute.xlu0 %1687
        %1689 = vrot.lane.b32.xlu0 %v838, 48
        %v1690 = vpop.permute.xlu0 %1689
        %1691 = vrot.lane.b32.xlu0 %v842, 48
        %v1692 = vpop.permute.xlu0 %1691
        %v1693 = vsel %vm510, %v1686, 0
        %v1695 = vsel %vm510, %v1688, 0
        %v1697 = vsel %vm510, %v1690, 0
        %v1699 = vsel %vm510, %v1692, 0
        %1701 = vmatprep.subr.mxu0 0.0
        %1702 = vmatpush1.xpose.msra.mxu0 0.0
        %1703 = vmatprep.subr.mxu0 0.0
        %1704 = vmatpush1.xpose.msra.mxu0 0.0
        %1705 = vmatprep.subr.mxu0 0.0
        %1706 = vmatpush1.xpose.msra.mxu0 0.0
        %1707 = vmatprep.subr.mxu0 0.0
        %1708 = vmatpush1.xpose.msra.mxu0 0.0
        %1709 = vmatprep.subr.mxu0 0.0
        %1710 = vmatpush1.xpose.msra.mxu0 0.0
        %1711 = vmatprep.subr.mxu0 0.0
        %1712 = vmatpush1.xpose.msra.mxu0 0.0
        %1713 = vmatprep.subr.mxu0 0.0
        %1714 = vmatpush1.xpose.msra.mxu0 0.0
        %1715 = vmatprep.subr.mxu0 0.0
        %1716 = vmatpush1.xpose.msra.mxu0 0.0
        %1717 = vmatprep.subr.mxu0 0.0
        %1718 = vmatpush1.xpose.msra.mxu0 0.0
        %1719 = vmatprep.subr.mxu0 0.0
        %1720 = vmatpush1.xpose.msra.mxu0 0.0
        %1721 = vmatprep.subr.mxu0 0.0
        %1722 = vmatpush1.xpose.msra.mxu0 0.0
        %1723 = vmatprep.subr.mxu0 0.0
        %1724 = vmatpush1.xpose.msra.mxu0 0.0
        %1725 = vmatprep.subr.mxu0 0.0
        %1726 = vmatpush1.xpose.msra.mxu0 0.0
        %1727 = vmatprep.subr.mxu0 0.0
        %1728 = vmatpush1.xpose.msra.mxu0 0.0
        %1729 = vmatprep.subr.mxu0 0.0
        %1730 = vmatpush1.xpose.msra.mxu0 %v1699
        %1731 = vmatprep.subr.mxu0 0.0
        %1732 = vmatpush1.xpose.msra.mxu0 %v1697
        %1733 = vmatprep.subr.mxu0 0.0
        %1734 = vmatpush2.xpose.msra.mxu0 0.0
        %1735 = vmatprep.subr.mxu0 0.0
        %1736 = vmatpush2.xpose.msra.mxu0 0.0
        %1737 = vmatprep.subr.mxu0 0.0
        %1738 = vmatpush2.xpose.msra.mxu0 0.0
        %1739 = vmatprep.subr.mxu0 0.0
        %1740 = vmatpush2.xpose.msra.mxu0 0.0
        %1741 = vmatprep.subr.mxu0 0.0
        %1742 = vmatpush2.xpose.msra.mxu0 0.0
        %1743 = vmatprep.subr.mxu0 0.0
        %1744 = vmatpush2.xpose.msra.mxu0 0.0
        %1745 = vmatprep.subr.mxu0 0.0
        %1746 = vmatpush2.xpose.msra.mxu0 0.0
        %1747 = vmatprep.subr.mxu0 0.0
        %1748 = vmatpush2.xpose.msra.mxu0 0.0
        %1749 = vmatprep.subr.mxu0 0.0
        %1750 = vmatpush2.xpose.msra.mxu0 0.0
        %1751 = vmatprep.subr.mxu0 0.0
        %1752 = vmatpush2.xpose.msra.mxu0 0.0
        %1753 = vmatprep.subr.mxu0 0.0
        %1754 = vmatpush2.xpose.msra.mxu0 0.0
        %1755 = vmatprep.subr.mxu0 0.0
        %1756 = vmatpush2.xpose.msra.mxu0 0.0
        %1757 = vmatprep.subr.mxu0 0.0
        %1758 = vmatpush2.xpose.msra.mxu0 0.0
        %1759 = vmatprep.subr.mxu0 0.0
        %1760 = vmatpush2.xpose.msra.mxu0 0.0
        %1761 = vmatprep.subr.mxu0 0.0
        %1762 = vmatpush2.xpose.msra.mxu0 0.0
        %1763 = vmatprep.subr.mxu0 0.0
        %1764 = vmatpush2.xpose.msra.mxu0 0.0
        %1765 = vmatprep.mubr.f32.mxu0 0.0
        %1766 = vmatmul.mubr.f32.gmra.mxu0 %v1693
        %v1767 = vpop.f32.mrf.mxu0
        %v1768 = vadd.f32 0.0, %v1767
        %v1769 = vpop.f32.mrf.mxu0
        %1770 = vmatprep.mubr.f32.mxu0 0.0
        %1771 = vmatmul.mubr.f32.gmra.mxu0 %v1695
        %v1772 = vpop.f32.mrf.mxu0
        %v1773 = vadd.f32 0.0, %v1772
        %v1774 = vpop.f32.mrf.mxu0
        %1775 = vdwg.mxu0
        %v1776 = vsel %vm510, %v1768, -inf
        %1777 = vmax.xlane.f32.xlu0 %v1776
        %v1778 = vpop.xlane.xlu0 %1777
        %v1779 = vsel %vm510, %v1773, -inf
        %1780 = vmax.xlane.f32.xlu0 %v1779
        %v1781 = vpop.xlane.xlu0 %1780
        %v1782 = vsub.f32 %v1768, %v1778
        %v1783 = vsub.f32 %v1773, %v1781
        %v1784 = vmul.f32 %v1782, 1.442695
        %v1785 = vpow.pop %v1784
        %v1786 = vmul.f32 %v1783, 1.442695
        %v1787 = vpow.pop %v1786
        %v1788 = vsel %vm510, %v1785, 0.0
        %1789 = vadd.xlane.f32.xlu0 %v1788
        %v1790 = vpop.xlane.xlu0 %1789
        %v1791 = vsel %vm510, %v1787, 0.0
        %1792 = vadd.xlane.f32.xlu0 %v1791
        %v1793 = vpop.xlane.xlu0 %1792
        %v1794 = vrcp.pop %v1790
        %v1795 = vrcp.pop %v1793
        %v1796 = vpack.c.bf16 %v1787, %v1785
        %1797 = vrot.lane.b32.xlu0 %v885, 48
        %v1798 = vpop.permute.xlu0 %1797
        %v1801 = vsel %vm510, %v1796, 0
        %1803 = vmatprep.subr.bf16.mxu0 0
        %1804 = vmatpush1.bf16.msra.mxu0 0
        %1805 = vmatprep.subr.bf16.mxu0 0
        %1806 = vmatpush1.bf16.msra.mxu0 0
        %1807 = vmatprep.subr.bf16.mxu0 0
        %1808 = vmatpush1.bf16.msra.mxu0 0
        %1809 = vmatprep.subr.bf16.mxu0 0
        %1810 = vmatpush1.bf16.msra.mxu0 0
        %1811 = vmatprep.subr.bf16.mxu0 0
        %1812 = vmatpush1.bf16.msra.mxu0 0
        %1813 = vmatprep.subr.bf16.mxu0 0
        %1814 = vmatpush1.bf16.msra.mxu0 0
        %1815 = vmatprep.subr.bf16.mxu0 0
        %1816 = vmatpush1.bf16.msra.mxu0 0
        %1817 = vmatprep.subr.bf16.mxu0 0
        %1818 = vmatpush1.bf16.msra.mxu0 %v1798
        %1819 = vmatprep.subr.bf16.mxu0 0
        %1820 = vmatpush2.bf16.msra.mxu0 0
        %1821 = vmatprep.subr.bf16.mxu0 0
        %1822 = vmatpush2.bf16.msra.mxu0 0
        %1823 = vmatprep.subr.bf16.mxu0 0
        %1824 = vmatpush2.bf16.msra.mxu0 0
        %1825 = vmatprep.subr.bf16.mxu0 0
        %1826 = vmatpush2.bf16.msra.mxu0 0
        %1827 = vmatprep.subr.bf16.mxu0 0
        %1828 = vmatpush2.bf16.msra.mxu0 0
        %1829 = vmatprep.subr.bf16.mxu0 0
        %1830 = vmatpush2.bf16.msra.mxu0 0
        %1831 = vmatprep.subr.bf16.mxu0 0
        %1832 = vmatpush2.bf16.msra.mxu0 0
        %1833 = vmatprep.subr.bf16.mxu0 0
        %1834 = vmatpush2.bf16.msra.mxu0 0
        %1835 = vmatprep.mubr.bf16.mxu0 0
        %1836 = vmatmul.mubr.bf16.gmra.mxu0 %v1801
        %v1837 = vpop.f32.mrf.mxu0
        %v1838 = vadd.f32 0.0, %v1837
        %v1839 = vpop.f32.mrf.mxu0
        %v1840 = vpop.f32.mrf.mxu0
        %v1841 = vadd.f32 0.0, %v1840
        %v1842 = vpop.f32.mrf.mxu0
        %1843 = vdwg.mxu0
        %v1844 = vmul.f32 %v1838, %v1794
        %v1845 = vmul.f32 %v1841, %v1795
        %1846 = vrot.lane.b32.xlu0 %v836, 32
        %v1847 = vpop.permute.xlu0 %1846
        %1848 = vrot.lane.b32.xlu0 %v840, 32
        %v1849 = vpop.permute.xlu0 %1848
        %1850 = vrot.lane.b32.xlu0 %v838, 32
        %v1851 = vpop.permute.xlu0 %1850
        %1852 = vrot.lane.b32.xlu0 %v842, 32
        %v1853 = vpop.permute.xlu0 %1852
        %v1854 = vsel %vm510, %v1847, 0
        %v1856 = vsel %vm510, %v1849, 0
        %v1858 = vsel %vm510, %v1851, 0
        %v1860 = vsel %vm510, %v1853, 0
        %1862 = vmatprep.subr.mxu0 0.0
        %1863 = vmatpush1.xpose.msra.mxu0 0.0
        %1864 = vmatprep.subr.mxu0 0.0
        %1865 = vmatpush1.xpose.msra.mxu0 0.0
        %1866 = vmatprep.subr.mxu0 0.0
        %1867 = vmatpush1.xpose.msra.mxu0 0.0
        %1868 = vmatprep.subr.mxu0 0.0
        %1869 = vmatpush1.xpose.msra.mxu0 0.0
        %1870 = vmatprep.subr.mxu0 0.0
        %1871 = vmatpush1.xpose.msra.mxu0 0.0
        %1872 = vmatprep.subr.mxu0 0.0
        %1873 = vmatpush1.xpose.msra.mxu0 0.0
        %1874 = vmatprep.subr.mxu0 0.0
        %1875 = vmatpush1.xpose.msra.mxu0 0.0
        %1876 = vmatprep.subr.mxu0 0.0
        %1877 = vmatpush1.xpose.msra.mxu0 0.0
        %1878 = vmatprep.subr.mxu0 0.0
        %1879 = vmatpush1.xpose.msra.mxu0 0.0
        %1880 = vmatprep.subr.mxu0 0.0
        %1881 = vmatpush1.xpose.msra.mxu0 0.0
        %1882 = vmatprep.subr.mxu0 0.0
        %1883 = vmatpush1.xpose.msra.mxu0 0.0
        %1884 = vmatprep.subr.mxu0 0.0
        %1885 = vmatpush1.xpose.msra.mxu0 0.0
        %1886 = vmatprep.subr.mxu0 0.0
        %1887 = vmatpush1.xpose.msra.mxu0 0.0
        %1888 = vmatprep.subr.mxu0 0.0
        %1889 = vmatpush1.xpose.msra.mxu0 0.0
        %1890 = vmatprep.subr.mxu0 0.0
        %1891 = vmatpush1.xpose.msra.mxu0 %v1860
        %1892 = vmatprep.subr.mxu0 0.0
        %1893 = vmatpush1.xpose.msra.mxu0 %v1858
        %1894 = vmatprep.subr.mxu0 0.0
        %1895 = vmatpush2.xpose.msra.mxu0 0.0
        %1896 = vmatprep.subr.mxu0 0.0
        %1897 = vmatpush2.xpose.msra.mxu0 0.0
        %1898 = vmatprep.subr.mxu0 0.0
        %1899 = vmatpush2.xpose.msra.mxu0 0.0
        %1900 = vmatprep.subr.mxu0 0.0
        %1901 = vmatpush2.xpose.msra.mxu0 0.0
        %1902 = vmatprep.subr.mxu0 0.0
        %1903 = vmatpush2.xpose.msra.mxu0 0.0
        %1904 = vmatprep.subr.mxu0 0.0
        %1905 = vmatpush2.xpose.msra.mxu0 0.0
        %1906 = vmatprep.subr.mxu0 0.0
        %1907 = vmatpush2.xpose.msra.mxu0 0.0
        %1908 = vmatprep.subr.mxu0 0.0
        %1909 = vmatpush2.xpose.msra.mxu0 0.0
        %1910 = vmatprep.subr.mxu0 0.0
        %1911 = vmatpush2.xpose.msra.mxu0 0.0
        %1912 = vmatprep.subr.mxu0 0.0
        %1913 = vmatpush2.xpose.msra.mxu0 0.0
        %1914 = vmatprep.subr.mxu0 0.0
        %1915 = vmatpush2.xpose.msra.mxu0 0.0
        %1916 = vmatprep.subr.mxu0 0.0
        %1917 = vmatpush2.xpose.msra.mxu0 0.0
        %1918 = vmatprep.subr.mxu0 0.0
        %1919 = vmatpush2.xpose.msra.mxu0 0.0
        %1920 = vmatprep.subr.mxu0 0.0
        %1921 = vmatpush2.xpose.msra.mxu0 0.0
        %1922 = vmatprep.subr.mxu0 0.0
        %1923 = vmatpush2.xpose.msra.mxu0 0.0
        %1924 = vmatprep.subr.mxu0 0.0
        %1925 = vmatpush2.xpose.msra.mxu0 0.0
        %1926 = vmatprep.mubr.f32.mxu0 0.0
        %1927 = vmatmul.mubr.f32.gmra.mxu0 %v1854
        %v1928 = vpop.f32.mrf.mxu0
        %v1929 = vadd.f32 0.0, %v1928
        %v1930 = vpop.f32.mrf.mxu0
        %1931 = vmatprep.mubr.f32.mxu0 0.0
        %1932 = vmatmul.mubr.f32.gmra.mxu0 %v1856
        %v1933 = vpop.f32.mrf.mxu0
        %v1934 = vadd.f32 0.0, %v1933
        %v1935 = vpop.f32.mrf.mxu0
        %1936 = vdwg.mxu0
        %v1937 = vsel %vm510, %v1929, -inf
        %1938 = vmax.xlane.f32.xlu0 %v1937
        %v1939 = vpop.xlane.xlu0 %1938
        %v1940 = vsel %vm510, %v1934, -inf
        %1941 = vmax.xlane.f32.xlu0 %v1940
        %v1942 = vpop.xlane.xlu0 %1941
        %v1943 = vsub.f32 %v1929, %v1939
        %v1944 = vsub.f32 %v1934, %v1942
        %v1945 = vmul.f32 %v1943, 1.442695
        %v1946 = vpow.pop %v1945
        %v1947 = vmul.f32 %v1944, 1.442695
        %v1948 = vpow.pop %v1947
        %v1949 = vsel %vm510, %v1946, 0.0
        %1950 = vadd.xlane.f32.xlu0 %v1949
        %v1951 = vpop.xlane.xlu0 %1950
        %v1952 = vsel %vm510, %v1948, 0.0
        %1953 = vadd.xlane.f32.xlu0 %v1952
        %v1954 = vpop.xlane.xlu0 %1953
        %v1955 = vrcp.pop %v1951
        %v1956 = vrcp.pop %v1954
        %v1957 = vpack.c.bf16 %v1948, %v1946
        %1958 = vrot.lane.b32.xlu0 %v885, 32
        %v1959 = vpop.permute.xlu0 %1958
        %v1962 = vsel %vm510, %v1957, 0
        %1964 = vmatprep.subr.bf16.mxu0 0
        %1965 = vmatpush1.bf16.msra.mxu0 0
        %1966 = vmatprep.subr.bf16.mxu0 0
        %1967 = vmatpush1.bf16.msra.mxu0 0
        %1968 = vmatprep.subr.bf16.mxu0 0
        %1969 = vmatpush1.bf16.msra.mxu0 0
        %1970 = vmatprep.subr.bf16.mxu0 0
        %1971 = vmatpush1.bf16.msra.mxu0 0
        %1972 = vmatprep.subr.bf16.mxu0 0
        %1973 = vmatpush1.bf16.msra.mxu0 0
        %1974 = vmatprep.subr.bf16.mxu0 0
        %1975 = vmatpush1.bf16.msra.mxu0 0
        %1976 = vmatprep.subr.bf16.mxu0 0
        %1977 = vmatpush1.bf16.msra.mxu0 0
        %1978 = vmatprep.subr.bf16.mxu0 0
        %1979 = vmatpush1.bf16.msra.mxu0 %v1959
        %1980 = vmatprep.subr.bf16.mxu0 0
        %1981 = vmatpush2.bf16.msra.mxu0 0
        %1982 = vmatprep.subr.bf16.mxu0 0
        %1983 = vmatpush2.bf16.msra.mxu0 0
        %1984 = vmatprep.subr.bf16.mxu0 0
        %1985 = vmatpush2.bf16.msra.mxu0 0
        %1986 = vmatprep.subr.bf16.mxu0 0
        %1987 = vmatpush2.bf16.msra.mxu0 0
        %1988 = vmatprep.subr.bf16.mxu0 0
        %1989 = vmatpush2.bf16.msra.mxu0 0
        %1990 = vmatprep.subr.bf16.mxu0 0
        %1991 = vmatpush2.bf16.msra.mxu0 0
        %1992 = vmatprep.subr.bf16.mxu0 0
        %1993 = vmatpush2.bf16.msra.mxu0 0
        %1994 = vmatprep.subr.bf16.mxu0 0
        %1995 = vmatpush2.bf16.msra.mxu0 0
        %1996 = vmatprep.mubr.bf16.mxu0 0
        %1997 = vmatmul.mubr.bf16.gmra.mxu0 %v1962
        %v1998 = vpop.f32.mrf.mxu0
        %v1999 = vadd.f32 0.0, %v1998
        %v2000 = vpop.f32.mrf.mxu0
        %v2001 = vpop.f32.mrf.mxu0
        %v2002 = vadd.f32 0.0, %v2001
        %v2003 = vpop.f32.mrf.mxu0
        %2004 = vdwg.mxu0
        %v2005 = vmul.f32 %v1999, %v1955
        %v2006 = vmul.f32 %v2002, %v1956
        %2007 = vrot.lane.b32.xlu0 %v836, 16
        %v2008 = vpop.permute.xlu0 %2007
        %2009 = vrot.lane.b32.xlu0 %v840, 16
        %v2010 = vpop.permute.xlu0 %2009
        %2011 = vrot.lane.b32.xlu0 %v838, 16
        %v2012 = vpop.permute.xlu0 %2011
        %2013 = vrot.lane.b32.xlu0 %v842, 16
        %v2014 = vpop.permute.xlu0 %2013
        %v2015 = vsel %vm510, %v2008, 0
        %v2017 = vsel %vm510, %v2010, 0
        %v2019 = vsel %vm510, %v2012, 0
        %v2021 = vsel %vm510, %v2014, 0
        %2023 = vmatprep.subr.mxu0 0.0
        %2024 = vmatpush1.xpose.msra.mxu0 0.0
        %2025 = vmatprep.subr.mxu0 0.0
        %2026 = vmatpush1.xpose.msra.mxu0 0.0
        %2027 = vmatprep.subr.mxu0 0.0
        %2028 = vmatpush1.xpose.msra.mxu0 0.0
        %2029 = vmatprep.subr.mxu0 0.0
        %2030 = vmatpush1.xpose.msra.mxu0 0.0
        %2031 = vmatprep.subr.mxu0 0.0
        %2032 = vmatpush1.xpose.msra.mxu0 0.0
        %2033 = vmatprep.subr.mxu0 0.0
        %2034 = vmatpush1.xpose.msra.mxu0 0.0
        %2035 = vmatprep.subr.mxu0 0.0
        %2036 = vmatpush1.xpose.msra.mxu0 0.0
        %2037 = vmatprep.subr.mxu0 0.0
        %2038 = vmatpush1.xpose.msra.mxu0 0.0
        %2039 = vmatprep.subr.mxu0 0.0
        %2040 = vmatpush1.xpose.msra.mxu0 0.0
        %2041 = vmatprep.subr.mxu0 0.0
        %2042 = vmatpush1.xpose.msra.mxu0 0.0
        %2043 = vmatprep.subr.mxu0 0.0
        %2044 = vmatpush1.xpose.msra.mxu0 0.0
        %2045 = vmatprep.subr.mxu0 0.0
        %2046 = vmatpush1.xpose.msra.mxu0 0.0
        %2047 = vmatprep.subr.mxu0 0.0
        %2048 = vmatpush1.xpose.msra.mxu0 0.0
        %2049 = vmatprep.subr.mxu0 0.0
        %2050 = vmatpush1.xpose.msra.mxu0 0.0
        %2051 = vmatprep.subr.mxu0 0.0
        %2052 = vmatpush1.xpose.msra.mxu0 %v2021
        %2053 = vmatprep.subr.mxu0 0.0
        %2054 = vmatpush1.xpose.msra.mxu0 %v2019
        %2055 = vmatprep.subr.mxu0 0.0
        %2056 = vmatpush2.xpose.msra.mxu0 0.0
        %2057 = vmatprep.subr.mxu0 0.0
        %2058 = vmatpush2.xpose.msra.mxu0 0.0
        %2059 = vmatprep.subr.mxu0 0.0
        %2060 = vmatpush2.xpose.msra.mxu0 0.0
        %2061 = vmatprep.subr.mxu0 0.0
        %2062 = vmatpush2.xpose.msra.mxu0 0.0
        %2063 = vmatprep.subr.mxu0 0.0
        %2064 = vmatpush2.xpose.msra.mxu0 0.0
        %2065 = vmatprep.subr.mxu0 0.0
        %2066 = vmatpush2.xpose.msra.mxu0 0.0
        %2067 = vmatprep.subr.mxu0 0.0
        %2068 = vmatpush2.xpose.msra.mxu0 0.0
        %2069 = vmatprep.subr.mxu0 0.0
        %2070 = vmatpush2.xpose.msra.mxu0 0.0
        %2071 = vmatprep.subr.mxu0 0.0
        %2072 = vmatpush2.xpose.msra.mxu0 0.0
        %2073 = vmatprep.subr.mxu0 0.0
        %2074 = vmatpush2.xpose.msra.mxu0 0.0
        %2075 = vmatprep.subr.mxu0 0.0
        %2076 = vmatpush2.xpose.msra.mxu0 0.0
        %2077 = vmatprep.subr.mxu0 0.0
        %2078 = vmatpush2.xpose.msra.mxu0 0.0
        %2079 = vmatprep.subr.mxu0 0.0
        %2080 = vmatpush2.xpose.msra.mxu0 0.0
        %2081 = vmatprep.subr.mxu0 0.0
        %2082 = vmatpush2.xpose.msra.mxu0 0.0
        %2083 = vmatprep.subr.mxu0 0.0
        %2084 = vmatpush2.xpose.msra.mxu0 0.0
        %2085 = vmatprep.subr.mxu0 0.0
        %2086 = vmatpush2.xpose.msra.mxu0 0.0
        %2087 = vmatprep.mubr.f32.mxu0 0.0
        %2088 = vmatmul.mubr.f32.gmra.mxu0 %v2015
        %v2089 = vpop.f32.mrf.mxu0
        %v2090 = vadd.f32 0.0, %v2089
        %v2091 = vpop.f32.mrf.mxu0
        %2092 = vmatprep.mubr.f32.mxu0 0.0
        %2093 = vmatmul.mubr.f32.gmra.mxu0 %v2017
        %v2094 = vpop.f32.mrf.mxu0
        %v2095 = vadd.f32 0.0, %v2094
        %v2096 = vpop.f32.mrf.mxu0
        %2097 = vdwg.mxu0
        %v2098 = vsel %vm510, %v2090, -inf
        %2099 = vmax.xlane.f32.xlu0 %v2098
        %v2100 = vpop.xlane.xlu0 %2099
        %v2101 = vsel %vm510, %v2095, -inf
        %2102 = vmax.xlane.f32.xlu0 %v2101
        %v2103 = vpop.xlane.xlu0 %2102
        %v2104 = vsub.f32 %v2090, %v2100
        %v2105 = vsub.f32 %v2095, %v2103
        %v2106 = vmul.f32 %v2104, 1.442695
        %v2107 = vpow.pop %v2106
        %v2108 = vmul.f32 %v2105, 1.442695
        %v2109 = vpow.pop %v2108
        %v2110 = vsel %vm510, %v2107, 0.0
        %2111 = vadd.xlane.f32.xlu0 %v2110
        %v2112 = vpop.xlane.xlu0 %2111
        %v2113 = vsel %vm510, %v2109, 0.0
        %2114 = vadd.xlane.f32.xlu0 %v2113
        %v2115 = vpop.xlane.xlu0 %2114
        %v2116 = vrcp.pop %v2112
        %v2117 = vrcp.pop %v2115
        %v2118 = vpack.c.bf16 %v2109, %v2107
        %2119 = vrot.lane.b32.xlu0 %v885, 16
        %v2120 = vpop.permute.xlu0 %2119
        %v2123 = vsel %vm510, %v2118, 0
        %2125 = vmatprep.subr.bf16.mxu0 0
        %2126 = vmatpush1.bf16.msra.mxu0 0
        %2127 = vmatprep.subr.bf16.mxu0 0
        %2128 = vmatpush1.bf16.msra.mxu0 0
        %2129 = vmatprep.subr.bf16.mxu0 0
        %2130 = vmatpush1.bf16.msra.mxu0 0
        %2131 = vmatprep.subr.bf16.mxu0 0
        %2132 = vmatpush1.bf16.msra.mxu0 0
        %2133 = vmatprep.subr.bf16.mxu0 0
        %2134 = vmatpush1.bf16.msra.mxu0 0
        %2135 = vmatprep.subr.bf16.mxu0 0
        %2136 = vmatpush1.bf16.msra.mxu0 0
        %2137 = vmatprep.subr.bf16.mxu0 0
        %2138 = vmatpush1.bf16.msra.mxu0 0
        %2139 = vmatprep.subr.bf16.mxu0 0
        %2140 = vmatpush1.bf16.msra.mxu0 %v2120
        %2141 = vmatprep.subr.bf16.mxu0 0
        %2142 = vmatpush2.bf16.msra.mxu0 0
        %2143 = vmatprep.subr.bf16.mxu0 0
        %2144 = vmatpush2.bf16.msra.mxu0 0
        %2145 = vmatprep.subr.bf16.mxu0 0
        %2146 = vmatpush2.bf16.msra.mxu0 0
        %2147 = vmatprep.subr.bf16.mxu0 0
        %2148 = vmatpush2.bf16.msra.mxu0 0
        %2149 = vmatprep.subr.bf16.mxu0 0
        %2150 = vmatpush2.bf16.msra.mxu0 0
        %2151 = vmatprep.subr.bf16.mxu0 0
        %2152 = vmatpush2.bf16.msra.mxu0 0
        %2153 = vmatprep.subr.bf16.mxu0 0
        %2154 = vmatpush2.bf16.msra.mxu0 0
        %2155 = vmatprep.subr.bf16.mxu0 0
        %2156 = vmatpush2.bf16.msra.mxu0 0
        %2157 = vmatprep.mubr.bf16.mxu0 0
        %2158 = vmatmul.mubr.bf16.gmra.mxu0 %v2123
        %v2159 = vpop.f32.mrf.mxu0
        %v2160 = vadd.f32 0.0, %v2159
        %v2161 = vpop.f32.mrf.mxu0
        %v2162 = vpop.f32.mrf.mxu0
        %v2163 = vadd.f32 0.0, %v2162
        %v2164 = vpop.f32.mrf.mxu0
        %2165 = vdwg.mxu0
        %v2166 = vmul.f32 %v2160, %v2116
        %v2167 = vmul.f32 %v2163, %v2117
        %2170 = vrot.lane.b32.xlu0 %v1200, 16
        %v2171 = vpop.permute.xlu0 %2170
        %2172 = vrot.lane.b32.xlu0 %v1201, 16
        %v2173 = vpop.permute.xlu0 %2172
        %2178 = vrot.lane.b32.xlu0 %v1361, 32
        %v2179 = vpop.permute.xlu0 %2178
        %2180 = vrot.lane.b32.xlu0 %v1362, 32
        %v2181 = vpop.permute.xlu0 %2180
        %2186 = vrot.lane.b32.xlu0 %v1522, 48
        %v2187 = vpop.permute.xlu0 %2186
        %2188 = vrot.lane.b32.xlu0 %v1523, 48
        %v2189 = vpop.permute.xlu0 %2188
        %2194 = vrot.lane.b32.xlu0 %v1683, 64
        %v2195 = vpop.permute.xlu0 %2194
        %2196 = vrot.lane.b32.xlu0 %v1684, 64
        %v2197 = vpop.permute.xlu0 %2196
        %2202 = vrot.lane.b32.xlu0 %v1844, 80
        %v2203 = vpop.permute.xlu0 %2202
        %2204 = vrot.lane.b32.xlu0 %v1845, 80
        %v2205 = vpop.permute.xlu0 %2204
        %2210 = vrot.lane.b32.xlu0 %v2005, 96
        %v2211 = vpop.permute.xlu0 %2210
        %2212 = vrot.lane.b32.xlu0 %v2006, 96
        %v2213 = vpop.permute.xlu0 %2212
        %2218 = vrot.lane.b32.xlu0 %v2166, 112
        %v2219 = vpop.permute.xlu0 %2218
        %2220 = vrot.lane.b32.xlu0 %v2167, 112
        %v2221 = vpop.permute.xlu0 %2220
        %v2224 = vsel %vm510, %v1038, %v2171
        %v2225 = vsel %vm510, %v1039, %v2173
        %vm2226 = vcmask 261120
        %v2227 = vsel %vm2226, %v2224, %v2179
        %v2228 = vsel %vm2226, %v2225, %v2181
        %vm2229 = vcmask 392192
        %v2230 = vsel %vm2229, %v2227, %v2187
        %v2231 = vsel %vm2229, %v2228, %v2189
        %vm2232 = vcmask 523264
        %v2233 = vsel %vm2232, %v2230, %v2195
        %v2234 = vsel %vm2232, %v2231, %v2197
        %vm2235 = vcmask 654336
        %v2236 = vsel %vm2235, %v2233, %v2203
        %v2237 = vsel %vm2235, %v2234, %v2205
        %vm2238 = vcmask 785408
        %v2239 = vsel %vm2238, %v2236, %v2211
        %v2240 = vsel %vm2238, %v2237, %v2213
        %vm2241 = vcmask 916480
        %v2242 = vsel %vm2241, %v2239, %v2219
        %v2243 = vsel %vm2241, %v2240, %v2221
        %v2244 = vpack.c.bf16 %v2243, %v2242
        %v2245 = vld [vmem:[%s5] sm:$0xff]
        %v2246 = vld [vmem:[%s5 + $0x8] sm:$0xff]
        %v2247 = vld [vmem:[%s5 + $0x10] sm:$0xff]
        %v2248 = vld [vmem:[%s5 + $0x18] sm:$0xff]
        %v2249 = vld [vmem:[%s5 + $0x20] sm:$0xff]
        %v2250 = vld [vmem:[%s5 + $0x28] sm:$0xff]
        %v2251 = vld [vmem:[%s5 + $0x30] sm:$0xff]
        %v2252 = vld [vmem:[%s5 + $0x38] sm:$0xff]
        %v2253 = vld [vmem:[%s5 + $0x40] sm:$0xff]
        %v2254 = vld [vmem:[%s5 + $0x48] sm:$0xff]
        %v2255 = vld [vmem:[%s5 + $0x50] sm:$0xff]
        %v2256 = vld [vmem:[%s5 + $0x58] sm:$0xff]
        %v2257 = vld [vmem:[%s5 + $0x60] sm:$0xff]
        %v2258 = vld [vmem:[%s5 + $0x68] sm:$0xff]
        %v2259 = vld [vmem:[%s5 + $0x70] sm:$0xff]
        %v2260 = vld [vmem:[%s5 + $0x78] sm:$0xff]
        %v2261 = vld [vmem:[%s6] sm:$0x3]
        %v2263 = vlaneseq
        %v2264 = vshrl.u32 %v2263, 7
        %v2265 = vsub.s32 0, %v2264
        %v2266 = vrot.slane %v2261, %v2265
        %v2267 = vlaneseq
        %v2268 = vshrl.u32 %v2267, 7
        %v2269 = vsub.s32 1, %v2268
        %v2270 = vrot.slane %v2261, %v2269
        %v2289 = vunpack.c.l.b16 %v2245
        %v2290 = vunpack.c.h.b16 %v2245
        %v2291 = vunpack.c.l.b16 %v2246
        %v2292 = vunpack.c.h.b16 %v2246
        %v2293 = vunpack.c.l.b16 %v2247
        %v2294 = vunpack.c.h.b16 %v2247
        %v2295 = vunpack.c.l.b16 %v2248
        %v2296 = vunpack.c.h.b16 %v2248
        %v2297 = vunpack.c.l.b16 %v2249
        %v2298 = vunpack.c.h.b16 %v2249
        %v2299 = vunpack.c.l.b16 %v2250
        %v2300 = vunpack.c.h.b16 %v2250
        %v2301 = vunpack.c.l.b16 %v2251
        %v2302 = vunpack.c.h.b16 %v2251
        %v2303 = vunpack.c.l.b16 %v2252
        %v2304 = vunpack.c.h.b16 %v2252
        %v2305 = vunpack.c.l.b16 %v2253
        %v2306 = vunpack.c.h.b16 %v2253
        %v2307 = vunpack.c.l.b16 %v2254
        %v2308 = vunpack.c.h.b16 %v2254
        %v2309 = vunpack.c.l.b16 %v2255
        %v2310 = vunpack.c.h.b16 %v2255
        %v2311 = vunpack.c.l.b16 %v2256
        %v2312 = vunpack.c.h.b16 %v2256
        %v2313 = vunpack.c.l.b16 %v2257
        %v2314 = vunpack.c.h.b16 %v2257
        %v2315 = vunpack.c.l.b16 %v2258
        %v2316 = vunpack.c.h.b16 %v2258
        %v2317 = vunpack.c.l.b16 %v2259
        %v2318 = vunpack.c.h.b16 %v2259
        %v2319 = vunpack.c.l.b16 %v2260
        %v2320 = vunpack.c.h.b16 %v2260
        %v2321 = vpack.c.b16 %v2291, %v2289
        %v2322 = vpack.c.b16 %v2292, %v2290
        %v2323 = vpack.c.b16 %v2295, %v2293
        %v2324 = vpack.c.b16 %v2296, %v2294
        %v2325 = vpack.c.b16 %v2299, %v2297
        %v2326 = vpack.c.b16 %v2300, %v2298
        %v2327 = vpack.c.b16 %v2303, %v2301
        %v2328 = vpack.c.b16 %v2304, %v2302
        %v2329 = vpack.c.b16 %v2307, %v2305
        %v2330 = vpack.c.b16 %v2308, %v2306
        %v2331 = vpack.c.b16 %v2311, %v2309
        %v2332 = vpack.c.b16 %v2312, %v2310
        %v2333 = vpack.c.b16 %v2315, %v2313
        %v2334 = vpack.c.b16 %v2316, %v2314
        %v2335 = vpack.c.b16 %v2319, %v2317
        %v2336 = vpack.c.b16 %v2320, %v2318
        %2353 = vmatprep.subr.bf16.mxu0 %v2336
        %2354 = vmatpush1.bf16.msra.mxu0 %v2335
        %2355 = vmatprep.subr.bf16.mxu0 %v2334
        %2356 = vmatpush1.bf16.msra.mxu0 %v2333
        %2357 = vmatprep.subr.bf16.mxu0 %v2332
        %2358 = vmatpush1.bf16.msra.mxu0 %v2331
        %2359 = vmatprep.subr.bf16.mxu0 %v2330
        %2360 = vmatpush1.bf16.msra.mxu0 %v2329
        %2361 = vmatprep.subr.bf16.mxu0 %v2328
        %2362 = vmatpush1.bf16.msra.mxu0 %v2327
        %2363 = vmatprep.subr.bf16.mxu0 %v2326
        %2364 = vmatpush1.bf16.msra.mxu0 %v2325
        %2365 = vmatprep.subr.bf16.mxu0 %v2324
        %2366 = vmatpush1.bf16.msra.mxu0 %v2323
        %2367 = vmatprep.subr.bf16.mxu0 %v2322
        %2368 = vmatpush1.bf16.msra.mxu0 %v2321
        %2369 = vmatprep.subr.bf16.mxu0 0
        %2370 = vmatpush2.bf16.msra.mxu0 0
        %2371 = vmatprep.subr.bf16.mxu0 0
        %2372 = vmatpush2.bf16.msra.mxu0 0
        %2373 = vmatprep.subr.bf16.mxu0 0
        %2374 = vmatpush2.bf16.msra.mxu0 0
        %2375 = vmatprep.subr.bf16.mxu0 0
        %2376 = vmatpush2.bf16.msra.mxu0 0
        %2377 = vmatprep.subr.bf16.mxu0 0
        %2378 = vmatpush2.bf16.msra.mxu0 0
        %2379 = vmatprep.subr.bf16.mxu0 0
        %2380 = vmatpush2.bf16.msra.mxu0 0
        %2381 = vmatprep.subr.bf16.mxu0 0
        %2382 = vmatpush2.bf16.msra.mxu0 0
        %2383 = vmatprep.subr.bf16.mxu0 0
        %2384 = vmatpush2.bf16.msra.mxu0 0
        %2385 = vmatprep.mubr.bf16.mxu0 0
        %2386 = vmatmul.mubr.bf16.gmra.mxu0 %v2244
        %v2387 = vpop.f32.mrf.mxu0
        %v2388 = vadd.f32 %v2266, %v2387
        %v2389 = vpop.f32.mrf.mxu0
        %v2390 = vadd.f32 %v2270, %v2389
        %v2391 = vpop.f32.mrf.mxu0
        %v2392 = vadd.f32 %v2266, %v2391
        %v2393 = vpop.f32.mrf.mxu0
        %v2394 = vadd.f32 %v2270, %v2393
        %2395 = vdwg.mxu0
        %v2396 = vadd.f32 %v504, %v2388
        %v2397 = vadd.f32 %v505, %v2390
        %v2398 = vadd.f32 %v506, %v2392
        %v2399 = vadd.f32 %v507, %v2394
        %v2400 = vld [vmem:[%s7] sm:$0x3]
        %v2401 = vld [vmem:[%s8] sm:$0x3]
        %v2402 = vsel %vm510, %v2397, 0.0
        %v2403 = vadd.f32 %v2396, %v2402
        %2404 = vadd.xlane.f32.xlu0 %v2403
        %v2405 = vpop.xlane.xlu0 %2404
        %v2406 = vsel %vm510, %v2399, 0.0
        %v2407 = vadd.f32 %v2398, %v2406
        %2408 = vadd.xlane.f32.xlu0 %v2407
        %v2409 = vpop.xlane.xlu0 %2408
        %v2410 = vmul.f32 %v2405, %v519
        %v2411 = vmul.f32 %v2409, %v519
        %v2412 = vsub.f32 %v2396, %v2410
        %v2413 = vsub.f32 %v2397, %v2410
        %v2414 = vsub.f32 %v2398, %v2411
        %v2415 = vsub.f32 %v2399, %v2411
        %v2416 = vmul.f32 %v2412, %v2412
        %v2417 = vmul.f32 %v2413, %v2413
        %v2418 = vmul.f32 %v2414, %v2414
        %v2419 = vmul.f32 %v2415, %v2415
        %v2420 = vsel %vm510, %v2417, 0.0
        %v2421 = vadd.f32 %v2416, %v2420
        %2422 = vadd.xlane.f32.xlu0 %v2421
        %v2423 = vpop.xlane.xlu0 %2422
        %v2424 = vsel %vm510, %v2419, 0.0
        %v2425 = vadd.f32 %v2418, %v2424
        %2426 = vadd.xlane.f32.xlu0 %v2425
        %v2427 = vpop.xlane.xlu0 %2426
        %v2428 = vmul.f32 %v2423, %v519
        %v2429 = vmul.f32 %v2427, %v519
        %v2430 = vadd.f32 %v2428, 1e-05
        %v2431 = vadd.f32 %v2429, 1e-05
        %v2432 = vrsqrt.pop %v2430
        %v2433 = vrsqrt.pop %v2431
        %v2434 = vmul.f32 %v2412, %v2432
        %v2435 = vmul.f32 %v2413, %v2432
        %v2436 = vmul.f32 %v2414, %v2433
        %v2437 = vmul.f32 %v2415, %v2433
        %v2439 = vlaneseq
        %v2440 = vshrl.u32 %v2439, 7
        %v2441 = vsub.s32 0, %v2440
        %v2442 = vrot.slane %v2400, %v2441
        %v2443 = vlaneseq
        %v2444 = vshrl.u32 %v2443, 7
        %v2445 = vsub.s32 1, %v2444
        %v2446 = vrot.slane %v2400, %v2445
        %v2449 = vmul.f32 %v2434, %v2442
        %v2450 = vmul.f32 %v2435, %v2446
        %v2451 = vmul.f32 %v2436, %v2442
        %v2452 = vmul.f32 %v2437, %v2446
        %v2454 = vlaneseq
        %v2455 = vshrl.u32 %v2454, 7
        %v2456 = vsub.s32 0, %v2455
        %v2457 = vrot.slane %v2401, %v2456
        %v2458 = vlaneseq
        %v2459 = vshrl.u32 %v2458, 7
        %v2460 = vsub.s32 1, %v2459
        %v2461 = vrot.slane %v2401, %v2460
        %v2464 = vadd.f32 %v2449, %v2457
        %v2465 = vadd.f32 %v2450, %v2461
        %v2466 = vadd.f32 %v2451, %v2457
        %v2467 = vadd.f32 %v2452, %v2461
        %v2468 = vpack.c.bf16 %v2466, %v2464
        %v2469 = vpack.c.bf16 %v2467, %v2465
        %v2470 = vld [vmem:[%s9] sm:$0xf]
        %v2471 = vld [vmem:[%s9 + $0x4] sm:$0xf]
        %v2472 = vld [vmem:[%s9 + $0x8] sm:$0xf]
        %v2473 = vld [vmem:[%s9 + $0xc] sm:$0xf]
        %v2474 = vld [vmem:[%s9 + $0x10] sm:$0xf]
        %v2475 = vld [vmem:[%s9 + $0x14] sm:$0xf]
        %v2476 = vld [vmem:[%s9 + $0x18] sm:$0xf]
        %v2477 = vld [vmem:[%s9 + $0x1c] sm:$0xf]
        %v2478 = vld [vmem:[%s9 + $0x20] sm:$0xf]
        %v2479 = vld [vmem:[%s9 + $0x24] sm:$0xf]
        %v2480 = vld [vmem:[%s9 + $0x28] sm:$0xf]
        %v2481 = vld [vmem:[%s9 + $0x2c] sm:$0xf]
        %v2482 = vld [vmem:[%s9 + $0x30] sm:$0xf]
        %v2483 = vld [vmem:[%s9 + $0x34] sm:$0xf]
        %v2484 = vld [vmem:[%s9 + $0x38] sm:$0xf]
        %v2485 = vld [vmem:[%s9 + $0x3c] sm:$0xf]
        %v2486 = vld [vmem:[%s9 + $0x40] sm:$0xf]
        %v2487 = vld [vmem:[%s9 + $0x44] sm:$0xf]
        %v2488 = vld [vmem:[%s10] sm:$0x1]
        %v2490 = vlaneseq
        %v2491 = vshrl.u32 %v2490, 7
        %v2492 = vsub.s32 0, %v2491
        %v2493 = vrot.slane %v2488, %v2492
        %v2513 = vunpack.c.l.b16 %v2470
        %v2514 = vunpack.c.l.b16 %v2471
        %v2515 = vunpack.c.l.b16 %v2472
        %v2516 = vunpack.c.l.b16 %v2473
        %v2517 = vunpack.c.l.b16 %v2474
        %v2518 = vunpack.c.l.b16 %v2475
        %v2519 = vunpack.c.l.b16 %v2476
        %v2520 = vunpack.c.l.b16 %v2477
        %v2521 = vunpack.c.l.b16 %v2478
        %v2522 = vunpack.c.l.b16 %v2479
        %v2523 = vunpack.c.l.b16 %v2480
        %v2524 = vunpack.c.l.b16 %v2481
        %v2525 = vunpack.c.l.b16 %v2482
        %v2526 = vunpack.c.l.b16 %v2483
        %v2527 = vunpack.c.l.b16 %v2484
        %v2528 = vunpack.c.l.b16 %v2485
        %v2529 = vunpack.c.l.b16 %v2486
        %v2530 = vunpack.c.l.b16 %v2487
        %v2531 = vpack.c.b16 %v2514, %v2513
        %v2532 = vpack.c.b16 %v2516, %v2515
        %v2533 = vpack.c.b16 %v2518, %v2517
        %v2534 = vpack.c.b16 %v2520, %v2519
        %v2535 = vpack.c.b16 %v2522, %v2521
        %v2536 = vpack.c.b16 %v2524, %v2523
        %v2537 = vpack.c.b16 %v2526, %v2525
        %v2538 = vpack.c.b16 %v2528, %v2527
        %v2539 = vpack.c.b16 %v2530, %v2529
        %v2550 = vsel %vm510, %v2469, 0
        %2552 = vmatprep.subr.bf16.mxu0 0
        %2553 = vmatpush1.bf16.msra.mxu0 %v2538
        %2554 = vmatprep.subr.bf16.mxu0 0
        %2555 = vmatpush1.bf16.msra.mxu0 %v2537
        %2556 = vmatprep.subr.bf16.mxu0 0
        %2557 = vmatpush1.bf16.msra.mxu0 %v2536
        %2558 = vmatprep.subr.bf16.mxu0 0
        %2559 = vmatpush1.bf16.msra.mxu0 %v2535
        %2560 = vmatprep.subr.bf16.mxu0 0
        %2561 = vmatpush1.bf16.msra.mxu0 %v2534
        %2562 = vmatprep.subr.bf16.mxu0 0
        %2563 = vmatpush1.bf16.msra.mxu0 %v2533
        %2564 = vmatprep.subr.bf16.mxu0 0
        %2565 = vmatpush1.bf16.msra.mxu0 %v2532
        %2566 = vmatprep.subr.bf16.mxu0 0
        %2567 = vmatpush1.bf16.msra.mxu0 %v2531
        %2568 = vmatprep.subr.bf16.mxu0 0
        %2569 = vmatpush2.bf16.msra.mxu0 0
        %2570 = vmatprep.subr.bf16.mxu0 0
        %2571 = vmatpush2.bf16.msra.mxu0 0
        %2572 = vmatprep.subr.bf16.mxu0 0
        %2573 = vmatpush2.bf16.msra.mxu0 0
        %2574 = vmatprep.subr.bf16.mxu0 0
        %2575 = vmatpush2.bf16.msra.mxu0 0
        %2576 = vmatprep.subr.bf16.mxu0 0
        %2577 = vmatpush2.bf16.msra.mxu0 0
        %2578 = vmatprep.subr.bf16.mxu0 0
        %2579 = vmatpush2.bf16.msra.mxu0 0
        %2580 = vmatprep.subr.bf16.mxu0 0
        %2581 = vmatpush2.bf16.msra.mxu0 0
        %2582 = vmatprep.subr.bf16.mxu0 0
        %2583 = vmatpush2.bf16.msra.mxu0 %v2539
        %2584 = vmatprep.mubr.bf16.mxu0 %v2550
        %2585 = vmatmul.mubr.bf16.gmra.mxu0 %v2468
        %v2586 = vpop.f32.mrf.mxu0
        %v2587 = vadd.f32 %v2493, %v2586
        %v2588 = vpop.f32.mrf.mxu0
        %v2589 = vpop.f32.mrf.mxu0
        %v2590 = vadd.f32 %v2493, %v2589
        %v2591 = vpop.f32.mrf.mxu0
        %2592 = vdwg.mxu0
        %v2593 = vmax.f32 %v2587, 0.0
        %v2594 = vmax.f32 %v2590, 0.0
        %v2595 = vpack.c.bf16 %v2594, %v2593
        %v2596 = vld [vmem:[%s11] sm:$0xff]
        %v2597 = vld [vmem:[%s11 + $0x8] sm:$0xff]
        %v2598 = vld [vmem:[%s11 + $0x10] sm:$0xff]
        %v2599 = vld [vmem:[%s11 + $0x18] sm:$0xff]
        %v2600 = vld [vmem:[%s11 + $0x20] sm:$0x33]
        %v2601 = vld [vmem:[%s12] sm:$0x3]
        %v2603 = vlaneseq
        %v2604 = vshrl.u32 %v2603, 7
        %v2605 = vsub.s32 0, %v2604
        %v2606 = vrot.slane %v2601, %v2605
        %v2607 = vlaneseq
        %v2608 = vshrl.u32 %v2607, 7
        %v2609 = vsub.s32 1, %v2608
        %v2610 = vrot.slane %v2601, %v2609
        %v2618 = vunpack.c.l.b16 %v2596
        %v2619 = vunpack.c.h.b16 %v2596
        %v2620 = vunpack.c.l.b16 %v2597
        %v2621 = vunpack.c.h.b16 %v2597
        %v2622 = vunpack.c.l.b16 %v2598
        %v2623 = vunpack.c.h.b16 %v2598
        %v2624 = vunpack.c.l.b16 %v2599
        %v2625 = vunpack.c.h.b16 %v2599
        %v2626 = vunpack.c.l.b16 %v2600
        %v2627 = vunpack.c.h.b16 %v2600
        %v2628 = vpack.c.b16 %v2620, %v2618
        %v2629 = vpack.c.b16 %v2621, %v2619
        %v2630 = vpack.c.b16 %v2624, %v2622
        %v2631 = vpack.c.b16 %v2625, %v2623
        %v2632 = vpack.c.b16 %v2626, %v2626
        %v2633 = vpack.c.b16 %v2627, %v2627
        %vm2638 = vcmask 293888
        %v2640 = vsel %vm2638, %v2595, 0
        %vm2642 = vcmask 1041408
        %v2644 = vsel %vm2642, %v2632, 0
        %v2647 = vsel %vm2642, %v2633, 0
        %2649 = vmatprep.subr.bf16.mxu0 0
        %2650 = vmatpush1.bf16.msra.mxu0 0
        %2651 = vmatprep.subr.bf16.mxu0 0
        %2652 = vmatpush1.bf16.msra.mxu0 0
        %2653 = vmatprep.subr.bf16.mxu0 0
        %2654 = vmatpush1.bf16.msra.mxu0 0
        %2655 = vmatprep.subr.bf16.mxu0 0
        %2656 = vmatpush1.bf16.msra.mxu0 0
        %2657 = vmatprep.subr.bf16.mxu0 0
        %2658 = vmatpush1.bf16.msra.mxu0 0
        %2659 = vmatprep.subr.bf16.mxu0 %v2647
        %2660 = vmatpush1.bf16.msra.mxu0 %v2644
        %2661 = vmatprep.subr.bf16.mxu0 %v2631
        %2662 = vmatpush1.bf16.msra.mxu0 %v2630
        %2663 = vmatprep.subr.bf16.mxu0 %v2629
        %2664 = vmatpush1.bf16.msra.mxu0 %v2628
        %2665 = vmatprep.subr.bf16.mxu0 0
        %2666 = vmatpush2.bf16.msra.mxu0 0
        %2667 = vmatprep.subr.bf16.mxu0 0
        %2668 = vmatpush2.bf16.msra.mxu0 0
        %2669 = vmatprep.subr.bf16.mxu0 0
        %2670 = vmatpush2.bf16.msra.mxu0 0
        %2671 = vmatprep.subr.bf16.mxu0 0
        %2672 = vmatpush2.bf16.msra.mxu0 0
        %2673 = vmatprep.subr.bf16.mxu0 0
        %2674 = vmatpush2.bf16.msra.mxu0 0
        %2675 = vmatprep.subr.bf16.mxu0 0
        %2676 = vmatpush2.bf16.msra.mxu0 0
        %2677 = vmatprep.subr.bf16.mxu0 0
        %2678 = vmatpush2.bf16.msra.mxu0 0
        %2679 = vmatprep.subr.bf16.mxu0 0
        %2680 = vmatpush2.bf16.msra.mxu0 0
        %2681 = vmatprep.mubr.bf16.mxu0 0
        %2682 = vmatmul.mubr.bf16.gmra.mxu0 %v2640
        %v2683 = vpop.f32.mrf.mxu0
        %v2684 = vadd.f32 %v2606, %v2683
        %v2685 = vpop.f32.mrf.mxu0
        %v2686 = vadd.f32 %v2610, %v2685
        %v2687 = vpop.f32.mrf.mxu0
        %v2688 = vadd.f32 %v2606, %v2687
        %v2689 = vpop.f32.mrf.mxu0
        %v2690 = vadd.f32 %v2610, %v2689
        %2691 = vdwg.mxu0
        %v2692 = vadd.f32 %v2396, %v2684
        %v2693 = vadd.f32 %v2397, %v2686
        %v2694 = vadd.f32 %v2398, %v2688
        %v2695 = vadd.f32 %v2399, %v2690
        %2696 = vst [vmem:[%s490] sm:$0xff] %v2692
        %2697 = vst.msk [vmem:[%s490 + $0x8] sm:$0xff] %vm510, %v2693
        %2698 = vst [vmem:[%s490 + $0x10] sm:$0xff] %v2694
        %2699 = vst.msk [vmem:[%s490 + $0x18] sm:$0xff] %vm510, %v2695
        %s2700 = sand.u32 %s331, 1
        %s2701 = scalar_lea.sflag [#allocation4], %s2700
        %s2702 = sand.u32 %s331, 1
        %s2703 = smul.addr %s2702, 32
        %s2704 = scalar_lea.vmem [#allocation7], %s2703
        // Predicated region
        $region81: #{tpu_custom_call.1} parent=71 // pred_check
          %p2705 = pneg %p341
        $region82: #{tpu_custom_call.1} parent=71 // pred_check_branch
          %2707 = sbr.rel (%p2705) target = $region84
        $region83: #{tpu_custom_call.1} parent=71 // pred_region
          %s2708 = smul.u32 2, %s34
          %s2710 = ssub.s32 512, 512
          %2711 = vsyncadd %s2701, %s2710
          %s2712 = smul.addr %s2708, 2
          %s2713 = smul.addr %s33, 16
          %s2714 = sadd.s32 %s2712, %s2713
          %s2715 = smul.addr %s2714, 128
          %s2716 = scalar_lea.hbm %s13, %s2715
          %s2717 = sshll.u32 %s2704, 4
          %s2718 = int_to_ptr.vmem [resolvable:$true] %s2717
          %2723 = dma.vmem_to_hbm [thread:$0]  %s2718, 512, %s2716, %s2701, 256, 256, 16
        $region84: #{tpu_custom_call.1} parent=71 // pred_fallthru
          _
      $region72: #{tpu_custom_call.1} parent=5 // pred_fallthru
        _
      %p2724 = scmp.le.s32.totalorder 2, %s24
      // Predicated region
      $region85: #{tpu_custom_call.1} parent=5 // pred_check
        %p2725 = pneg %p2724
      $region86: #{tpu_custom_call.1} parent=5 // pred_check_branch
        %2727 = sbr.rel (%p2725) target = $region88
      $region87: #{tpu_custom_call.1} parent=5 // pred_region
        %s2728 = ssub.s32 %s24, 2
        // Predicated region
        $region89: #{tpu_custom_call.1} parent=87 // pred_check
          %p2729 = pneg %p347
        $region90: #{tpu_custom_call.1} parent=87 // pred_check_branch
          %2731 = sbr.rel (%p2729) target = $region92
        $region91: #{tpu_custom_call.1} parent=87 // pred_region
          %s2732 = sand.u32 %s332, 1
          %s2733 = scalar_lea.sflag [#allocation4], %s2732
          %s2734 = sand.u32 %s332, 1
          %s2735 = smul.addr %s2734, 32
          %s2736 = scalar_lea.vmem [#allocation7], %s2735
          %2737 = dma.done %s2733, 512
        $region92: #{tpu_custom_call.1} parent=87 // pred_fallthru
          _
      $region88: #{tpu_custom_call.1} parent=5 // pred_fallthru
        _
    $region6: #{tpu_custom_call.1} parent=1 // loop_footer
      %s28 = sadd.s32 1, %s24
    $region7: #{tpu_custom_call.1} parent=1 // loop_footer_branch
      %23 = sbr.rel target = $region3
    $region8: #{tpu_custom_call.1} parent=1 // loop_exit
      _
    %2738 = vsyncpa [#allocation3], 1
    %s2739 = scalar_lea.sflag [#allocation3], 1
    %2740 = vsyncpa %s2739, 1
    %2741 = vsyncpa [#allocation6], 1
    %2742 = vsyncpa [#allocation4], 1
    %s2743 = scalar_lea.sflag [#allocation4], 1
    %2744 = vsyncpa %s2743, 1

</llo_original>
